<compile_context>
chip_gen: v5e
topology: v5e:2x2
jax: 0.10.0
libtpu: 0.0.40
codegen_flags: <defaults>
</compile_context>

<pallas_src>
import functools

import jax
import jax.numpy as jnp
from jax.experimental import pallas as pl
from jax.experimental.pallas import tpu as pltpu

EPS = 1e-5


def _round_up(x, m):
    return (x + m - 1) // m * m


def _bn_train(v, gamma, beta, inv_m):
    # PyTorch training-mode BatchNorm1d: batch mean, biased variance, eps=1e-5.
    mean = jnp.sum(v, axis=0, keepdims=True) * inv_m
    d = v - mean
    var = jnp.sum(d * d, axis=0, keepdims=True) * inv_m
    return d * jax.lax.rsqrt(var + EPS) * gamma + beta


# ----------------------------------------------------------------------------
# Fused ResBlock kernel: conv1 -> bn1 -> relu -> conv2 -> bn2 -> (+shortcut)
# -> relu, all in VMEM.  Layout is NLC so channels sit on the 128-wide lane
# axis; batch*length is the sublane axis, so each conv tap is one MXU matmul.
# ----------------------------------------------------------------------------
def resblock_kernel(*refs, K, pad, B, L, Cin, Cout, LM, has_proj):
    if has_proj:
        (x_ref, w1_ref, b1_ref, g1_ref, be1_ref,
         w2_ref, b2_ref, g2_ref, be2_ref,
         ws_ref, bs_ref, gs_ref, bes_ref,
         o_ref, xpad_ref, hpad_ref) = refs
    else:
        (x_ref, w1_ref, b1_ref, g1_ref, be1_ref,
         w2_ref, b2_ref, g2_ref, be2_ref,
         o_ref, xpad_ref, hpad_ref) = refs

    M = B * L
    inv_m = 1.0 / M

    x = x_ref[...].astype(jnp.float32)                       # (B, L, Cin)

    # ---- conv1: in-kernel zero padding + K taps of (B*L,Cin)x(Cin,Cout) ----
    xpad_ref[...] = jnp.zeros_like(xpad_ref)
    xpad_ref[:, pl.ds(LM, L), :] = x                          # aligned store
    acc = jnp.zeros((M, Cout), jnp.float32)
    for k in range(K):                                        # K static (=9)
        xk = xpad_ref[:, pl.ds(LM - pad + k, L), :].reshape(M, Cin)
        wk = w1_ref[pl.ds(k * Cin, Cin), :]
        acc = acc + jnp.dot(xk, wk, preferred_element_type=jnp.float32)
    acc = acc + b1_ref[...]

    # ---- bn1 + relu ---------------------------------------------------------
    h = jnp.maximum(_bn_train(acc, g1_ref[...], be1_ref[...], inv_m), 0.0)

    # ---- conv2 --------------------------------------------------------------
    hpad_ref[...] = jnp.zeros_like(hpad_ref)
    hpad_ref[:, pl.ds(LM, L), :] = h.reshape(B, L, Cout)
    acc2 = jnp.zeros((M, Cout), jnp.float32)
    for k in range(K):
        hk = hpad_ref[:, pl.ds(LM - pad + k, L), :].reshape(M, Cout)
        wk = w2_ref[pl.ds(k * Cout, Cout), :]
        acc2 = acc2 + jnp.dot(hk, wk, preferred_element_type=jnp.float32)
    acc2 = acc2 + b2_ref[...]

    # ---- bn2 ----------------------------------------------------------------
    y = _bn_train(acc2, g2_ref[...], be2_ref[...], inv_m)

    # ---- shortcut -----------------------------------------------------------
    if has_proj:  # ShortcutProjection: 1x1 conv + BN
        sc = jnp.dot(x.reshape(M, Cin), ws_ref[...],
                     preferred_element_type=jnp.float32) + bs_ref[...]
        sc = _bn_train(sc, gs_ref[...], bes_ref[...], inv_m)
    else:         # identity (Cin == Cout)
        sc = x.reshape(M, Cout)

    out = jnp.maximum(y + sc, 0.0)
    o_ref[...] = out.reshape(B, L, Cout).astype(o_ref.dtype)


# ----------------------------------------------------------------------------
# Jitted wrapper: PyTorch NCL in/out, NLC inside the kernel.
# ----------------------------------------------------------------------------
@functools.partial(jax.jit, static_argnames=("K", "pad"))
def resblock_forward(x_ncl, params, K=9, pad=4):
    B, Cin, L = x_ncl.shape
    Cout = params["w1"].shape[1]
    has_proj = "ws" in params
    if not has_proj:
        assert Cin == Cout, "identity shortcut requires in_channels == out_channels"

    x = jnp.transpose(x_ncl, (0, 2, 1))                       # NLC: channels -> lanes
    LM = _round_up(pad, 8)                                    # sublane-aligned margin
    Lp = _round_up(LM + L + pad, 8)                           # padded scratch length

    def row(v):
        return v.reshape(1, Cout)

    args = [x,
            params["w1"], row(params["b1"]), row(params["g1"]), row(params["be1"]),
            params["w2"], row(params["b2"]), row(params["g2"]), row(params["be2"])]
    if has_proj:
        args += [params["ws"], row(params["bs"]),
                 row(params["gs"]), row(params["bes"])]

    vmem = pl.BlockSpec(memory_space=pltpu.MemorySpace.VMEM)
    out = pl.pallas_call(
        functools.partial(resblock_kernel, K=K, pad=pad, B=B, L=L,
                          Cin=Cin, Cout=Cout, LM=LM, has_proj=has_proj),
        out_shape=jax.ShapeDtypeStruct((B, L, Cout), x.dtype),
        in_specs=[vmem] * len(args),
        out_specs=vmem,
        scratch_shapes=[
            pltpu.VMEM((B, Lp, Cin), jnp.float32),            # padded input slab
            pltpu.VMEM((B, Lp, Cout), jnp.float32),           # padded hidden slab
        ],
    )(*args)
    return jnp.transpose(out, (0, 2, 1))                      # back to NCL


# ----------------------------------------------------------------------------
# Deterministic synthetic parameter init (shapes follow the PyTorch module).
# Conv weights are pre-packed as (K*Cin, Cout): tap k occupies rows
# [k*Cin, (k+1)*Cin)  (== PyTorch (Cout, Cin, K) permuted to (K, Cin, Cout)).
# ----------------------------------------------------------------------------
def init_conv(key, cin, cout, k):
    wk, bk = jax.random.split(key)
    bound = 1.0 / (cin * k) ** 0.5
    w = jax.random.uniform(wk, (k, cin, cout), jnp.float32, -bound, bound)
    b = jax.random.uniform(bk, (cout,), jnp.float32, -bound, bound)
    return w.reshape(k * cin, cout), b


def init_resblock(key, cin, cout, k):
    k1, k2, k3 = jax.random.split(key, 3)
    p = {}
    p["w1"], p["b1"] = init_conv(k1, cin, cout, k)
    p["g1"], p["be1"] = jnp.ones((cout,), jnp.float32), jnp.zeros((cout,), jnp.float32)
    p["w2"], p["b2"] = init_conv(k2, cout, cout, k)
    p["g2"], p["be2"] = jnp.ones((cout,), jnp.float32), jnp.zeros((cout,), jnp.float32)
    if cin != cout:  # stride is always 1 here, so only channel mismatch projects
        p["ws"], p["bs"] = init_conv(k3, cin, cout, 1)
        p["gs"], p["bes"] = jnp.ones((cout,), jnp.float32), jnp.zeros((cout,), jnp.float32)
    return p


if __name__ == "__main__":
    key = jax.random.PRNGKey(0)
    kx1, kx2, kp1, kp2 = jax.random.split(key, 4)

    K, PAD = 9, 4                      # module defaults: kernel_size=9, padding=4

    # Projection-shortcut block (in_channels != out_channels)
    B, Cin, Cout, L = 2, 64, 128, 128
    x1 = jax.random.normal(kx1, (B, Cin, L), jnp.float32)     # PyTorch NCL layout
    p1 = init_resblock(kp1, Cin, Cout, K)
    out1 = resblock_forward(x1, p1, K=K, pad=PAD)

    # Identity-shortcut block (in_channels == out_channels)
    x2 = jax.random.normal(kx2, (B, Cout, L), jnp.float32)
    p2 = init_resblock(kp2, Cout, Cout, K)
    out2 = resblock_forward(x2, p2, K=K, pad=PAD)

    out1, out2 = jax.block_until_ready((out1, out2))
    assert out1.shape == (B, Cout, L) and out1.dtype == jnp.float32
    assert out2.shape == (B, Cout, L) and out2.dtype == jnp.float32
    assert bool(jnp.isfinite(out1).all()) and bool(jnp.isfinite(out2).all())
    assert bool((out1 >= 0).all()) and bool((out2 >= 0).all())  # final ReLU
    print("KERNEL_OK")
</pallas_src>

<mosaic_0001>
module attributes {stable_mosaic.version = 11 : i64} {
  func.func @resblock_kernel(%arg0: memref<2x128x64xf32, #tpu.memory_space<vmem>>, %arg1: memref<576x128xf32, #tpu.memory_space<vmem>>, %arg2: memref<1x128xf32, #tpu.memory_space<vmem>>, %arg3: memref<1x128xf32, #tpu.memory_space<vmem>>, %arg4: memref<1x128xf32, #tpu.memory_space<vmem>>, %arg5: memref<1152x128xf32, #tpu.memory_space<vmem>>, %arg6: memref<1x128xf32, #tpu.memory_space<vmem>>, %arg7: memref<1x128xf32, #tpu.memory_space<vmem>>, %arg8: memref<1x128xf32, #tpu.memory_space<vmem>>, %arg9: memref<64x128xf32, #tpu.memory_space<vmem>>, %arg10: memref<1x128xf32, #tpu.memory_space<vmem>>, %arg11: memref<1x128xf32, #tpu.memory_space<vmem>>, %arg12: memref<1x128xf32, #tpu.memory_space<vmem>>, %arg13: memref<2x128x128xf32, #tpu.memory_space<vmem>>, %arg14: memref<2x144x64xf32, #tpu.memory_space<vmem>>, %arg15: memref<2x144x128xf32, #tpu.memory_space<vmem>>) attributes {dimension_semantics = [], scalar_prefetch = 0 : i64, scratch_operands = 2 : i64, tpu.core_type = #tpu.core_type<tc>} {
    %c0 = arith.constant 0 : index
    %c0_0 = arith.constant 0 : index
    %c0_1 = arith.constant 0 : index
    %0 = vector.load %arg0[%c0, %c0_0, %c0_1] : memref<2x128x64xf32, #tpu.memory_space<vmem>>, vector<2x128x64xf32>
    %cst = arith.constant 0.000000e+00 : f32
    %1 = vector.broadcast %cst : f32 to vector<2x144x64xf32>
    %c0_2 = arith.constant 0 : index
    %c0_3 = arith.constant 0 : index
    %c0_4 = arith.constant 0 : index
    %2 = vector.load %arg14[%c0_2, %c0_3, %c0_4] : memref<2x144x64xf32, #tpu.memory_space<vmem>>, vector<2x144x64xf32>
    tpu.vector_store %arg14[%c0_2, %c0_3, %c0_4], %1 {strides = array<i32>} : memref<2x144x64xf32, #tpu.memory_space<vmem>>, vector<2x144x64xf32>,
    %c0_5 = arith.constant 0 : index
    %c8 = arith.constant 8 : index
    %c0_6 = arith.constant 0 : index
    %3 = vector.load %arg14[%c0_5, %c8, %c0_6] : memref<2x144x64xf32, #tpu.memory_space<vmem>>, vector<2x128x64xf32>
    tpu.vector_store %arg14[%c0_5, %c8, %c0_6], %0 {strides = array<i32>} : memref<2x144x64xf32, #tpu.memory_space<vmem>>, vector<2x128x64xf32>,
    %cst_7 = arith.constant 0.000000e+00 : f32
    %4 = vector.broadcast %cst_7 : f32 to vector<256x128xf32>
    %c0_8 = arith.constant 0 : index
    %c4 = arith.constant 4 : index
    %c0_9 = arith.constant 0 : index
    %5 = vector.load %arg14[%c0_8, %c4, %c0_9] : memref<2x144x64xf32, #tpu.memory_space<vmem>>, vector<2x128x64xf32>
    %6 = vector.shape_cast %5 : vector<2x128x64xf32> to vector<256x64xf32>
    %c0_10 = arith.constant 0 : index
    %c0_11 = arith.constant 0 : index
    %7 = vector.load %arg1[%c0_10, %c0_11] : memref<576x128xf32, #tpu.memory_space<vmem>>, vector<64x128xf32>
    %cst_12 = arith.constant dense<0.000000e+00> : vector<256x128xf32>
    %8 = tpu.matmul %6, %7, %cst_12 {dimension_numbers = #tpu.dot_dimension_numbers<[1], [0], [0], [1], [0, 0, 1, 1], [], []>} : vector<256x64xf32>, vector<64x128xf32>, vector<256x128xf32> -> vector<256x128xf32>
    %9 = arith.addf %4, %8 : vector<256x128xf32>
    %c0_13 = arith.constant 0 : index
    %c5 = arith.constant 5 : index
    %c0_14 = arith.constant 0 : index
    %10 = vector.load %arg14[%c0_13, %c5, %c0_14] : memref<2x144x64xf32, #tpu.memory_space<vmem>>, vector<2x128x64xf32>
    %11 = vector.shape_cast %10 : vector<2x128x64xf32> to vector<256x64xf32>
    %c64 = arith.constant 64 : index
    %c0_15 = arith.constant 0 : index
    %12 = vector.load %arg1[%c64, %c0_15] : memref<576x128xf32, #tpu.memory_space<vmem>>, vector<64x128xf32>
    %cst_16 = arith.constant dense<0.000000e+00> : vector<256x128xf32>
    %13 = tpu.matmul %11, %12, %cst_16 {dimension_numbers = #tpu.dot_dimension_numbers<[1], [0], [0], [1], [0, 0, 1, 1], [], []>} : vector<256x64xf32>, vector<64x128xf32>, vector<256x128xf32> -> vector<256x128xf32>
    %14 = arith.addf %9, %13 : vector<256x128xf32>
    %c0_17 = arith.constant 0 : index
    %c6 = arith.constant 6 : index
    %c0_18 = arith.constant 0 : index
    %15 = vector.load %arg14[%c0_17, %c6, %c0_18] : memref<2x144x64xf32, #tpu.memory_space<vmem>>, vector<2x128x64xf32>
    %16 = vector.shape_cast %15 : vector<2x128x64xf32> to vector<256x64xf32>
    %c128 = arith.constant 128 : index
    %c0_19 = arith.constant 0 : index
    %17 = vector.load %arg1[%c128, %c0_19] : memref<576x128xf32, #tpu.memory_space<vmem>>, vector<64x128xf32>
    %cst_20 = arith.constant dense<0.000000e+00> : vector<256x128xf32>
    %18 = tpu.matmul %16, %17, %cst_20 {dimension_numbers = #tpu.dot_dimension_numbers<[1], [0], [0], [1], [0, 0, 1, 1], [], []>} : vector<256x64xf32>, vector<64x128xf32>, vector<256x128xf32> -> vector<256x128xf32>
    %19 = arith.addf %14, %18 : vector<256x128xf32>
    %c0_21 = arith.constant 0 : index
    %c7 = arith.constant 7 : index
    %c0_22 = arith.constant 0 : index
    %20 = vector.load %arg14[%c0_21, %c7, %c0_22] : memref<2x144x64xf32, #tpu.memory_space<vmem>>, vector<2x128x64xf32>
    %21 = vector.shape_cast %20 : vector<2x128x64xf32> to vector<256x64xf32>
    %c192 = arith.constant 192 : index
    %c0_23 = arith.constant 0 : index
    %22 = vector.load %arg1[%c192, %c0_23] : memref<576x128xf32, #tpu.memory_space<vmem>>, vector<64x128xf32>
    %cst_24 = arith.constant dense<0.000000e+00> : vector<256x128xf32>
    %23 = tpu.matmul %21, %22, %cst_24 {dimension_numbers = #tpu.dot_dimension_numbers<[1], [0], [0], [1], [0, 0, 1, 1], [], []>} : vector<256x64xf32>, vector<64x128xf32>, vector<256x128xf32> -> vector<256x128xf32>
    %24 = arith.addf %19, %23 : vector<256x128xf32>
    %c0_25 = arith.constant 0 : index
    %c8_26 = arith.constant 8 : index
    %c0_27 = arith.constant 0 : index
    %25 = vector.load %arg14[%c0_25, %c8_26, %c0_27] : memref<2x144x64xf32, #tpu.memory_space<vmem>>, vector<2x128x64xf32>
    %26 = vector.shape_cast %25 : vector<2x128x64xf32> to vector<256x64xf32>
    %c256 = arith.constant 256 : index
    %c0_28 = arith.constant 0 : index
    %27 = vector.load %arg1[%c256, %c0_28] : memref<576x128xf32, #tpu.memory_space<vmem>>, vector<64x128xf32>
    %cst_29 = arith.constant dense<0.000000e+00> : vector<256x128xf32>
    %28 = tpu.matmul %26, %27, %cst_29 {dimension_numbers = #tpu.dot_dimension_numbers<[1], [0], [0], [1], [0, 0, 1, 1], [], []>} : vector<256x64xf32>, vector<64x128xf32>, vector<256x128xf32> -> vector<256x128xf32>
    %29 = arith.addf %24, %28 : vector<256x128xf32>
    %c0_30 = arith.constant 0 : index
    %c9 = arith.constant 9 : index
    %c0_31 = arith.constant 0 : index
    %30 = vector.load %arg14[%c0_30, %c9, %c0_31] : memref<2x144x64xf32, #tpu.memory_space<vmem>>, vector<2x128x64xf32>
    %31 = vector.shape_cast %30 : vector<2x128x64xf32> to vector<256x64xf32>
    %c320 = arith.constant 320 : index
    %c0_32 = arith.constant 0 : index
    %32 = vector.load %arg1[%c320, %c0_32] : memref<576x128xf32, #tpu.memory_space<vmem>>, vector<64x128xf32>
    %cst_33 = arith.constant dense<0.000000e+00> : vector<256x128xf32>
    %33 = tpu.matmul %31, %32, %cst_33 {dimension_numbers = #tpu.dot_dimension_numbers<[1], [0], [0], [1], [0, 0, 1, 1], [], []>} : vector<256x64xf32>, vector<64x128xf32>, vector<256x128xf32> -> vector<256x128xf32>
    %34 = arith.addf %29, %33 : vector<256x128xf32>
    %c0_34 = arith.constant 0 : index
    %c10 = arith.constant 10 : index
    %c0_35 = arith.constant 0 : index
    %35 = vector.load %arg14[%c0_34, %c10, %c0_35] : memref<2x144x64xf32, #tpu.memory_space<vmem>>, vector<2x128x64xf32>
    %36 = vector.shape_cast %35 : vector<2x128x64xf32> to vector<256x64xf32>
    %c384 = arith.constant 384 : index
    %c0_36 = arith.constant 0 : index
    %37 = vector.load %arg1[%c384, %c0_36] : memref<576x128xf32, #tpu.memory_space<vmem>>, vector<64x128xf32>
    %cst_37 = arith.constant dense<0.000000e+00> : vector<256x128xf32>
    %38 = tpu.matmul %36, %37, %cst_37 {dimension_numbers = #tpu.dot_dimension_numbers<[1], [0], [0], [1], [0, 0, 1, 1], [], []>} : vector<256x64xf32>, vector<64x128xf32>, vector<256x128xf32> -> vector<256x128xf32>
    %39 = arith.addf %34, %38 : vector<256x128xf32>
    %c0_38 = arith.constant 0 : index
    %c11 = arith.constant 11 : index
    %c0_39 = arith.constant 0 : index
    %40 = vector.load %arg14[%c0_38, %c11, %c0_39] : memref<2x144x64xf32, #tpu.memory_space<vmem>>, vector<2x128x64xf32>
    %41 = vector.shape_cast %40 : vector<2x128x64xf32> to vector<256x64xf32>
    %c448 = arith.constant 448 : index
    %c0_40 = arith.constant 0 : index
    %42 = vector.load %arg1[%c448, %c0_40] : memref<576x128xf32, #tpu.memory_space<vmem>>, vector<64x128xf32>
    %cst_41 = arith.constant dense<0.000000e+00> : vector<256x128xf32>
    %43 = tpu.matmul %41, %42, %cst_41 {dimension_numbers = #tpu.dot_dimension_numbers<[1], [0], [0], [1], [0, 0, 1, 1], [], []>} : vector<256x64xf32>, vector<64x128xf32>, vector<256x128xf32> -> vector<256x128xf32>
    %44 = arith.addf %39, %43 : vector<256x128xf32>
    %c0_42 = arith.constant 0 : index
    %c12 = arith.constant 12 : index
    %c0_43 = arith.constant 0 : index
    %45 = vector.load %arg14[%c0_42, %c12, %c0_43] : memref<2x144x64xf32, #tpu.memory_space<vmem>>, vector<2x128x64xf32>
    %46 = vector.shape_cast %45 : vector<2x128x64xf32> to vector<256x64xf32>
    %c512 = arith.constant 512 : index
    %c0_44 = arith.constant 0 : index
    %47 = vector.load %arg1[%c512, %c0_44] : memref<576x128xf32, #tpu.memory_space<vmem>>, vector<64x128xf32>
    %cst_45 = arith.constant dense<0.000000e+00> : vector<256x128xf32>
    %48 = tpu.matmul %46, %47, %cst_45 {dimension_numbers = #tpu.dot_dimension_numbers<[1], [0], [0], [1], [0, 0, 1, 1], [], []>} : vector<256x64xf32>, vector<64x128xf32>, vector<256x128xf32> -> vector<256x128xf32>
    %49 = arith.addf %44, %48 : vector<256x128xf32>
    %c0_46 = arith.constant 0 : index
    %c0_47 = arith.constant 0 : index
    %50 = vector.load %arg2[%c0_46, %c0_47] : memref<1x128xf32, #tpu.memory_space<vmem>>, vector<1x128xf32>
    %51 = vector.broadcast %50 : vector<1x128xf32> to vector<256x128xf32>
    %52 = arith.addf %49, %51 : vector<256x128xf32>
    %c0_48 = arith.constant 0 : index
    %c0_49 = arith.constant 0 : index
    %53 = vector.load %arg3[%c0_48, %c0_49] : memref<1x128xf32, #tpu.memory_space<vmem>>, vector<1x128xf32>
    %c0_50 = arith.constant 0 : index
    %c0_51 = arith.constant 0 : index
    %54 = vector.load %arg4[%c0_50, %c0_51] : memref<1x128xf32, #tpu.memory_space<vmem>>, vector<1x128xf32>
    %cst_52 = arith.constant dense<0.000000e+00> : vector<128xf32>
    %55 = vector.multi_reduction <add>, %52, %cst_52 [0] : vector<256x128xf32> to vector<128xf32>
    %56 = vector.shape_cast %55 : vector<128xf32> to vector<1x128xf32>
    %cst_53 = arith.constant 3.906250e-03 : f32
    %57 = vector.broadcast %cst_53 : f32 to vector<1x128xf32>
    %58 = arith.mulf %56, %57 : vector<1x128xf32>
    %59 = vector.broadcast %58 : vector<1x128xf32> to vector<256x128xf32>
    %60 = arith.subf %52, %59 : vector<256x128xf32>
    %61 = arith.mulf %60, %60 : vector<256x128xf32>
    %cst_54 = arith.constant dense<0.000000e+00> : vector<128xf32>
    %62 = vector.multi_reduction <add>, %61, %cst_54 [0] : vector<256x128xf32> to vector<128xf32>
    %63 = vector.shape_cast %62 : vector<128xf32> to vector<1x128xf32>
    %cst_55 = arith.constant 3.906250e-03 : f32
    %64 = vector.broadcast %cst_55 : f32 to vector<1x128xf32>
    %65 = arith.mulf %63, %64 : vector<1x128xf32>
    %cst_56 = arith.constant 9.99999974E-6 : f32
    %66 = vector.broadcast %cst_56 : f32 to vector<1x128xf32>
    %67 = arith.addf %65, %66 : vector<1x128xf32>
    %68 = math.rsqrt %67 : vector<1x128xf32>
    %69 = vector.broadcast %68 : vector<1x128xf32> to vector<256x128xf32>
    %70 = arith.mulf %60, %69 : vector<256x128xf32>
    %71 = vector.broadcast %53 : vector<1x128xf32> to vector<256x128xf32>
    %72 = arith.mulf %70, %71 : vector<256x128xf32>
    %73 = vector.broadcast %54 : vector<1x128xf32> to vector<256x128xf32>
    %74 = arith.addf %72, %73 : vector<256x128xf32>
    %cst_57 = arith.constant 0.000000e+00 : f32
    %75 = vector.broadcast %cst_57 : f32 to vector<256x128xf32>
    %76 = arith.maximumf %74, %75 : vector<256x128xf32>
    %cst_58 = arith.constant 0.000000e+00 : f32
    %77 = vector.broadcast %cst_58 : f32 to vector<2x144x128xf32>
    %c0_59 = arith.constant 0 : index
    %c0_60 = arith.constant 0 : index
    %c0_61 = arith.constant 0 : index
    %78 = vector.load %arg15[%c0_59, %c0_60, %c0_61] : memref<2x144x128xf32, #tpu.memory_space<vmem>>, vector<2x144x128xf32>
    tpu.vector_store %arg15[%c0_59, %c0_60, %c0_61], %77 {strides = array<i32>} : memref<2x144x128xf32, #tpu.memory_space<vmem>>, vector<2x144x128xf32>,
    %79 = vector.shape_cast %76 : vector<256x128xf32> to vector<2x128x128xf32>
    %c0_62 = arith.constant 0 : index
    %c8_63 = arith.constant 8 : index
    %c0_64 = arith.constant 0 : index
    %80 = vector.load %arg15[%c0_62, %c8_63, %c0_64] : memref<2x144x128xf32, #tpu.memory_space<vmem>>, vector<2x128x128xf32>
    tpu.vector_store %arg15[%c0_62, %c8_63, %c0_64], %79 {strides = array<i32>} : memref<2x144x128xf32, #tpu.memory_space<vmem>>, vector<2x128x128xf32>,
    %cst_65 = arith.constant 0.000000e+00 : f32
    %81 = vector.broadcast %cst_65 : f32 to vector<256x128xf32>
    %c0_66 = arith.constant 0 : index
    %c4_67 = arith.constant 4 : index
    %c0_68 = arith.constant 0 : index
    %82 = vector.load %arg15[%c0_66, %c4_67, %c0_68] : memref<2x144x128xf32, #tpu.memory_space<vmem>>, vector<2x128x128xf32>
    %83 = vector.shape_cast %82 : vector<2x128x128xf32> to vector<256x128xf32>
    %c0_69 = arith.constant 0 : index
    %c0_70 = arith.constant 0 : index
    %84 = vector.load %arg5[%c0_69, %c0_70] : memref<1152x128xf32, #tpu.memory_space<vmem>>, vector<128x128xf32>
    %cst_71 = arith.constant dense<0.000000e+00> : vector<256x128xf32>
    %85 = tpu.matmul %83, %84, %cst_71 {dimension_numbers = #tpu.dot_dimension_numbers<[1], [0], [0], [1], [0, 0, 1, 1], [], []>} : vector<256x128xf32>, vector<128x128xf32>, vector<256x128xf32> -> vector<256x128xf32>
    %86 = arith.addf %81, %85 : vector<256x128xf32>
    %c0_72 = arith.constant 0 : index
    %c5_73 = arith.constant 5 : index
    %c0_74 = arith.constant 0 : index
    %87 = vector.load %arg15[%c0_72, %c5_73, %c0_74] : memref<2x144x128xf32, #tpu.memory_space<vmem>>, vector<2x128x128xf32>
    %88 = vector.shape_cast %87 : vector<2x128x128xf32> to vector<256x128xf32>
    %c128_75 = arith.constant 128 : index
    %c0_76 = arith.constant 0 : index
    %89 = vector.load %arg5[%c128_75, %c0_76] : memref<1152x128xf32, #tpu.memory_space<vmem>>, vector<128x128xf32>
    %cst_77 = arith.constant dense<0.000000e+00> : vector<256x128xf32>
    %90 = tpu.matmul %88, %89, %cst_77 {dimension_numbers = #tpu.dot_dimension_numbers<[1], [0], [0], [1], [0, 0, 1, 1], [], []>} : vector<256x128xf32>, vector<128x128xf32>, vector<256x128xf32> -> vector<256x128xf32>
    %91 = arith.addf %86, %90 : vector<256x128xf32>
    %c0_78 = arith.constant 0 : index
    %c6_79 = arith.constant 6 : index
    %c0_80 = arith.constant 0 : index
    %92 = vector.load %arg15[%c0_78, %c6_79, %c0_80] : memref<2x144x128xf32, #tpu.memory_space<vmem>>, vector<2x128x128xf32>
    %93 = vector.shape_cast %92 : vector<2x128x128xf32> to vector<256x128xf32>
    %c256_81 = arith.constant 256 : index
    %c0_82 = arith.constant 0 : index
    %94 = vector.load %arg5[%c256_81, %c0_82] : memref<1152x128xf32, #tpu.memory_space<vmem>>, vector<128x128xf32>
    %cst_83 = arith.constant dense<0.000000e+00> : vector<256x128xf32>
    %95 = tpu.matmul %93, %94, %cst_83 {dimension_numbers = #tpu.dot_dimension_numbers<[1], [0], [0], [1], [0, 0, 1, 1], [], []>} : vector<256x128xf32>, vector<128x128xf32>, vector<256x128xf32> -> vector<256x128xf32>
    %96 = arith.addf %91, %95 : vector<256x128xf32>
    %c0_84 = arith.constant 0 : index
    %c7_85 = arith.constant 7 : index
    %c0_86 = arith.constant 0 : index
    %97 = vector.load %arg15[%c0_84, %c7_85, %c0_86] : memref<2x144x128xf32, #tpu.memory_space<vmem>>, vector<2x128x128xf32>
    %98 = vector.shape_cast %97 : vector<2x128x128xf32> to vector<256x128xf32>
    %c384_87 = arith.constant 384 : index
    %c0_88 = arith.constant 0 : index
    %99 = vector.load %arg5[%c384_87, %c0_88] : memref<1152x128xf32, #tpu.memory_space<vmem>>, vector<128x128xf32>
    %cst_89 = arith.constant dense<0.000000e+00> : vector<256x128xf32>
    %100 = tpu.matmul %98, %99, %cst_89 {dimension_numbers = #tpu.dot_dimension_numbers<[1], [0], [0], [1], [0, 0, 1, 1], [], []>} : vector<256x128xf32>, vector<128x128xf32>, vector<256x128xf32> -> vector<256x128xf32>
    %101 = arith.addf %96, %100 : vector<256x128xf32>
    %c0_90 = arith.constant 0 : index
    %c8_91 = arith.constant 8 : index
    %c0_92 = arith.constant 0 : index
    %102 = vector.load %arg15[%c0_90, %c8_91, %c0_92] : memref<2x144x128xf32, #tpu.memory_space<vmem>>, vector<2x128x128xf32>
    %103 = vector.shape_cast %102 : vector<2x128x128xf32> to vector<256x128xf32>
    %c512_93 = arith.constant 512 : index
    %c0_94 = arith.constant 0 : index
    %104 = vector.load %arg5[%c512_93, %c0_94] : memref<1152x128xf32, #tpu.memory_space<vmem>>, vector<128x128xf32>
    %cst_95 = arith.constant dense<0.000000e+00> : vector<256x128xf32>
    %105 = tpu.matmul %103, %104, %cst_95 {dimension_numbers = #tpu.dot_dimension_numbers<[1], [0], [0], [1], [0, 0, 1, 1], [], []>} : vector<256x128xf32>, vector<128x128xf32>, vector<256x128xf32> -> vector<256x128xf32>
    %106 = arith.addf %101, %105 : vector<256x128xf32>
    %c0_96 = arith.constant 0 : index
    %c9_97 = arith.constant 9 : index
    %c0_98 = arith.constant 0 : index
    %107 = vector.load %arg15[%c0_96, %c9_97, %c0_98] : memref<2x144x128xf32, #tpu.memory_space<vmem>>, vector<2x128x128xf32>
    %108 = vector.shape_cast %107 : vector<2x128x128xf32> to vector<256x128xf32>
    %c640 = arith.constant 640 : index
    %c0_99 = arith.constant 0 : index
    %109 = vector.load %arg5[%c640, %c0_99] : memref<1152x128xf32, #tpu.memory_space<vmem>>, vector<128x128xf32>
    %cst_100 = arith.constant dense<0.000000e+00> : vector<256x128xf32>
    %110 = tpu.matmul %108, %109, %cst_100 {dimension_numbers = #tpu.dot_dimension_numbers<[1], [0], [0], [1], [0, 0, 1, 1], [], []>} : vector<256x128xf32>, vector<128x128xf32>, vector<256x128xf32> -> vector<256x128xf32>
    %111 = arith.addf %106, %110 : vector<256x128xf32>
    %c0_101 = arith.constant 0 : index
    %c10_102 = arith.constant 10 : index
    %c0_103 = arith.constant 0 : index
    %112 = vector.load %arg15[%c0_101, %c10_102, %c0_103] : memref<2x144x128xf32, #tpu.memory_space<vmem>>, vector<2x128x128xf32>
    %113 = vector.shape_cast %112 : vector<2x128x128xf32> to vector<256x128xf32>
    %c768 = arith.constant 768 : index
    %c0_104 = arith.constant 0 : index
    %114 = vector.load %arg5[%c768, %c0_104] : memref<1152x128xf32, #tpu.memory_space<vmem>>, vector<128x128xf32>
    %cst_105 = arith.constant dense<0.000000e+00> : vector<256x128xf32>
    %115 = tpu.matmul %113, %114, %cst_105 {dimension_numbers = #tpu.dot_dimension_numbers<[1], [0], [0], [1], [0, 0, 1, 1], [], []>} : vector<256x128xf32>, vector<128x128xf32>, vector<256x128xf32> -> vector<256x128xf32>
    %116 = arith.addf %111, %115 : vector<256x128xf32>
    %c0_106 = arith.constant 0 : index
    %c11_107 = arith.constant 11 : index
    %c0_108 = arith.constant 0 : index
    %117 = vector.load %arg15[%c0_106, %c11_107, %c0_108] : memref<2x144x128xf32, #tpu.memory_space<vmem>>, vector<2x128x128xf32>
    %118 = vector.shape_cast %117 : vector<2x128x128xf32> to vector<256x128xf32>
    %c896 = arith.constant 896 : index
    %c0_109 = arith.constant 0 : index
    %119 = vector.load %arg5[%c896, %c0_109] : memref<1152x128xf32, #tpu.memory_space<vmem>>, vector<128x128xf32>
    %cst_110 = arith.constant dense<0.000000e+00> : vector<256x128xf32>
    %120 = tpu.matmul %118, %119, %cst_110 {dimension_numbers = #tpu.dot_dimension_numbers<[1], [0], [0], [1], [0, 0, 1, 1], [], []>} : vector<256x128xf32>, vector<128x128xf32>, vector<256x128xf32> -> vector<256x128xf32>
    %121 = arith.addf %116, %120 : vector<256x128xf32>
    %c0_111 = arith.constant 0 : index
    %c12_112 = arith.constant 12 : index
    %c0_113 = arith.constant 0 : index
    %122 = vector.load %arg15[%c0_111, %c12_112, %c0_113] : memref<2x144x128xf32, #tpu.memory_space<vmem>>, vector<2x128x128xf32>
    %123 = vector.shape_cast %122 : vector<2x128x128xf32> to vector<256x128xf32>
    %c1024 = arith.constant 1024 : index
    %c0_114 = arith.constant 0 : index
    %124 = vector.load %arg5[%c1024, %c0_114] : memref<1152x128xf32, #tpu.memory_space<vmem>>, vector<128x128xf32>
    %cst_115 = arith.constant dense<0.000000e+00> : vector<256x128xf32>
    %125 = tpu.matmul %123, %124, %cst_115 {dimension_numbers = #tpu.dot_dimension_numbers<[1], [0], [0], [1], [0, 0, 1, 1], [], []>} : vector<256x128xf32>, vector<128x128xf32>, vector<256x128xf32> -> vector<256x128xf32>
    %126 = arith.addf %121, %125 : vector<256x128xf32>
    %c0_116 = arith.constant 0 : index
    %c0_117 = arith.constant 0 : index
    %127 = vector.load %arg6[%c0_116, %c0_117] : memref<1x128xf32, #tpu.memory_space<vmem>>, vector<1x128xf32>
    %128 = vector.broadcast %127 : vector<1x128xf32> to vector<256x128xf32>
    %129 = arith.addf %126, %128 : vector<256x128xf32>
    %c0_118 = arith.constant 0 : index
    %c0_119 = arith.constant 0 : index
    %130 = vector.load %arg7[%c0_118, %c0_119] : memref<1x128xf32, #tpu.memory_space<vmem>>, vector<1x128xf32>
    %c0_120 = arith.constant 0 : index
    %c0_121 = arith.constant 0 : index
    %131 = vector.load %arg8[%c0_120, %c0_121] : memref<1x128xf32, #tpu.memory_space<vmem>>, vector<1x128xf32>
    %cst_122 = arith.constant dense<0.000000e+00> : vector<128xf32>
    %132 = vector.multi_reduction <add>, %129, %cst_122 [0] : vector<256x128xf32> to vector<128xf32>
    %133 = vector.shape_cast %132 : vector<128xf32> to vector<1x128xf32>
    %cst_123 = arith.constant 3.906250e-03 : f32
    %134 = vector.broadcast %cst_123 : f32 to vector<1x128xf32>
    %135 = arith.mulf %133, %134 : vector<1x128xf32>
    %136 = vector.broadcast %135 : vector<1x128xf32> to vector<256x128xf32>
    %137 = arith.subf %129, %136 : vector<256x128xf32>
    %138 = arith.mulf %137, %137 : vector<256x128xf32>
    %cst_124 = arith.constant dense<0.000000e+00> : vector<128xf32>
    %139 = vector.multi_reduction <add>, %138, %cst_124 [0] : vector<256x128xf32> to vector<128xf32>
    %140 = vector.shape_cast %139 : vector<128xf32> to vector<1x128xf32>
    %cst_125 = arith.constant 3.906250e-03 : f32
    %141 = vector.broadcast %cst_125 : f32 to vector<1x128xf32>
    %142 = arith.mulf %140, %141 : vector<1x128xf32>
    %cst_126 = arith.constant 9.99999974E-6 : f32
    %143 = vector.broadcast %cst_126 : f32 to vector<1x128xf32>
    %144 = arith.addf %142, %143 : vector<1x128xf32>
    %145 = math.rsqrt %144 : vector<1x128xf32>
    %146 = vector.broadcast %145 : vector<1x128xf32> to vector<256x128xf32>
    %147 = arith.mulf %137, %146 : vector<256x128xf32>
    %148 = vector.broadcast %130 : vector<1x128xf32> to vector<256x128xf32>
    %149 = arith.mulf %147, %148 : vector<256x128xf32>
    %150 = vector.broadcast %131 : vector<1x128xf32> to vector<256x128xf32>
    %151 = arith.addf %149, %150 : vector<256x128xf32>
    %152 = vector.shape_cast %0 : vector<2x128x64xf32> to vector<256x64xf32>
    %c0_127 = arith.constant 0 : index
    %c0_128 = arith.constant 0 : index
    %153 = vector.load %arg9[%c0_127, %c0_128] : memref<64x128xf32, #tpu.memory_space<vmem>>, vector<64x128xf32>
    %cst_129 = arith.constant dense<0.000000e+00> : vector<256x128xf32>
    %154 = tpu.matmul %152, %153, %cst_129 {dimension_numbers = #tpu.dot_dimension_numbers<[1], [0], [0], [1], [0, 0, 1, 1], [], []>} : vector<256x64xf32>, vector<64x128xf32>, vector<256x128xf32> -> vector<256x128xf32>
    %c0_130 = arith.constant 0 : index
    %c0_131 = arith.constant 0 : index
    %155 = vector.load %arg10[%c0_130, %c0_131] : memref<1x128xf32, #tpu.memory_space<vmem>>, vector<1x128xf32>
    %156 = vector.broadcast %155 : vector<1x128xf32> to vector<256x128xf32>
    %157 = arith.addf %154, %156 : vector<256x128xf32>
    %c0_132 = arith.constant 0 : index
    %c0_133 = arith.constant 0 : index
    %158 = vector.load %arg11[%c0_132, %c0_133] : memref<1x128xf32, #tpu.memory_space<vmem>>, vector<1x128xf32>
    %c0_134 = arith.constant 0 : index
    %c0_135 = arith.constant 0 : index
    %159 = vector.load %arg12[%c0_134, %c0_135] : memref<1x128xf32, #tpu.memory_space<vmem>>, vector<1x128xf32>
    %cst_136 = arith.constant dense<0.000000e+00> : vector<128xf32>
    %160 = vector.multi_reduction <add>, %157, %cst_136 [0] : vector<256x128xf32> to vector<128xf32>
    %161 = vector.shape_cast %160 : vector<128xf32> to vector<1x128xf32>
    %cst_137 = arith.constant 3.906250e-03 : f32
    %162 = vector.broadcast %cst_137 : f32 to vector<1x128xf32>
    %163 = arith.mulf %161, %162 : vector<1x128xf32>
    %164 = vector.broadcast %163 : vector<1x128xf32> to vector<256x128xf32>
    %165 = arith.subf %157, %164 : vector<256x128xf32>
    %166 = arith.mulf %165, %165 : vector<256x128xf32>
    %cst_138 = arith.constant dense<0.000000e+00> : vector<128xf32>
    %167 = vector.multi_reduction <add>, %166, %cst_138 [0] : vector<256x128xf32> to vector<128xf32>
    %168 = vector.shape_cast %167 : vector<128xf32> to vector<1x128xf32>
    %cst_139 = arith.constant 3.906250e-03 : f32
    %169 = vector.broadcast %cst_139 : f32 to vector<1x128xf32>
    %170 = arith.mulf %168, %169 : vector<1x128xf32>
    %cst_140 = arith.constant 9.99999974E-6 : f32
    %171 = vector.broadcast %cst_140 : f32 to vector<1x128xf32>
    %172 = arith.addf %170, %171 : vector<1x128xf32>
    %173 = math.rsqrt %172 : vector<1x128xf32>
    %174 = vector.broadcast %173 : vector<1x128xf32> to vector<256x128xf32>
    %175 = arith.mulf %165, %174 : vector<256x128xf32>
    %176 = vector.broadcast %158 : vector<1x128xf32> to vector<256x128xf32>
    %177 = arith.mulf %175, %176 : vector<256x128xf32>
    %178 = vector.broadcast %159 : vector<1x128xf32> to vector<256x128xf32>
    %179 = arith.addf %177, %178 : vector<256x128xf32>
    %180 = arith.addf %151, %179 : vector<256x128xf32>
    %cst_141 = arith.constant 0.000000e+00 : f32
    %181 = vector.broadcast %cst_141 : f32 to vector<256x128xf32>
    %182 = arith.maximumf %180, %181 : vector<256x128xf32>
    %183 = vector.shape_cast %182 : vector<256x128xf32> to vector<2x128x128xf32>
    %c0_142 = arith.constant 0 : index
    %c0_143 = arith.constant 0 : index
    %c0_144 = arith.constant 0 : index
    %184 = vector.load %arg13[%c0_142, %c0_143, %c0_144] : memref<2x128x128xf32, #tpu.memory_space<vmem>>, vector<2x128x128xf32>
    tpu.vector_store %arg13[%c0_142, %c0_143, %c0_144], %183 {strides = array<i32>} : memref<2x128x128xf32, #tpu.memory_space<vmem>>, vector<2x128x128xf32>,
    return
  }
}

</mosaic_0001>

<llo_original>
// kernel: resblock_forward.1
$region0: #{resblock_forward.1}
  #allocation0 [shape = 'u32[]', space=smem, size = 0x4, offset = 0x4, fixed_abs, tag = 'smem constant byte address 0x4 - core index']
  #allocation1 [shape = 'u32[72,128]{1,0:T(1,128)}', space=vmem, size = 0x9000, scoped, tag = 'internal scratch']
  #allocation2 [shape = 'f32[2,144,64]{2,1,0:T(8,128)}', space=vmem, size = 0x24000, scoped, tag = 'scratch operand']
  #allocation3 [shape = 'f32[2,144,128]{2,1,0:T(8,128)}', space=vmem, size = 0x24000, scoped, tag = 'scratch operand']
  %s0 = inlined_call_operand.vmem [shape: f32[2,128,64], index: 0, kind: input, shape index: {}]
  %s1 = inlined_call_operand.hbm [shape: f32[576,128], index: 1, kind: input, shape index: {}]
  %s2 = inlined_call_operand.vmem [shape: f32[1,128], index: 2, kind: input, shape index: {}]
  %s3 = inlined_call_operand.vmem [shape: f32[1,128], index: 3, kind: input, shape index: {}]
  %s4 = inlined_call_operand.vmem [shape: f32[1,128], index: 4, kind: input, shape index: {}]
  %s5 = inlined_call_operand.hbm [shape: f32[1152,128], index: 5, kind: input, shape index: {}]
  %s6 = inlined_call_operand.vmem [shape: f32[1,128], index: 6, kind: input, shape index: {}]
  %s7 = inlined_call_operand.vmem [shape: f32[1,128], index: 7, kind: input, shape index: {}]
  %s8 = inlined_call_operand.vmem [shape: f32[1,128], index: 8, kind: input, shape index: {}]
  %s9 = inlined_call_operand.vmem [shape: f32[64,128], index: 9, kind: input, shape index: {}]
  %s10 = inlined_call_operand.vmem [shape: f32[1,128], index: 10, kind: input, shape index: {}]
  %s11 = inlined_call_operand.vmem [shape: f32[1,128], index: 11, kind: input, shape index: {}]
  %s12 = inlined_call_operand.vmem [shape: f32[1,128], index: 12, kind: input, shape index: {}]
  %s13 = inlined_call_operand.vmem [shape: f32[2,128,128], index: 13, kind: output, shape index: {}]
  %s14 = sld [smem:[#allocation0]]
  $region70: #{resblock_forward.1} parent=0
    _
  %s16 = ssub.s32 1, %s14
  %s17 = scalar_select 0, %s16, %s14
  $region1: #{resblock_forward.1} parent=0
    #allocation4 [shape = 'u8[294912]{0}', space=vmem, size = 0x48000, scoped, tag = 'input window, operand 1, single buffered']
    #allocation5 [shape = 's32[1]{0}', space=sflag, size = 0x4, scoped, tag = 'scoped memory for resblock_forward.1']
    #allocation6 [shape = 'u8[589824]{0}', space=vmem, size = 0x90000, scoped, tag = 'input window, operand 5, single buffered']
    #allocation7 [shape = 's32[1]{0}', space=sflag, size = 0x4, scoped, tag = 'scoped memory for resblock_forward.1']
    %18 = vsyncpa [#allocation5], 0
    %19 = vsyncpa [#allocation7], 0
    // Predicated region
    $region2: #{resblock_forward.1} parent=1 // pred_check
      _
    $region3: #{resblock_forward.1} parent=1 // pred_check_branch
      %21 = sbr.rel (0) target = $region5
    $region4: #{resblock_forward.1} parent=1 // pred_region
      _
    $region5: #{resblock_forward.1} parent=1 // pred_fallthru
      _
    // Predicated region
    $region6: #{resblock_forward.1} parent=1 // pred_check
      _
    $region7: #{resblock_forward.1} parent=1 // pred_check_branch
      %23 = sbr.rel (0) target = $region9
    $region8: #{resblock_forward.1} parent=1 // pred_region
      %25 = vsyncadd [#allocation5], 0
      %s26 = sshll.u32 %s1, 4
      %s27 = int_to_ptr.hbm [resolvable:$true] %s26
      %s28 = sshll.u32 [#allocation4], 4
      %s29 = int_to_ptr.vmem [resolvable:$true] %s28
      %34 = dma.hbm_to_vmem [thread:$0]  %s27, 9216, %s29, [#allocation5], 128, 128, 8
    $region9: #{resblock_forward.1} parent=1 // pred_fallthru
      _
    // Predicated region
    $region10: #{resblock_forward.1} parent=1 // pred_check
      _
    $region11: #{resblock_forward.1} parent=1 // pred_check_branch
      %36 = sbr.rel (0) target = $region13
    $region12: #{resblock_forward.1} parent=1 // pred_region
      _
    $region13: #{resblock_forward.1} parent=1 // pred_fallthru
      _
    // Predicated region
    $region14: #{resblock_forward.1} parent=1 // pred_check
      _
    $region15: #{resblock_forward.1} parent=1 // pred_check_branch
      %38 = sbr.rel (0) target = $region17
    $region16: #{resblock_forward.1} parent=1 // pred_region
      _
    $region17: #{resblock_forward.1} parent=1 // pred_fallthru
      _
    // Predicated region
    $region18: #{resblock_forward.1} parent=1 // pred_check
      _
    $region19: #{resblock_forward.1} parent=1 // pred_check_branch
      %40 = sbr.rel (0) target = $region21
    $region20: #{resblock_forward.1} parent=1 // pred_region
      _
    $region21: #{resblock_forward.1} parent=1 // pred_fallthru
      _
    // Predicated region
    $region22: #{resblock_forward.1} parent=1 // pred_check
      _
    $region23: #{resblock_forward.1} parent=1 // pred_check_branch
      %42 = sbr.rel (0) target = $region25
    $region24: #{resblock_forward.1} parent=1 // pred_region
      %44 = vsyncadd [#allocation7], 0
      %s45 = sshll.u32 %s5, 4
      %s46 = int_to_ptr.hbm [resolvable:$true] %s45
      %s47 = sshll.u32 [#allocation6], 4
      %s48 = int_to_ptr.vmem [resolvable:$true] %s47
      %53 = dma.hbm_to_vmem [thread:$0]  %s46, 18432, %s48, [#allocation7], 128, 128, 8
    $region25: #{resblock_forward.1} parent=1 // pred_fallthru
      _
    // Predicated region
    $region26: #{resblock_forward.1} parent=1 // pred_check
      _
    $region27: #{resblock_forward.1} parent=1 // pred_check_branch
      %55 = sbr.rel (0) target = $region29
    $region28: #{resblock_forward.1} parent=1 // pred_region
      _
    $region29: #{resblock_forward.1} parent=1 // pred_fallthru
      _
    // Predicated region
    $region30: #{resblock_forward.1} parent=1 // pred_check
      _
    $region31: #{resblock_forward.1} parent=1 // pred_check_branch
      %57 = sbr.rel (0) target = $region33
    $region32: #{resblock_forward.1} parent=1 // pred_region
      _
    $region33: #{resblock_forward.1} parent=1 // pred_fallthru
      _
    // Predicated region
    $region34: #{resblock_forward.1} parent=1 // pred_check
      _
    $region35: #{resblock_forward.1} parent=1 // pred_check_branch
      %59 = sbr.rel (0) target = $region37
    $region36: #{resblock_forward.1} parent=1 // pred_region
      _
    $region37: #{resblock_forward.1} parent=1 // pred_fallthru
      _
    // Predicated region
    $region38: #{resblock_forward.1} parent=1 // pred_check
      _
    $region39: #{resblock_forward.1} parent=1 // pred_check_branch
      %61 = sbr.rel (0) target = $region41
    $region40: #{resblock_forward.1} parent=1 // pred_region
      _
    $region41: #{resblock_forward.1} parent=1 // pred_fallthru
      _
    // Predicated region
    $region42: #{resblock_forward.1} parent=1 // pred_check
      _
    $region43: #{resblock_forward.1} parent=1 // pred_check_branch
      %63 = sbr.rel (0) target = $region45
    $region44: #{resblock_forward.1} parent=1 // pred_region
      _
    $region45: #{resblock_forward.1} parent=1 // pred_fallthru
      _
    // Predicated region
    $region46: #{resblock_forward.1} parent=1 // pred_check
      _
    $region47: #{resblock_forward.1} parent=1 // pred_check_branch
      %65 = sbr.rel (0) target = $region49
    $region48: #{resblock_forward.1} parent=1 // pred_region
      _
    $region49: #{resblock_forward.1} parent=1 // pred_fallthru
      _
    // Predicated region
    $region50: #{resblock_forward.1} parent=1 // pred_check
      _
    $region51: #{resblock_forward.1} parent=1 // pred_check_branch
      %67 = sbr.rel (0) target = $region53
    $region52: #{resblock_forward.1} parent=1 // pred_region
      _
    $region53: #{resblock_forward.1} parent=1 // pred_fallthru
      _
    // Predicated region
    $region54: #{resblock_forward.1} parent=1 // pred_check
      _
    $region55: #{resblock_forward.1} parent=1 // pred_check_branch
      %69 = sbr.rel (0) target = $region57
    $region56: #{resblock_forward.1} parent=1 // pred_region
      %71 = dma.done [#allocation5], 9216
    $region57: #{resblock_forward.1} parent=1 // pred_fallthru
      _
    // Predicated region
    $region58: #{resblock_forward.1} parent=1 // pred_check
      _
    $region59: #{resblock_forward.1} parent=1 // pred_check_branch
      %73 = sbr.rel (0) target = $region61
    $region60: #{resblock_forward.1} parent=1 // pred_region
      %75 = dma.done [#allocation7], 18432
    $region61: #{resblock_forward.1} parent=1 // pred_fallthru
      _
    %v76 = vld [vmem:[%s0] sm:$0xff]
    %v77 = vld [vmem:[%s0 + $0x8] sm:$0xff]
    %v78 = vld [vmem:[%s0 + $0x10] sm:$0xff]
    %v79 = vld [vmem:[%s0 + $0x18] sm:$0xff]
    %v80 = vld [vmem:[%s0 + $0x20] sm:$0xff]
    %v81 = vld [vmem:[%s0 + $0x28] sm:$0xff]
    %v82 = vld [vmem:[%s0 + $0x30] sm:$0xff]
    %v83 = vld [vmem:[%s0 + $0x38] sm:$0xff]
    %v84 = vld [vmem:[%s0 + $0x40] sm:$0xff]
    %v85 = vld [vmem:[%s0 + $0x48] sm:$0xff]
    %v86 = vld [vmem:[%s0 + $0x50] sm:$0xff]
    %v87 = vld [vmem:[%s0 + $0x58] sm:$0xff]
    %v88 = vld [vmem:[%s0 + $0x60] sm:$0xff]
    %v89 = vld [vmem:[%s0 + $0x68] sm:$0xff]
    %v90 = vld [vmem:[%s0 + $0x70] sm:$0xff]
    %v91 = vld [vmem:[%s0 + $0x78] sm:$0xff]
    %v92 = vld [vmem:[%s0 + $0x80] sm:$0xff]
    %v93 = vld [vmem:[%s0 + $0x88] sm:$0xff]
    %v94 = vld [vmem:[%s0 + $0x90] sm:$0xff]
    %v95 = vld [vmem:[%s0 + $0x98] sm:$0xff]
    %v96 = vld [vmem:[%s0 + $0xa0] sm:$0xff]
    %v97 = vld [vmem:[%s0 + $0xa8] sm:$0xff]
    %v98 = vld [vmem:[%s0 + $0xb0] sm:$0xff]
    %v99 = vld [vmem:[%s0 + $0xb8] sm:$0xff]
    %v100 = vld [vmem:[%s0 + $0xc0] sm:$0xff]
    %v101 = vld [vmem:[%s0 + $0xc8] sm:$0xff]
    %v102 = vld [vmem:[%s0 + $0xd0] sm:$0xff]
    %v103 = vld [vmem:[%s0 + $0xd8] sm:$0xff]
    %v104 = vld [vmem:[%s0 + $0xe0] sm:$0xff]
    %v105 = vld [vmem:[%s0 + $0xe8] sm:$0xff]
    %v106 = vld [vmem:[%s0 + $0xf0] sm:$0xff]
    %v107 = vld [vmem:[%s0 + $0xf8] sm:$0xff]
    %vm108 = vcmask 523264
    %109 = vst.msk [vmem:[#allocation2] sm:$0xff] %vm108, 0.0
    %110 = vst.msk [vmem:[#allocation2 + $0x8] sm:$0xff] %vm108, 0.0
    %111 = vst.msk [vmem:[#allocation2 + $0x10] sm:$0xff] %vm108, 0.0
    %112 = vst.msk [vmem:[#allocation2 + $0x18] sm:$0xff] %vm108, 0.0
    %113 = vst.msk [vmem:[#allocation2 + $0x20] sm:$0xff] %vm108, 0.0
    %114 = vst.msk [vmem:[#allocation2 + $0x28] sm:$0xff] %vm108, 0.0
    %115 = vst.msk [vmem:[#allocation2 + $0x30] sm:$0xff] %vm108, 0.0
    %116 = vst.msk [vmem:[#allocation2 + $0x38] sm:$0xff] %vm108, 0.0
    %117 = vst.msk [vmem:[#allocation2 + $0x40] sm:$0xff] %vm108, 0.0
    %118 = vst.msk [vmem:[#allocation2 + $0x48] sm:$0xff] %vm108, 0.0
    %119 = vst.msk [vmem:[#allocation2 + $0x50] sm:$0xff] %vm108, 0.0
    %120 = vst.msk [vmem:[#allocation2 + $0x58] sm:$0xff] %vm108, 0.0
    %121 = vst.msk [vmem:[#allocation2 + $0x60] sm:$0xff] %vm108, 0.0
    %122 = vst.msk [vmem:[#allocation2 + $0x68] sm:$0xff] %vm108, 0.0
    %123 = vst.msk [vmem:[#allocation2 + $0x70] sm:$0xff] %vm108, 0.0
    %124 = vst.msk [vmem:[#allocation2 + $0x78] sm:$0xff] %vm108, 0.0
    %125 = vst.msk [vmem:[#allocation2 + $0x80] sm:$0xff] %vm108, 0.0
    %126 = vst.msk [vmem:[#allocation2 + $0x88] sm:$0xff] %vm108, 0.0
    %127 = vst.msk [vmem:[#allocation2 + $0x90] sm:$0xff] %vm108, 0.0
    %128 = vst.msk [vmem:[#allocation2 + $0x98] sm:$0xff] %vm108, 0.0
    %129 = vst.msk [vmem:[#allocation2 + $0xa0] sm:$0xff] %vm108, 0.0
    %130 = vst.msk [vmem:[#allocation2 + $0xa8] sm:$0xff] %vm108, 0.0
    %131 = vst.msk [vmem:[#allocation2 + $0xb0] sm:$0xff] %vm108, 0.0
    %132 = vst.msk [vmem:[#allocation2 + $0xb8] sm:$0xff] %vm108, 0.0
    %133 = vst.msk [vmem:[#allocation2 + $0xc0] sm:$0xff] %vm108, 0.0
    %134 = vst.msk [vmem:[#allocation2 + $0xc8] sm:$0xff] %vm108, 0.0
    %135 = vst.msk [vmem:[#allocation2 + $0xd0] sm:$0xff] %vm108, 0.0
    %136 = vst.msk [vmem:[#allocation2 + $0xd8] sm:$0xff] %vm108, 0.0
    %137 = vst.msk [vmem:[#allocation2 + $0xe0] sm:$0xff] %vm108, 0.0
    %138 = vst.msk [vmem:[#allocation2 + $0xe8] sm:$0xff] %vm108, 0.0
    %139 = vst.msk [vmem:[#allocation2 + $0xf0] sm:$0xff] %vm108, 0.0
    %140 = vst.msk [vmem:[#allocation2 + $0xf8] sm:$0xff] %vm108, 0.0
    %141 = vst.msk [vmem:[#allocation2 + $0x100] sm:$0xff] %vm108, 0.0
    %142 = vst.msk [vmem:[#allocation2 + $0x108] sm:$0xff] %vm108, 0.0
    %143 = vst.msk [vmem:[#allocation2 + $0x110] sm:$0xff] %vm108, 0.0
    %144 = vst.msk [vmem:[#allocation2 + $0x118] sm:$0xff] %vm108, 0.0
    %145 = vst.msk [vmem:[#allocation2 + $0x8] sm:$0xff] %vm108, %v76
    %146 = vst.msk [vmem:[#allocation2 + $0x10] sm:$0xff] %vm108, %v77
    %147 = vst.msk [vmem:[#allocation2 + $0x18] sm:$0xff] %vm108, %v78
    %148 = vst.msk [vmem:[#allocation2 + $0x20] sm:$0xff] %vm108, %v79
    %149 = vst.msk [vmem:[#allocation2 + $0x28] sm:$0xff] %vm108, %v80
    %150 = vst.msk [vmem:[#allocation2 + $0x30] sm:$0xff] %vm108, %v81
    %151 = vst.msk [vmem:[#allocation2 + $0x38] sm:$0xff] %vm108, %v82
    %152 = vst.msk [vmem:[#allocation2 + $0x40] sm:$0xff] %vm108, %v83
    %153 = vst.msk [vmem:[#allocation2 + $0x48] sm:$0xff] %vm108, %v84
    %154 = vst.msk [vmem:[#allocation2 + $0x50] sm:$0xff] %vm108, %v85
    %155 = vst.msk [vmem:[#allocation2 + $0x58] sm:$0xff] %vm108, %v86
    %156 = vst.msk [vmem:[#allocation2 + $0x60] sm:$0xff] %vm108, %v87
    %157 = vst.msk [vmem:[#allocation2 + $0x68] sm:$0xff] %vm108, %v88
    %158 = vst.msk [vmem:[#allocation2 + $0x70] sm:$0xff] %vm108, %v89
    %159 = vst.msk [vmem:[#allocation2 + $0x78] sm:$0xff] %vm108, %v90
    %160 = vst.msk [vmem:[#allocation2 + $0x80] sm:$0xff] %vm108, %v91
    %161 = vst.msk [vmem:[#allocation2 + $0x98] sm:$0xff] %vm108, %v92
    %162 = vst.msk [vmem:[#allocation2 + $0xa0] sm:$0xff] %vm108, %v93
    %163 = vst.msk [vmem:[#allocation2 + $0xa8] sm:$0xff] %vm108, %v94
    %164 = vst.msk [vmem:[#allocation2 + $0xb0] sm:$0xff] %vm108, %v95
    %165 = vst.msk [vmem:[#allocation2 + $0xb8] sm:$0xff] %vm108, %v96
    %166 = vst.msk [vmem:[#allocation2 + $0xc0] sm:$0xff] %vm108, %v97
    %167 = vst.msk [vmem:[#allocation2 + $0xc8] sm:$0xff] %vm108, %v98
    %168 = vst.msk [vmem:[#allocation2 + $0xd0] sm:$0xff] %vm108, %v99
    %169 = vst.msk [vmem:[#allocation2 + $0xd8] sm:$0xff] %vm108, %v100
    %170 = vst.msk [vmem:[#allocation2 + $0xe0] sm:$0xff] %vm108, %v101
    %171 = vst.msk [vmem:[#allocation2 + $0xe8] sm:$0xff] %vm108, %v102
    %172 = vst.msk [vmem:[#allocation2 + $0xf0] sm:$0xff] %vm108, %v103
    %173 = vst.msk [vmem:[#allocation2 + $0xf8] sm:$0xff] %vm108, %v104
    %174 = vst.msk [vmem:[#allocation2 + $0x100] sm:$0xff] %vm108, %v105
    %175 = vst.msk [vmem:[#allocation2 + $0x108] sm:$0xff] %vm108, %v106
    %176 = vst.msk [vmem:[#allocation2 + $0x110] sm:$0xff] %vm108, %v107
    %v177 = vld [vmem:[#allocation2 + $0x4] sm:$0xff]
    %v178 = vld [vmem:[#allocation2 + $0xc] sm:$0xff]
    %v179 = vld [vmem:[#allocation2 + $0x14] sm:$0xff]
    %v180 = vld [vmem:[#allocation2 + $0x1c] sm:$0xff]
    %v181 = vld [vmem:[#allocation2 + $0x24] sm:$0xff]
    %v182 = vld [vmem:[#allocation2 + $0x2c] sm:$0xff]
    %v183 = vld [vmem:[#allocation2 + $0x34] sm:$0xff]
    %v184 = vld [vmem:[#allocation2 + $0x3c] sm:$0xff]
    %v185 = vld [vmem:[#allocation2 + $0x44] sm:$0xff]
    %v186 = vld [vmem:[#allocation2 + $0x4c] sm:$0xff]
    %v187 = vld [vmem:[#allocation2 + $0x54] sm:$0xff]
    %v188 = vld [vmem:[#allocation2 + $0x5c] sm:$0xff]
    %v189 = vld [vmem:[#allocation2 + $0x64] sm:$0xff]
    %v190 = vld [vmem:[#allocation2 + $0x6c] sm:$0xff]
    %v191 = vld [vmem:[#allocation2 + $0x74] sm:$0xff]
    %v192 = vld [vmem:[#allocation2 + $0x7c] sm:$0xff]
    %v193 = vld [vmem:[#allocation2 + $0x94] sm:$0xff]
    %v194 = vld [vmem:[#allocation2 + $0x9c] sm:$0xff]
    %v195 = vld [vmem:[#allocation2 + $0xa4] sm:$0xff]
    %v196 = vld [vmem:[#allocation2 + $0xac] sm:$0xff]
    %v197 = vld [vmem:[#allocation2 + $0xb4] sm:$0xff]
    %v198 = vld [vmem:[#allocation2 + $0xbc] sm:$0xff]
    %v199 = vld [vmem:[#allocation2 + $0xc4] sm:$0xff]
    %v200 = vld [vmem:[#allocation2 + $0xcc] sm:$0xff]
    %v201 = vld [vmem:[#allocation2 + $0xd4] sm:$0xff]
    %v202 = vld [vmem:[#allocation2 + $0xdc] sm:$0xff]
    %v203 = vld [vmem:[#allocation2 + $0xe4] sm:$0xff]
    %v204 = vld [vmem:[#allocation2 + $0xec] sm:$0xff]
    %v205 = vld [vmem:[#allocation2 + $0xf4] sm:$0xff]
    %v206 = vld [vmem:[#allocation2 + $0xfc] sm:$0xff]
    %v207 = vld [vmem:[#allocation2 + $0x104] sm:$0xff]
    %v208 = vld [vmem:[#allocation2 + $0x10c] sm:$0xff]
    %v209 = vld [vmem:[#allocation4] sm:$0xff]
    %v210 = vld [vmem:[#allocation4 + $0x8] sm:$0xff]
    %v211 = vld [vmem:[#allocation4 + $0x10] sm:$0xff]
    %v212 = vld [vmem:[#allocation4 + $0x18] sm:$0xff]
    %v213 = vld [vmem:[#allocation4 + $0x20] sm:$0xff]
    %v214 = vld [vmem:[#allocation4 + $0x28] sm:$0xff]
    %v215 = vld [vmem:[#allocation4 + $0x30] sm:$0xff]
    %v216 = vld [vmem:[#allocation4 + $0x38] sm:$0xff]
    %v217 = vld [vmem:[#allocation2 + $0x5] sm:$0xff]
    %v218 = vld [vmem:[#allocation2 + $0xd] sm:$0xff]
    %v219 = vld [vmem:[#allocation2 + $0x15] sm:$0xff]
    %v220 = vld [vmem:[#allocation2 + $0x1d] sm:$0xff]
    %v221 = vld [vmem:[#allocation2 + $0x25] sm:$0xff]
    %v222 = vld [vmem:[#allocation2 + $0x2d] sm:$0xff]
    %v223 = vld [vmem:[#allocation2 + $0x35] sm:$0xff]
    %v224 = vld [vmem:[#allocation2 + $0x3d] sm:$0xff]
    %v225 = vld [vmem:[#allocation2 + $0x45] sm:$0xff]
    %v226 = vld [vmem:[#allocation2 + $0x4d] sm:$0xff]
    %v227 = vld [vmem:[#allocation2 + $0x55] sm:$0xff]
    %v228 = vld [vmem:[#allocation2 + $0x5d] sm:$0xff]
    %v229 = vld [vmem:[#allocation2 + $0x65] sm:$0xff]
    %v230 = vld [vmem:[#allocation2 + $0x6d] sm:$0xff]
    %v231 = vld [vmem:[#allocation2 + $0x75] sm:$0xff]
    %v232 = vld [vmem:[#allocation2 + $0x7d] sm:$0xff]
    %v233 = vld [vmem:[#allocation2 + $0x95] sm:$0xff]
    %v234 = vld [vmem:[#allocation2 + $0x9d] sm:$0xff]
    %v235 = vld [vmem:[#allocation2 + $0xa5] sm:$0xff]
    %v236 = vld [vmem:[#allocation2 + $0xad] sm:$0xff]
    %v237 = vld [vmem:[#allocation2 + $0xb5] sm:$0xff]
    %v238 = vld [vmem:[#allocation2 + $0xbd] sm:$0xff]
    %v239 = vld [vmem:[#allocation2 + $0xc5] sm:$0xff]
    %v240 = vld [vmem:[#allocation2 + $0xcd] sm:$0xff]
    %v241 = vld [vmem:[#allocation2 + $0xd5] sm:$0xff]
    %v242 = vld [vmem:[#allocation2 + $0xdd] sm:$0xff]
    %v243 = vld [vmem:[#allocation2 + $0xe5] sm:$0xff]
    %v244 = vld [vmem:[#allocation2 + $0xed] sm:$0xff]
    %v245 = vld [vmem:[#allocation2 + $0xf5] sm:$0xff]
    %v246 = vld [vmem:[#allocation2 + $0xfd] sm:$0xff]
    %v247 = vld [vmem:[#allocation2 + $0x105] sm:$0xff]
    %v248 = vld [vmem:[#allocation2 + $0x10d] sm:$0xff]
    %v249 = vld [vmem:[#allocation4 + $0x40] sm:$0xff]
    %v250 = vld [vmem:[#allocation4 + $0x48] sm:$0xff]
    %v251 = vld [vmem:[#allocation4 + $0x50] sm:$0xff]
    %v252 = vld [vmem:[#allocation4 + $0x58] sm:$0xff]
    %v253 = vld [vmem:[#allocation4 + $0x60] sm:$0xff]
    %v254 = vld [vmem:[#allocation4 + $0x68] sm:$0xff]
    %v255 = vld [vmem:[#allocation4 + $0x70] sm:$0xff]
    %v256 = vld [vmem:[#allocation4 + $0x78] sm:$0xff]
    %v258 = vsel %vm108, %v217, 0
    %v261 = vsel %vm108, %v218, 0
    %v264 = vsel %vm108, %v219, 0
    %v267 = vsel %vm108, %v220, 0
    %v270 = vsel %vm108, %v221, 0
    %v273 = vsel %vm108, %v222, 0
    %v276 = vsel %vm108, %v223, 0
    %v279 = vsel %vm108, %v224, 0
    %v282 = vsel %vm108, %v225, 0
    %v285 = vsel %vm108, %v226, 0
    %v288 = vsel %vm108, %v227, 0
    %v291 = vsel %vm108, %v228, 0
    %v294 = vsel %vm108, %v229, 0
    %v297 = vsel %vm108, %v230, 0
    %v300 = vsel %vm108, %v231, 0
    %v303 = vsel %vm108, %v232, 0
    %v306 = vsel %vm108, %v233, 0
    %v309 = vsel %vm108, %v234, 0
    %v312 = vsel %vm108, %v235, 0
    %v315 = vsel %vm108, %v236, 0
    %v318 = vsel %vm108, %v237, 0
    %v321 = vsel %vm108, %v238, 0
    %v324 = vsel %vm108, %v239, 0
    %v327 = vsel %vm108, %v240, 0
    %v330 = vsel %vm108, %v241, 0
    %v333 = vsel %vm108, %v242, 0
    %v336 = vsel %vm108, %v243, 0
    %v339 = vsel %vm108, %v244, 0
    %v342 = vsel %vm108, %v245, 0
    %v345 = vsel %vm108, %v246, 0
    %v348 = vsel %vm108, %v247, 0
    %v351 = vsel %vm108, %v248, 0
    %353 = vmatpush.msra.mxu0 0.0
    %354 = vmatpush.msra.mxu0 0.0
    %355 = vmatpush.msra.mxu0 0.0
    %356 = vmatpush.msra.mxu0 0.0
    %357 = vmatpush.msra.mxu0 0.0
    %358 = vmatpush.msra.mxu0 0.0
    %359 = vmatpush.msra.mxu0 0.0
    %360 = vmatpush.msra.mxu0 0.0
    %361 = vmatpush.msra.mxu0 %v256
    %362 = vmatpush.msra.mxu0 %v255
    %363 = vmatpush.msra.mxu0 %v254
    %364 = vmatpush.msra.mxu0 %v253
    %365 = vmatpush.msra.mxu0 %v252
    %366 = vmatpush.msra.mxu0 %v251
    %367 = vmatpush.msra.mxu0 %v250
    %368 = vmatpush.msra.mxu0 %v249
    %369 = vmatmul.f32.gmra.mxu0 %v258
    %v370 = vpop.f32.mrf.mxu0
    %v371 = vadd.f32 0.0, %v370
    %372 = vmatmul.f32.gmra.mxu0 %v261
    %v373 = vpop.f32.mrf.mxu0
    %v374 = vadd.f32 0.0, %v373
    %375 = vmatmul.f32.gmra.mxu0 %v264
    %v376 = vpop.f32.mrf.mxu0
    %v377 = vadd.f32 0.0, %v376
    %378 = vmatmul.f32.gmra.mxu0 %v267
    %v379 = vpop.f32.mrf.mxu0
    %v380 = vadd.f32 0.0, %v379
    %381 = vmatmul.f32.gmra.mxu0 %v270
    %v382 = vpop.f32.mrf.mxu0
    %v383 = vadd.f32 0.0, %v382
    %384 = vmatmul.f32.gmra.mxu0 %v273
    %v385 = vpop.f32.mrf.mxu0
    %v386 = vadd.f32 0.0, %v385
    %387 = vmatmul.f32.gmra.mxu0 %v276
    %v388 = vpop.f32.mrf.mxu0
    %v389 = vadd.f32 0.0, %v388
    %390 = vmatmul.f32.gmra.mxu0 %v279
    %v391 = vpop.f32.mrf.mxu0
    %v392 = vadd.f32 0.0, %v391
    %393 = vmatmul.f32.gmra.mxu0 %v282
    %v394 = vpop.f32.mrf.mxu0
    %v395 = vadd.f32 0.0, %v394
    %396 = vmatmul.f32.gmra.mxu0 %v285
    %v397 = vpop.f32.mrf.mxu0
    %v398 = vadd.f32 0.0, %v397
    %399 = vmatmul.f32.gmra.mxu0 %v288
    %v400 = vpop.f32.mrf.mxu0
    %v401 = vadd.f32 0.0, %v400
    %402 = vmatmul.f32.gmra.mxu0 %v291
    %v403 = vpop.f32.mrf.mxu0
    %v404 = vadd.f32 0.0, %v403
    %405 = vmatmul.f32.gmra.mxu0 %v294
    %v406 = vpop.f32.mrf.mxu0
    %v407 = vadd.f32 0.0, %v406
    %408 = vmatmul.f32.gmra.mxu0 %v297
    %v409 = vpop.f32.mrf.mxu0
    %v410 = vadd.f32 0.0, %v409
    %411 = vmatmul.f32.gmra.mxu0 %v300
    %v412 = vpop.f32.mrf.mxu0
    %v413 = vadd.f32 0.0, %v412
    %414 = vmatmul.f32.gmra.mxu0 %v303
    %v415 = vpop.f32.mrf.mxu0
    %v416 = vadd.f32 0.0, %v415
    %417 = vmatmul.f32.gmra.mxu0 %v306
    %v418 = vpop.f32.mrf.mxu0
    %v419 = vadd.f32 0.0, %v418
    %420 = vmatmul.f32.gmra.mxu0 %v309
    %v421 = vpop.f32.mrf.mxu0
    %v422 = vadd.f32 0.0, %v421
    %423 = vmatmul.f32.gmra.mxu0 %v312
    %v424 = vpop.f32.mrf.mxu0
    %v425 = vadd.f32 0.0, %v424
    %426 = vmatmul.f32.gmra.mxu0 %v315
    %v427 = vpop.f32.mrf.mxu0
    %v428 = vadd.f32 0.0, %v427
    %429 = vmatmul.f32.gmra.mxu0 %v318
    %v430 = vpop.f32.mrf.mxu0
    %v431 = vadd.f32 0.0, %v430
    %432 = vmatmul.f32.gmra.mxu0 %v321
    %v433 = vpop.f32.mrf.mxu0
    %v434 = vadd.f32 0.0, %v433
    %435 = vmatmul.f32.gmra.mxu0 %v324
    %v436 = vpop.f32.mrf.mxu0
    %v437 = vadd.f32 0.0, %v436
    %438 = vmatmul.f32.gmra.mxu0 %v327
    %v439 = vpop.f32.mrf.mxu0
    %v440 = vadd.f32 0.0, %v439
    %441 = vmatmul.f32.gmra.mxu0 %v330
    %v442 = vpop.f32.mrf.mxu0
    %v443 = vadd.f32 0.0, %v442
    %444 = vmatmul.f32.gmra.mxu0 %v333
    %v445 = vpop.f32.mrf.mxu0
    %v446 = vadd.f32 0.0, %v445
    %447 = vmatmul.f32.gmra.mxu0 %v336
    %v448 = vpop.f32.mrf.mxu0
    %v449 = vadd.f32 0.0, %v448
    %450 = vmatmul.f32.gmra.mxu0 %v339
    %v451 = vpop.f32.mrf.mxu0
    %v452 = vadd.f32 0.0, %v451
    %453 = vmatmul.f32.gmra.mxu0 %v342
    %v454 = vpop.f32.mrf.mxu0
    %v455 = vadd.f32 0.0, %v454
    %456 = vmatmul.f32.gmra.mxu0 %v345
    %v457 = vpop.f32.mrf.mxu0
    %v458 = vadd.f32 0.0, %v457
    %459 = vmatmul.f32.gmra.mxu0 %v348
    %v460 = vpop.f32.mrf.mxu0
    %v461 = vadd.f32 0.0, %v460
    %462 = vmatmul.f32.gmra.mxu0 %v351
    %v463 = vpop.f32.mrf.mxu0
    %v464 = vadd.f32 0.0, %v463
    %465 = vdwg.mxu0
    %v467 = vsel %vm108, %v177, 0
    %v470 = vsel %vm108, %v178, 0
    %v473 = vsel %vm108, %v179, 0
    %v476 = vsel %vm108, %v180, 0
    %v479 = vsel %vm108, %v181, 0
    %v482 = vsel %vm108, %v182, 0
    %v485 = vsel %vm108, %v183, 0
    %v488 = vsel %vm108, %v184, 0
    %v491 = vsel %vm108, %v185, 0
    %v494 = vsel %vm108, %v186, 0
    %v497 = vsel %vm108, %v187, 0
    %v500 = vsel %vm108, %v188, 0
    %v503 = vsel %vm108, %v189, 0
    %v506 = vsel %vm108, %v190, 0
    %v509 = vsel %vm108, %v191, 0
    %v512 = vsel %vm108, %v192, 0
    %v515 = vsel %vm108, %v193, 0
    %v518 = vsel %vm108, %v194, 0
    %v521 = vsel %vm108, %v195, 0
    %v524 = vsel %vm108, %v196, 0
    %v527 = vsel %vm108, %v197, 0
    %v530 = vsel %vm108, %v198, 0
    %v533 = vsel %vm108, %v199, 0
    %v536 = vsel %vm108, %v200, 0
    %v539 = vsel %vm108, %v201, 0
    %v542 = vsel %vm108, %v202, 0
    %v545 = vsel %vm108, %v203, 0
    %v548 = vsel %vm108, %v204, 0
    %v551 = vsel %vm108, %v205, 0
    %v554 = vsel %vm108, %v206, 0
    %v557 = vsel %vm108, %v207, 0
    %v560 = vsel %vm108, %v208, 0
    %562 = vmatpush.msra.mxu0 0.0
    %563 = vmatpush.msra.mxu0 0.0
    %564 = vmatpush.msra.mxu0 0.0
    %565 = vmatpush.msra.mxu0 0.0
    %566 = vmatpush.msra.mxu0 0.0
    %567 = vmatpush.msra.mxu0 0.0
    %568 = vmatpush.msra.mxu0 0.0
    %569 = vmatpush.msra.mxu0 0.0
    %570 = vmatpush.msra.mxu0 %v216
    %571 = vmatpush.msra.mxu0 %v215
    %572 = vmatpush.msra.mxu0 %v214
    %573 = vmatpush.msra.mxu0 %v213
    %574 = vmatpush.msra.mxu0 %v212
    %575 = vmatpush.msra.mxu0 %v211
    %576 = vmatpush.msra.mxu0 %v210
    %577 = vmatpush.msra.mxu0 %v209
    %578 = vmatmul.f32.gmra.mxu0 %v467
    %v579 = vpop.f32.mrf.mxu0
    %v580 = vadd.f32 %v371, %v579
    %581 = vmatmul.f32.gmra.mxu0 %v470
    %v582 = vpop.f32.mrf.mxu0
    %v583 = vadd.f32 %v374, %v582
    %584 = vmatmul.f32.gmra.mxu0 %v473
    %v585 = vpop.f32.mrf.mxu0
    %v586 = vadd.f32 %v377, %v585
    %587 = vmatmul.f32.gmra.mxu0 %v476
    %v588 = vpop.f32.mrf.mxu0
    %v589 = vadd.f32 %v380, %v588
    %590 = vmatmul.f32.gmra.mxu0 %v479
    %v591 = vpop.f32.mrf.mxu0
    %v592 = vadd.f32 %v383, %v591
    %593 = vmatmul.f32.gmra.mxu0 %v482
    %v594 = vpop.f32.mrf.mxu0
    %v595 = vadd.f32 %v386, %v594
    %596 = vmatmul.f32.gmra.mxu0 %v485
    %v597 = vpop.f32.mrf.mxu0
    %v598 = vadd.f32 %v389, %v597
    %599 = vmatmul.f32.gmra.mxu0 %v488
    %v600 = vpop.f32.mrf.mxu0
    %v601 = vadd.f32 %v392, %v600
    %602 = vmatmul.f32.gmra.mxu0 %v491
    %v603 = vpop.f32.mrf.mxu0
    %v604 = vadd.f32 %v395, %v603
    %605 = vmatmul.f32.gmra.mxu0 %v494
    %v606 = vpop.f32.mrf.mxu0
    %v607 = vadd.f32 %v398, %v606
    %608 = vmatmul.f32.gmra.mxu0 %v497
    %v609 = vpop.f32.mrf.mxu0
    %v610 = vadd.f32 %v401, %v609
    %611 = vmatmul.f32.gmra.mxu0 %v500
    %v612 = vpop.f32.mrf.mxu0
    %v613 = vadd.f32 %v404, %v612
    %614 = vmatmul.f32.gmra.mxu0 %v503
    %v615 = vpop.f32.mrf.mxu0
    %v616 = vadd.f32 %v407, %v615
    %617 = vmatmul.f32.gmra.mxu0 %v506
    %v618 = vpop.f32.mrf.mxu0
    %v619 = vadd.f32 %v410, %v618
    %620 = vmatmul.f32.gmra.mxu0 %v509
    %v621 = vpop.f32.mrf.mxu0
    %v622 = vadd.f32 %v413, %v621
    %623 = vmatmul.f32.gmra.mxu0 %v512
    %v624 = vpop.f32.mrf.mxu0
    %v625 = vadd.f32 %v416, %v624
    %626 = vmatmul.f32.gmra.mxu0 %v515
    %v627 = vpop.f32.mrf.mxu0
    %v628 = vadd.f32 %v419, %v627
    %629 = vmatmul.f32.gmra.mxu0 %v518
    %v630 = vpop.f32.mrf.mxu0
    %v631 = vadd.f32 %v422, %v630
    %632 = vmatmul.f32.gmra.mxu0 %v521
    %v633 = vpop.f32.mrf.mxu0
    %v634 = vadd.f32 %v425, %v633
    %635 = vmatmul.f32.gmra.mxu0 %v524
    %v636 = vpop.f32.mrf.mxu0
    %v637 = vadd.f32 %v428, %v636
    %638 = vmatmul.f32.gmra.mxu0 %v527
    %v639 = vpop.f32.mrf.mxu0
    %v640 = vadd.f32 %v431, %v639
    %641 = vmatmul.f32.gmra.mxu0 %v530
    %v642 = vpop.f32.mrf.mxu0
    %v643 = vadd.f32 %v434, %v642
    %644 = vmatmul.f32.gmra.mxu0 %v533
    %v645 = vpop.f32.mrf.mxu0
    %v646 = vadd.f32 %v437, %v645
    %647 = vmatmul.f32.gmra.mxu0 %v536
    %v648 = vpop.f32.mrf.mxu0
    %v649 = vadd.f32 %v440, %v648
    %650 = vmatmul.f32.gmra.mxu0 %v539
    %v651 = vpop.f32.mrf.mxu0
    %v652 = vadd.f32 %v443, %v651
    %653 = vmatmul.f32.gmra.mxu0 %v542
    %v654 = vpop.f32.mrf.mxu0
    %v655 = vadd.f32 %v446, %v654
    %656 = vmatmul.f32.gmra.mxu0 %v545
    %v657 = vpop.f32.mrf.mxu0
    %v658 = vadd.f32 %v449, %v657
    %659 = vmatmul.f32.gmra.mxu0 %v548
    %v660 = vpop.f32.mrf.mxu0
    %v661 = vadd.f32 %v452, %v660
    %662 = vmatmul.f32.gmra.mxu0 %v551
    %v663 = vpop.f32.mrf.mxu0
    %v664 = vadd.f32 %v455, %v663
    %665 = vmatmul.f32.gmra.mxu0 %v554
    %v666 = vpop.f32.mrf.mxu0
    %v667 = vadd.f32 %v458, %v666
    %668 = vmatmul.f32.gmra.mxu0 %v557
    %v669 = vpop.f32.mrf.mxu0
    %v670 = vadd.f32 %v461, %v669
    %671 = vmatmul.f32.gmra.mxu0 %v560
    %v672 = vpop.f32.mrf.mxu0
    %v673 = vadd.f32 %v464, %v672
    %674 = vdwg.mxu0
    %v675 = vld [vmem:[#allocation2 + $0x6] sm:$0xff]
    %v676 = vld [vmem:[#allocation2 + $0xe] sm:$0xff]
    %v677 = vld [vmem:[#allocation2 + $0x16] sm:$0xff]
    %v678 = vld [vmem:[#allocation2 + $0x1e] sm:$0xff]
    %v679 = vld [vmem:[#allocation2 + $0x26] sm:$0xff]
    %v680 = vld [vmem:[#allocation2 + $0x2e] sm:$0xff]
    %v681 = vld [vmem:[#allocation2 + $0x36] sm:$0xff]
    %v682 = vld [vmem:[#allocation2 + $0x3e] sm:$0xff]
    %v683 = vld [vmem:[#allocation2 + $0x46] sm:$0xff]
    %v684 = vld [vmem:[#allocation2 + $0x4e] sm:$0xff]
    %v685 = vld [vmem:[#allocation2 + $0x56] sm:$0xff]
    %v686 = vld [vmem:[#allocation2 + $0x5e] sm:$0xff]
    %v687 = vld [vmem:[#allocation2 + $0x66] sm:$0xff]
    %v688 = vld [vmem:[#allocation2 + $0x6e] sm:$0xff]
    %v689 = vld [vmem:[#allocation2 + $0x76] sm:$0xff]
    %v690 = vld [vmem:[#allocation2 + $0x7e] sm:$0xff]
    %v691 = vld [vmem:[#allocation2 + $0x96] sm:$0xff]
    %v692 = vld [vmem:[#allocation2 + $0x9e] sm:$0xff]
    %v693 = vld [vmem:[#allocation2 + $0xa6] sm:$0xff]
    %v694 = vld [vmem:[#allocation2 + $0xae] sm:$0xff]
    %v695 = vld [vmem:[#allocation2 + $0xb6] sm:$0xff]
    %v696 = vld [vmem:[#allocation2 + $0xbe] sm:$0xff]
    %v697 = vld [vmem:[#allocation2 + $0xc6] sm:$0xff]
    %v698 = vld [vmem:[#allocation2 + $0xce] sm:$0xff]
    %v699 = vld [vmem:[#allocation2 + $0xd6] sm:$0xff]
    %v700 = vld [vmem:[#allocation2 + $0xde] sm:$0xff]
    %v701 = vld [vmem:[#allocation2 + $0xe6] sm:$0xff]
    %v702 = vld [vmem:[#allocation2 + $0xee] sm:$0xff]
    %v703 = vld [vmem:[#allocation2 + $0xf6] sm:$0xff]
    %v704 = vld [vmem:[#allocation2 + $0xfe] sm:$0xff]
    %v705 = vld [vmem:[#allocation2 + $0x106] sm:$0xff]
    %v706 = vld [vmem:[#allocation2 + $0x10e] sm:$0xff]
    %v707 = vld [vmem:[#allocation4 + $0x80] sm:$0xff]
    %v708 = vld [vmem:[#allocation4 + $0x88] sm:$0xff]
    %v709 = vld [vmem:[#allocation4 + $0x90] sm:$0xff]
    %v710 = vld [vmem:[#allocation4 + $0x98] sm:$0xff]
    %v711 = vld [vmem:[#allocation4 + $0xa0] sm:$0xff]
    %v712 = vld [vmem:[#allocation4 + $0xa8] sm:$0xff]
    %v713 = vld [vmem:[#allocation4 + $0xb0] sm:$0xff]
    %v714 = vld [vmem:[#allocation4 + $0xb8] sm:$0xff]
    %v716 = vsel %vm108, %v675, 0
    %v719 = vsel %vm108, %v676, 0
    %v722 = vsel %vm108, %v677, 0
    %v725 = vsel %vm108, %v678, 0
    %v728 = vsel %vm108, %v679, 0
    %v731 = vsel %vm108, %v680, 0
    %v734 = vsel %vm108, %v681, 0
    %v737 = vsel %vm108, %v682, 0
    %v740 = vsel %vm108, %v683, 0
    %v743 = vsel %vm108, %v684, 0
    %v746 = vsel %vm108, %v685, 0
    %v749 = vsel %vm108, %v686, 0
    %v752 = vsel %vm108, %v687, 0
    %v755 = vsel %vm108, %v688, 0
    %v758 = vsel %vm108, %v689, 0
    %v761 = vsel %vm108, %v690, 0
    %v764 = vsel %vm108, %v691, 0
    %v767 = vsel %vm108, %v692, 0
    %v770 = vsel %vm108, %v693, 0
    %v773 = vsel %vm108, %v694, 0
    %v776 = vsel %vm108, %v695, 0
    %v779 = vsel %vm108, %v696, 0
    %v782 = vsel %vm108, %v697, 0
    %v785 = vsel %vm108, %v698, 0
    %v788 = vsel %vm108, %v699, 0
    %v791 = vsel %vm108, %v700, 0
    %v794 = vsel %vm108, %v701, 0
    %v797 = vsel %vm108, %v702, 0
    %v800 = vsel %vm108, %v703, 0
    %v803 = vsel %vm108, %v704, 0
    %v806 = vsel %vm108, %v705, 0
    %v809 = vsel %vm108, %v706, 0
    %811 = vmatpush.msra.mxu0 0.0
    %812 = vmatpush.msra.mxu0 0.0
    %813 = vmatpush.msra.mxu0 0.0
    %814 = vmatpush.msra.mxu0 0.0
    %815 = vmatpush.msra.mxu0 0.0
    %816 = vmatpush.msra.mxu0 0.0
    %817 = vmatpush.msra.mxu0 0.0
    %818 = vmatpush.msra.mxu0 0.0
    %819 = vmatpush.msra.mxu0 %v714
    %820 = vmatpush.msra.mxu0 %v713
    %821 = vmatpush.msra.mxu0 %v712
    %822 = vmatpush.msra.mxu0 %v711
    %823 = vmatpush.msra.mxu0 %v710
    %824 = vmatpush.msra.mxu0 %v709
    %825 = vmatpush.msra.mxu0 %v708
    %826 = vmatpush.msra.mxu0 %v707
    %827 = vmatmul.f32.gmra.mxu0 %v716
    %v828 = vpop.f32.mrf.mxu0
    %v829 = vadd.f32 0.0, %v828
    %830 = vmatmul.f32.gmra.mxu0 %v719
    %v831 = vpop.f32.mrf.mxu0
    %v832 = vadd.f32 0.0, %v831
    %833 = vmatmul.f32.gmra.mxu0 %v722
    %v834 = vpop.f32.mrf.mxu0
    %v835 = vadd.f32 0.0, %v834
    %836 = vmatmul.f32.gmra.mxu0 %v725
    %v837 = vpop.f32.mrf.mxu0
    %v838 = vadd.f32 0.0, %v837
    %839 = vmatmul.f32.gmra.mxu0 %v728
    %v840 = vpop.f32.mrf.mxu0
    %v841 = vadd.f32 0.0, %v840
    %842 = vmatmul.f32.gmra.mxu0 %v731
    %v843 = vpop.f32.mrf.mxu0
    %v844 = vadd.f32 0.0, %v843
    %845 = vmatmul.f32.gmra.mxu0 %v734
    %v846 = vpop.f32.mrf.mxu0
    %v847 = vadd.f32 0.0, %v846
    %848 = vmatmul.f32.gmra.mxu0 %v737
    %v849 = vpop.f32.mrf.mxu0
    %v850 = vadd.f32 0.0, %v849
    %851 = vmatmul.f32.gmra.mxu0 %v740
    %v852 = vpop.f32.mrf.mxu0
    %v853 = vadd.f32 0.0, %v852
    %854 = vmatmul.f32.gmra.mxu0 %v743
    %v855 = vpop.f32.mrf.mxu0
    %v856 = vadd.f32 0.0, %v855
    %857 = vmatmul.f32.gmra.mxu0 %v746
    %v858 = vpop.f32.mrf.mxu0
    %v859 = vadd.f32 0.0, %v858
    %860 = vmatmul.f32.gmra.mxu0 %v749
    %v861 = vpop.f32.mrf.mxu0
    %v862 = vadd.f32 0.0, %v861
    %863 = vmatmul.f32.gmra.mxu0 %v752
    %v864 = vpop.f32.mrf.mxu0
    %v865 = vadd.f32 0.0, %v864
    %866 = vmatmul.f32.gmra.mxu0 %v755
    %v867 = vpop.f32.mrf.mxu0
    %v868 = vadd.f32 0.0, %v867
    %869 = vmatmul.f32.gmra.mxu0 %v758
    %v870 = vpop.f32.mrf.mxu0
    %v871 = vadd.f32 0.0, %v870
    %872 = vmatmul.f32.gmra.mxu0 %v761
    %v873 = vpop.f32.mrf.mxu0
    %v874 = vadd.f32 0.0, %v873
    %875 = vmatmul.f32.gmra.mxu0 %v764
    %v876 = vpop.f32.mrf.mxu0
    %v877 = vadd.f32 0.0, %v876
    %878 = vmatmul.f32.gmra.mxu0 %v767
    %v879 = vpop.f32.mrf.mxu0
    %v880 = vadd.f32 0.0, %v879
    %881 = vmatmul.f32.gmra.mxu0 %v770
    %v882 = vpop.f32.mrf.mxu0
    %v883 = vadd.f32 0.0, %v882
    %884 = vmatmul.f32.gmra.mxu0 %v773
    %v885 = vpop.f32.mrf.mxu0
    %v886 = vadd.f32 0.0, %v885
    %887 = vmatmul.f32.gmra.mxu0 %v776
    %v888 = vpop.f32.mrf.mxu0
    %v889 = vadd.f32 0.0, %v888
    %890 = vmatmul.f32.gmra.mxu0 %v779
    %v891 = vpop.f32.mrf.mxu0
    %v892 = vadd.f32 0.0, %v891
    %893 = vmatmul.f32.gmra.mxu0 %v782
    %v894 = vpop.f32.mrf.mxu0
    %v895 = vadd.f32 0.0, %v894
    %896 = vmatmul.f32.gmra.mxu0 %v785
    %v897 = vpop.f32.mrf.mxu0
    %v898 = vadd.f32 0.0, %v897
    %899 = vmatmul.f32.gmra.mxu0 %v788
    %v900 = vpop.f32.mrf.mxu0
    %v901 = vadd.f32 0.0, %v900
    %902 = vmatmul.f32.gmra.mxu0 %v791
    %v903 = vpop.f32.mrf.mxu0
    %v904 = vadd.f32 0.0, %v903
    %905 = vmatmul.f32.gmra.mxu0 %v794
    %v906 = vpop.f32.mrf.mxu0
    %v907 = vadd.f32 0.0, %v906
    %908 = vmatmul.f32.gmra.mxu0 %v797
    %v909 = vpop.f32.mrf.mxu0
    %v910 = vadd.f32 0.0, %v909
    %911 = vmatmul.f32.gmra.mxu0 %v800
    %v912 = vpop.f32.mrf.mxu0
    %v913 = vadd.f32 0.0, %v912
    %914 = vmatmul.f32.gmra.mxu0 %v803
    %v915 = vpop.f32.mrf.mxu0
    %v916 = vadd.f32 0.0, %v915
    %917 = vmatmul.f32.gmra.mxu0 %v806
    %v918 = vpop.f32.mrf.mxu0
    %v919 = vadd.f32 0.0, %v918
    %920 = vmatmul.f32.gmra.mxu0 %v809
    %v921 = vpop.f32.mrf.mxu0
    %v922 = vadd.f32 0.0, %v921
    %923 = vdwg.mxu0
    %v924 = vadd.f32 %v580, %v829
    %v925 = vadd.f32 %v583, %v832
    %v926 = vadd.f32 %v586, %v835
    %v927 = vadd.f32 %v589, %v838
    %v928 = vadd.f32 %v592, %v841
    %v929 = vadd.f32 %v595, %v844
    %v930 = vadd.f32 %v598, %v847
    %v931 = vadd.f32 %v601, %v850
    %v932 = vadd.f32 %v604, %v853
    %v933 = vadd.f32 %v607, %v856
    %v934 = vadd.f32 %v610, %v859
    %v935 = vadd.f32 %v613, %v862
    %v936 = vadd.f32 %v616, %v865
    %v937 = vadd.f32 %v619, %v868
    %v938 = vadd.f32 %v622, %v871
    %v939 = vadd.f32 %v625, %v874
    %v940 = vadd.f32 %v628, %v877
    %v941 = vadd.f32 %v631, %v880
    %v942 = vadd.f32 %v634, %v883
    %v943 = vadd.f32 %v637, %v886
    %v944 = vadd.f32 %v640, %v889
    %v945 = vadd.f32 %v643, %v892
    %v946 = vadd.f32 %v646, %v895
    %v947 = vadd.f32 %v649, %v898
    %v948 = vadd.f32 %v652, %v901
    %v949 = vadd.f32 %v655, %v904
    %v950 = vadd.f32 %v658, %v907
    %v951 = vadd.f32 %v661, %v910
    %v952 = vadd.f32 %v664, %v913
    %v953 = vadd.f32 %v667, %v916
    %v954 = vadd.f32 %v670, %v919
    %v955 = vadd.f32 %v673, %v922
    %v956 = vld [vmem:[#allocation2 + $0x7] sm:$0xff]
    %v957 = vld [vmem:[#allocation2 + $0xf] sm:$0xff]
    %v958 = vld [vmem:[#allocation2 + $0x17] sm:$0xff]
    %v959 = vld [vmem:[#allocation2 + $0x1f] sm:$0xff]
    %v960 = vld [vmem:[#allocation2 + $0x27] sm:$0xff]
    %v961 = vld [vmem:[#allocation2 + $0x2f] sm:$0xff]
    %v962 = vld [vmem:[#allocation2 + $0x37] sm:$0xff]
    %v963 = vld [vmem:[#allocation2 + $0x3f] sm:$0xff]
    %v964 = vld [vmem:[#allocation2 + $0x47] sm:$0xff]
    %v965 = vld [vmem:[#allocation2 + $0x4f] sm:$0xff]
    %v966 = vld [vmem:[#allocation2 + $0x57] sm:$0xff]
    %v967 = vld [vmem:[#allocation2 + $0x5f] sm:$0xff]
    %v968 = vld [vmem:[#allocation2 + $0x67] sm:$0xff]
    %v969 = vld [vmem:[#allocation2 + $0x6f] sm:$0xff]
    %v970 = vld [vmem:[#allocation2 + $0x77] sm:$0xff]
    %v971 = vld [vmem:[#allocation2 + $0x7f] sm:$0xff]
    %v972 = vld [vmem:[#allocation2 + $0x97] sm:$0xff]
    %v973 = vld [vmem:[#allocation2 + $0x9f] sm:$0xff]
    %v974 = vld [vmem:[#allocation2 + $0xa7] sm:$0xff]
    %v975 = vld [vmem:[#allocation2 + $0xaf] sm:$0xff]
    %v976 = vld [vmem:[#allocation2 + $0xb7] sm:$0xff]
    %v977 = vld [vmem:[#allocation2 + $0xbf] sm:$0xff]
    %v978 = vld [vmem:[#allocation2 + $0xc7] sm:$0xff]
    %v979 = vld [vmem:[#allocation2 + $0xcf] sm:$0xff]
    %v980 = vld [vmem:[#allocation2 + $0xd7] sm:$0xff]
    %v981 = vld [vmem:[#allocation2 + $0xdf] sm:$0xff]
    %v982 = vld [vmem:[#allocation2 + $0xe7] sm:$0xff]
    %v983 = vld [vmem:[#allocation2 + $0xef] sm:$0xff]
    %v984 = vld [vmem:[#allocation2 + $0xf7] sm:$0xff]
    %v985 = vld [vmem:[#allocation2 + $0xff] sm:$0xff]
    %v986 = vld [vmem:[#allocation2 + $0x107] sm:$0xff]
    %v987 = vld [vmem:[#allocation2 + $0x10f] sm:$0xff]
    %v988 = vld [vmem:[#allocation4 + $0xc0] sm:$0xff]
    %v989 = vld [vmem:[#allocation4 + $0xc8] sm:$0xff]
    %v990 = vld [vmem:[#allocation4 + $0xd0] sm:$0xff]
    %v991 = vld [vmem:[#allocation4 + $0xd8] sm:$0xff]
    %v992 = vld [vmem:[#allocation4 + $0xe0] sm:$0xff]
    %v993 = vld [vmem:[#allocation4 + $0xe8] sm:$0xff]
    %v994 = vld [vmem:[#allocation4 + $0xf0] sm:$0xff]
    %v995 = vld [vmem:[#allocation4 + $0xf8] sm:$0xff]
    %v997 = vsel %vm108, %v956, 0
    %v1000 = vsel %vm108, %v957, 0
    %v1003 = vsel %vm108, %v958, 0
    %v1006 = vsel %vm108, %v959, 0
    %v1009 = vsel %vm108, %v960, 0
    %v1012 = vsel %vm108, %v961, 0
    %v1015 = vsel %vm108, %v962, 0
    %v1018 = vsel %vm108, %v963, 0
    %v1021 = vsel %vm108, %v964, 0
    %v1024 = vsel %vm108, %v965, 0
    %v1027 = vsel %vm108, %v966, 0
    %v1030 = vsel %vm108, %v967, 0
    %v1033 = vsel %vm108, %v968, 0
    %v1036 = vsel %vm108, %v969, 0
    %v1039 = vsel %vm108, %v970, 0
    %v1042 = vsel %vm108, %v971, 0
    %v1045 = vsel %vm108, %v972, 0
    %v1048 = vsel %vm108, %v973, 0
    %v1051 = vsel %vm108, %v974, 0
    %v1054 = vsel %vm108, %v975, 0
    %v1057 = vsel %vm108, %v976, 0
    %v1060 = vsel %vm108, %v977, 0
    %v1063 = vsel %vm108, %v978, 0
    %v1066 = vsel %vm108, %v979, 0
    %v1069 = vsel %vm108, %v980, 0
    %v1072 = vsel %vm108, %v981, 0
    %v1075 = vsel %vm108, %v982, 0
    %v1078 = vsel %vm108, %v983, 0
    %v1081 = vsel %vm108, %v984, 0
    %v1084 = vsel %vm108, %v985, 0
    %v1087 = vsel %vm108, %v986, 0
    %v1090 = vsel %vm108, %v987, 0
    %1092 = vmatpush.msra.mxu0 0.0
    %1093 = vmatpush.msra.mxu0 0.0
    %1094 = vmatpush.msra.mxu0 0.0
    %1095 = vmatpush.msra.mxu0 0.0
    %1096 = vmatpush.msra.mxu0 0.0
    %1097 = vmatpush.msra.mxu0 0.0
    %1098 = vmatpush.msra.mxu0 0.0
    %1099 = vmatpush.msra.mxu0 0.0
    %1100 = vmatpush.msra.mxu0 %v995
    %1101 = vmatpush.msra.mxu0 %v994
    %1102 = vmatpush.msra.mxu0 %v993
    %1103 = vmatpush.msra.mxu0 %v992
    %1104 = vmatpush.msra.mxu0 %v991
    %1105 = vmatpush.msra.mxu0 %v990
    %1106 = vmatpush.msra.mxu0 %v989
    %1107 = vmatpush.msra.mxu0 %v988
    %1108 = vmatmul.f32.gmra.mxu0 %v997
    %v1109 = vpop.f32.mrf.mxu0
    %v1110 = vadd.f32 0.0, %v1109
    %1111 = vmatmul.f32.gmra.mxu0 %v1000
    %v1112 = vpop.f32.mrf.mxu0
    %v1113 = vadd.f32 0.0, %v1112
    %1114 = vmatmul.f32.gmra.mxu0 %v1003
    %v1115 = vpop.f32.mrf.mxu0
    %v1116 = vadd.f32 0.0, %v1115
    %1117 = vmatmul.f32.gmra.mxu0 %v1006
    %v1118 = vpop.f32.mrf.mxu0
    %v1119 = vadd.f32 0.0, %v1118
    %1120 = vmatmul.f32.gmra.mxu0 %v1009
    %v1121 = vpop.f32.mrf.mxu0
    %v1122 = vadd.f32 0.0, %v1121
    %1123 = vmatmul.f32.gmra.mxu0 %v1012
    %v1124 = vpop.f32.mrf.mxu0
    %v1125 = vadd.f32 0.0, %v1124
    %1126 = vmatmul.f32.gmra.mxu0 %v1015
    %v1127 = vpop.f32.mrf.mxu0
    %v1128 = vadd.f32 0.0, %v1127
    %1129 = vmatmul.f32.gmra.mxu0 %v1018
    %v1130 = vpop.f32.mrf.mxu0
    %v1131 = vadd.f32 0.0, %v1130
    %1132 = vmatmul.f32.gmra.mxu0 %v1021
    %v1133 = vpop.f32.mrf.mxu0
    %v1134 = vadd.f32 0.0, %v1133
    %1135 = vmatmul.f32.gmra.mxu0 %v1024
    %v1136 = vpop.f32.mrf.mxu0
    %v1137 = vadd.f32 0.0, %v1136
    %1138 = vmatmul.f32.gmra.mxu0 %v1027
    %v1139 = vpop.f32.mrf.mxu0
    %v1140 = vadd.f32 0.0, %v1139
    %1141 = vmatmul.f32.gmra.mxu0 %v1030
    %v1142 = vpop.f32.mrf.mxu0
    %v1143 = vadd.f32 0.0, %v1142
    %1144 = vmatmul.f32.gmra.mxu0 %v1033
    %v1145 = vpop.f32.mrf.mxu0
    %v1146 = vadd.f32 0.0, %v1145
    %1147 = vmatmul.f32.gmra.mxu0 %v1036
    %v1148 = vpop.f32.mrf.mxu0
    %v1149 = vadd.f32 0.0, %v1148
    %1150 = vmatmul.f32.gmra.mxu0 %v1039
    %v1151 = vpop.f32.mrf.mxu0
    %v1152 = vadd.f32 0.0, %v1151
    %1153 = vmatmul.f32.gmra.mxu0 %v1042
    %v1154 = vpop.f32.mrf.mxu0
    %v1155 = vadd.f32 0.0, %v1154
    %1156 = vmatmul.f32.gmra.mxu0 %v1045
    %v1157 = vpop.f32.mrf.mxu0
    %v1158 = vadd.f32 0.0, %v1157
    %1159 = vmatmul.f32.gmra.mxu0 %v1048
    %v1160 = vpop.f32.mrf.mxu0
    %v1161 = vadd.f32 0.0, %v1160
    %1162 = vmatmul.f32.gmra.mxu0 %v1051
    %v1163 = vpop.f32.mrf.mxu0
    %v1164 = vadd.f32 0.0, %v1163
    %1165 = vmatmul.f32.gmra.mxu0 %v1054
    %v1166 = vpop.f32.mrf.mxu0
    %v1167 = vadd.f32 0.0, %v1166
    %1168 = vmatmul.f32.gmra.mxu0 %v1057
    %v1169 = vpop.f32.mrf.mxu0
    %v1170 = vadd.f32 0.0, %v1169
    %1171 = vmatmul.f32.gmra.mxu0 %v1060
    %v1172 = vpop.f32.mrf.mxu0
    %v1173 = vadd.f32 0.0, %v1172
    %1174 = vmatmul.f32.gmra.mxu0 %v1063
    %v1175 = vpop.f32.mrf.mxu0
    %v1176 = vadd.f32 0.0, %v1175
    %1177 = vmatmul.f32.gmra.mxu0 %v1066
    %v1178 = vpop.f32.mrf.mxu0
    %v1179 = vadd.f32 0.0, %v1178
    %1180 = vmatmul.f32.gmra.mxu0 %v1069
    %v1181 = vpop.f32.mrf.mxu0
    %v1182 = vadd.f32 0.0, %v1181
    %1183 = vmatmul.f32.gmra.mxu0 %v1072
    %v1184 = vpop.f32.mrf.mxu0
    %v1185 = vadd.f32 0.0, %v1184
    %1186 = vmatmul.f32.gmra.mxu0 %v1075
    %v1187 = vpop.f32.mrf.mxu0
    %v1188 = vadd.f32 0.0, %v1187
    %1189 = vmatmul.f32.gmra.mxu0 %v1078
    %v1190 = vpop.f32.mrf.mxu0
    %v1191 = vadd.f32 0.0, %v1190
    %1192 = vmatmul.f32.gmra.mxu0 %v1081
    %v1193 = vpop.f32.mrf.mxu0
    %v1194 = vadd.f32 0.0, %v1193
    %1195 = vmatmul.f32.gmra.mxu0 %v1084
    %v1196 = vpop.f32.mrf.mxu0
    %v1197 = vadd.f32 0.0, %v1196
    %1198 = vmatmul.f32.gmra.mxu0 %v1087
    %v1199 = vpop.f32.mrf.mxu0
    %v1200 = vadd.f32 0.0, %v1199
    %1201 = vmatmul.f32.gmra.mxu0 %v1090
    %v1202 = vpop.f32.mrf.mxu0
    %v1203 = vadd.f32 0.0, %v1202
    %1204 = vdwg.mxu0
    %v1205 = vadd.f32 %v924, %v1110
    %v1206 = vadd.f32 %v925, %v1113
    %v1207 = vadd.f32 %v926, %v1116
    %v1208 = vadd.f32 %v927, %v1119
    %v1209 = vadd.f32 %v928, %v1122
    %v1210 = vadd.f32 %v929, %v1125
    %v1211 = vadd.f32 %v930, %v1128
    %v1212 = vadd.f32 %v931, %v1131
    %v1213 = vadd.f32 %v932, %v1134
    %v1214 = vadd.f32 %v933, %v1137
    %v1215 = vadd.f32 %v934, %v1140
    %v1216 = vadd.f32 %v935, %v1143
    %v1217 = vadd.f32 %v936, %v1146
    %v1218 = vadd.f32 %v937, %v1149
    %v1219 = vadd.f32 %v938, %v1152
    %v1220 = vadd.f32 %v939, %v1155
    %v1221 = vadd.f32 %v940, %v1158
    %v1222 = vadd.f32 %v941, %v1161
    %v1223 = vadd.f32 %v942, %v1164
    %v1224 = vadd.f32 %v943, %v1167
    %v1225 = vadd.f32 %v944, %v1170
    %v1226 = vadd.f32 %v945, %v1173
    %v1227 = vadd.f32 %v946, %v1176
    %v1228 = vadd.f32 %v947, %v1179
    %v1229 = vadd.f32 %v948, %v1182
    %v1230 = vadd.f32 %v949, %v1185
    %v1231 = vadd.f32 %v950, %v1188
    %v1232 = vadd.f32 %v951, %v1191
    %v1233 = vadd.f32 %v952, %v1194
    %v1234 = vadd.f32 %v953, %v1197
    %v1235 = vadd.f32 %v954, %v1200
    %v1236 = vadd.f32 %v955, %v1203
    %v1237 = vld [vmem:[#allocation2 + $0x8] sm:$0xff]
    %v1238 = vld [vmem:[#allocation2 + $0x10] sm:$0xff]
    %v1239 = vld [vmem:[#allocation2 + $0x18] sm:$0xff]
    %v1240 = vld [vmem:[#allocation2 + $0x20] sm:$0xff]
    %v1241 = vld [vmem:[#allocation2 + $0x28] sm:$0xff]
    %v1242 = vld [vmem:[#allocation2 + $0x30] sm:$0xff]
    %v1243 = vld [vmem:[#allocation2 + $0x38] sm:$0xff]
    %v1244 = vld [vmem:[#allocation2 + $0x40] sm:$0xff]
    %v1245 = vld [vmem:[#allocation2 + $0x48] sm:$0xff]
    %v1246 = vld [vmem:[#allocation2 + $0x50] sm:$0xff]
    %v1247 = vld [vmem:[#allocation2 + $0x58] sm:$0xff]
    %v1248 = vld [vmem:[#allocation2 + $0x60] sm:$0xff]
    %v1249 = vld [vmem:[#allocation2 + $0x68] sm:$0xff]
    %v1250 = vld [vmem:[#allocation2 + $0x70] sm:$0xff]
    %v1251 = vld [vmem:[#allocation2 + $0x78] sm:$0xff]
    %v1252 = vld [vmem:[#allocation2 + $0x80] sm:$0xff]
    %v1253 = vld [vmem:[#allocation2 + $0x98] sm:$0xff]
    %v1254 = vld [vmem:[#allocation2 + $0xa0] sm:$0xff]
    %v1255 = vld [vmem:[#allocation2 + $0xa8] sm:$0xff]
    %v1256 = vld [vmem:[#allocation2 + $0xb0] sm:$0xff]
    %v1257 = vld [vmem:[#allocation2 + $0xb8] sm:$0xff]
    %v1258 = vld [vmem:[#allocation2 + $0xc0] sm:$0xff]
    %v1259 = vld [vmem:[#allocation2 + $0xc8] sm:$0xff]
    %v1260 = vld [vmem:[#allocation2 + $0xd0] sm:$0xff]
    %v1261 = vld [vmem:[#allocation2 + $0xd8] sm:$0xff]
    %v1262 = vld [vmem:[#allocation2 + $0xe0] sm:$0xff]
    %v1263 = vld [vmem:[#allocation2 + $0xe8] sm:$0xff]
    %v1264 = vld [vmem:[#allocation2 + $0xf0] sm:$0xff]
    %v1265 = vld [vmem:[#allocation2 + $0xf8] sm:$0xff]
    %v1266 = vld [vmem:[#allocation2 + $0x100] sm:$0xff]
    %v1267 = vld [vmem:[#allocation2 + $0x108] sm:$0xff]
    %v1268 = vld [vmem:[#allocation2 + $0x110] sm:$0xff]
    %v1269 = vld [vmem:[#allocation4 + $0x100] sm:$0xff]
    %v1270 = vld [vmem:[#allocation4 + $0x108] sm:$0xff]
    %v1271 = vld [vmem:[#allocation4 + $0x110] sm:$0xff]
    %v1272 = vld [vmem:[#allocation4 + $0x118] sm:$0xff]
    %v1273 = vld [vmem:[#allocation4 + $0x120] sm:$0xff]
    %v1274 = vld [vmem:[#allocation4 + $0x128] sm:$0xff]
    %v1275 = vld [vmem:[#allocation4 + $0x130] sm:$0xff]
    %v1276 = vld [vmem:[#allocation4 + $0x138] sm:$0xff]
    %v1278 = vsel %vm108, %v1237, 0
    %v1281 = vsel %vm108, %v1238, 0
    %v1284 = vsel %vm108, %v1239, 0
    %v1287 = vsel %vm108, %v1240, 0
    %v1290 = vsel %vm108, %v1241, 0
    %v1293 = vsel %vm108, %v1242, 0
    %v1296 = vsel %vm108, %v1243, 0
    %v1299 = vsel %vm108, %v1244, 0
    %v1302 = vsel %vm108, %v1245, 0
    %v1305 = vsel %vm108, %v1246, 0
    %v1308 = vsel %vm108, %v1247, 0
    %v1311 = vsel %vm108, %v1248, 0
    %v1314 = vsel %vm108, %v1249, 0
    %v1317 = vsel %vm108, %v1250, 0
    %v1320 = vsel %vm108, %v1251, 0
    %v1323 = vsel %vm108, %v1252, 0
    %v1326 = vsel %vm108, %v1253, 0
    %v1329 = vsel %vm108, %v1254, 0
    %v1332 = vsel %vm108, %v1255, 0
    %v1335 = vsel %vm108, %v1256, 0
    %v1338 = vsel %vm108, %v1257, 0
    %v1341 = vsel %vm108, %v1258, 0
    %v1344 = vsel %vm108, %v1259, 0
    %v1347 = vsel %vm108, %v1260, 0
    %v1350 = vsel %vm108, %v1261, 0
    %v1353 = vsel %vm108, %v1262, 0
    %v1356 = vsel %vm108, %v1263, 0
    %v1359 = vsel %vm108, %v1264, 0
    %v1362 = vsel %vm108, %v1265, 0
    %v1365 = vsel %vm108, %v1266, 0
    %v1368 = vsel %vm108, %v1267, 0
    %v1371 = vsel %vm108, %v1268, 0
    %1373 = vmatpush.msra.mxu0 0.0
    %1374 = vmatpush.msra.mxu0 0.0
    %1375 = vmatpush.msra.mxu0 0.0
    %1376 = vmatpush.msra.mxu0 0.0
    %1377 = vmatpush.msra.mxu0 0.0
    %1378 = vmatpush.msra.mxu0 0.0
    %1379 = vmatpush.msra.mxu0 0.0
    %1380 = vmatpush.msra.mxu0 0.0
    %1381 = vmatpush.msra.mxu0 %v1276
    %1382 = vmatpush.msra.mxu0 %v1275
    %1383 = vmatpush.msra.mxu0 %v1274
    %1384 = vmatpush.msra.mxu0 %v1273
    %1385 = vmatpush.msra.mxu0 %v1272
    %1386 = vmatpush.msra.mxu0 %v1271
    %1387 = vmatpush.msra.mxu0 %v1270
    %1388 = vmatpush.msra.mxu0 %v1269
    %1389 = vmatmul.f32.gmra.mxu0 %v1278
    %v1390 = vpop.f32.mrf.mxu0
    %v1391 = vadd.f32 0.0, %v1390
    %1392 = vmatmul.f32.gmra.mxu0 %v1281
    %v1393 = vpop.f32.mrf.mxu0
    %v1394 = vadd.f32 0.0, %v1393
    %1395 = vmatmul.f32.gmra.mxu0 %v1284
    %v1396 = vpop.f32.mrf.mxu0
    %v1397 = vadd.f32 0.0, %v1396
    %1398 = vmatmul.f32.gmra.mxu0 %v1287
    %v1399 = vpop.f32.mrf.mxu0
    %v1400 = vadd.f32 0.0, %v1399
    %1401 = vmatmul.f32.gmra.mxu0 %v1290
    %v1402 = vpop.f32.mrf.mxu0
    %v1403 = vadd.f32 0.0, %v1402
    %1404 = vmatmul.f32.gmra.mxu0 %v1293
    %v1405 = vpop.f32.mrf.mxu0
    %v1406 = vadd.f32 0.0, %v1405
    %1407 = vmatmul.f32.gmra.mxu0 %v1296
    %v1408 = vpop.f32.mrf.mxu0
    %v1409 = vadd.f32 0.0, %v1408
    %1410 = vmatmul.f32.gmra.mxu0 %v1299
    %v1411 = vpop.f32.mrf.mxu0
    %v1412 = vadd.f32 0.0, %v1411
    %1413 = vmatmul.f32.gmra.mxu0 %v1302
    %v1414 = vpop.f32.mrf.mxu0
    %v1415 = vadd.f32 0.0, %v1414
    %1416 = vmatmul.f32.gmra.mxu0 %v1305
    %v1417 = vpop.f32.mrf.mxu0
    %v1418 = vadd.f32 0.0, %v1417
    %1419 = vmatmul.f32.gmra.mxu0 %v1308
    %v1420 = vpop.f32.mrf.mxu0
    %v1421 = vadd.f32 0.0, %v1420
    %1422 = vmatmul.f32.gmra.mxu0 %v1311
    %v1423 = vpop.f32.mrf.mxu0
    %v1424 = vadd.f32 0.0, %v1423
    %1425 = vmatmul.f32.gmra.mxu0 %v1314
    %v1426 = vpop.f32.mrf.mxu0
    %v1427 = vadd.f32 0.0, %v1426
    %1428 = vmatmul.f32.gmra.mxu0 %v1317
    %v1429 = vpop.f32.mrf.mxu0
    %v1430 = vadd.f32 0.0, %v1429
    %1431 = vmatmul.f32.gmra.mxu0 %v1320
    %v1432 = vpop.f32.mrf.mxu0
    %v1433 = vadd.f32 0.0, %v1432
    %1434 = vmatmul.f32.gmra.mxu0 %v1323
    %v1435 = vpop.f32.mrf.mxu0
    %v1436 = vadd.f32 0.0, %v1435
    %1437 = vmatmul.f32.gmra.mxu0 %v1326
    %v1438 = vpop.f32.mrf.mxu0
    %v1439 = vadd.f32 0.0, %v1438
    %1440 = vmatmul.f32.gmra.mxu0 %v1329
    %v1441 = vpop.f32.mrf.mxu0
    %v1442 = vadd.f32 0.0, %v1441
    %1443 = vmatmul.f32.gmra.mxu0 %v1332
    %v1444 = vpop.f32.mrf.mxu0
    %v1445 = vadd.f32 0.0, %v1444
    %1446 = vmatmul.f32.gmra.mxu0 %v1335
    %v1447 = vpop.f32.mrf.mxu0
    %v1448 = vadd.f32 0.0, %v1447
    %1449 = vmatmul.f32.gmra.mxu0 %v1338
    %v1450 = vpop.f32.mrf.mxu0
    %v1451 = vadd.f32 0.0, %v1450
    %1452 = vmatmul.f32.gmra.mxu0 %v1341
    %v1453 = vpop.f32.mrf.mxu0
    %v1454 = vadd.f32 0.0, %v1453
    %1455 = vmatmul.f32.gmra.mxu0 %v1344
    %v1456 = vpop.f32.mrf.mxu0
    %v1457 = vadd.f32 0.0, %v1456
    %1458 = vmatmul.f32.gmra.mxu0 %v1347
    %v1459 = vpop.f32.mrf.mxu0
    %v1460 = vadd.f32 0.0, %v1459
    %1461 = vmatmul.f32.gmra.mxu0 %v1350
    %v1462 = vpop.f32.mrf.mxu0
    %v1463 = vadd.f32 0.0, %v1462
    %1464 = vmatmul.f32.gmra.mxu0 %v1353
    %v1465 = vpop.f32.mrf.mxu0
    %v1466 = vadd.f32 0.0, %v1465
    %1467 = vmatmul.f32.gmra.mxu0 %v1356
    %v1468 = vpop.f32.mrf.mxu0
    %v1469 = vadd.f32 0.0, %v1468
    %1470 = vmatmul.f32.gmra.mxu0 %v1359
    %v1471 = vpop.f32.mrf.mxu0
    %v1472 = vadd.f32 0.0, %v1471
    %1473 = vmatmul.f32.gmra.mxu0 %v1362
    %v1474 = vpop.f32.mrf.mxu0
    %v1475 = vadd.f32 0.0, %v1474
    %1476 = vmatmul.f32.gmra.mxu0 %v1365
    %v1477 = vpop.f32.mrf.mxu0
    %v1478 = vadd.f32 0.0, %v1477
    %1479 = vmatmul.f32.gmra.mxu0 %v1368
    %v1480 = vpop.f32.mrf.mxu0
    %v1481 = vadd.f32 0.0, %v1480
    %1482 = vmatmul.f32.gmra.mxu0 %v1371
    %v1483 = vpop.f32.mrf.mxu0
    %v1484 = vadd.f32 0.0, %v1483
    %1485 = vdwg.mxu0
    %v1486 = vadd.f32 %v1205, %v1391
    %v1487 = vadd.f32 %v1206, %v1394
    %v1488 = vadd.f32 %v1207, %v1397
    %v1489 = vadd.f32 %v1208, %v1400
    %v1490 = vadd.f32 %v1209, %v1403
    %v1491 = vadd.f32 %v1210, %v1406
    %v1492 = vadd.f32 %v1211, %v1409
    %v1493 = vadd.f32 %v1212, %v1412
    %v1494 = vadd.f32 %v1213, %v1415
    %v1495 = vadd.f32 %v1214, %v1418
    %v1496 = vadd.f32 %v1215, %v1421
    %v1497 = vadd.f32 %v1216, %v1424
    %v1498 = vadd.f32 %v1217, %v1427
    %v1499 = vadd.f32 %v1218, %v1430
    %v1500 = vadd.f32 %v1219, %v1433
    %v1501 = vadd.f32 %v1220, %v1436
    %v1502 = vadd.f32 %v1221, %v1439
    %v1503 = vadd.f32 %v1222, %v1442
    %v1504 = vadd.f32 %v1223, %v1445
    %v1505 = vadd.f32 %v1224, %v1448
    %v1506 = vadd.f32 %v1225, %v1451
    %v1507 = vadd.f32 %v1226, %v1454
    %v1508 = vadd.f32 %v1227, %v1457
    %v1509 = vadd.f32 %v1228, %v1460
    %v1510 = vadd.f32 %v1229, %v1463
    %v1511 = vadd.f32 %v1230, %v1466
    %v1512 = vadd.f32 %v1231, %v1469
    %v1513 = vadd.f32 %v1232, %v1472
    %v1514 = vadd.f32 %v1233, %v1475
    %v1515 = vadd.f32 %v1234, %v1478
    %v1516 = vadd.f32 %v1235, %v1481
    %v1517 = vadd.f32 %v1236, %v1484
    %v1518 = vld [vmem:[#allocation2 + $0x9] sm:$0xff]
    %v1519 = vld [vmem:[#allocation2 + $0x11] sm:$0xff]
    %v1520 = vld [vmem:[#allocation2 + $0x19] sm:$0xff]
    %v1521 = vld [vmem:[#allocation2 + $0x21] sm:$0xff]
    %v1522 = vld [vmem:[#allocation2 + $0x29] sm:$0xff]
    %v1523 = vld [vmem:[#allocation2 + $0x31] sm:$0xff]
    %v1524 = vld [vmem:[#allocation2 + $0x39] sm:$0xff]
    %v1525 = vld [vmem:[#allocation2 + $0x41] sm:$0xff]
    %v1526 = vld [vmem:[#allocation2 + $0x49] sm:$0xff]
    %v1527 = vld [vmem:[#allocation2 + $0x51] sm:$0xff]
    %v1528 = vld [vmem:[#allocation2 + $0x59] sm:$0xff]
    %v1529 = vld [vmem:[#allocation2 + $0x61] sm:$0xff]
    %v1530 = vld [vmem:[#allocation2 + $0x69] sm:$0xff]
    %v1531 = vld [vmem:[#allocation2 + $0x71] sm:$0xff]
    %v1532 = vld [vmem:[#allocation2 + $0x79] sm:$0xff]
    %v1533 = vld [vmem:[#allocation2 + $0x81] sm:$0xff]
    %v1534 = vld [vmem:[#allocation2 + $0x99] sm:$0xff]
    %v1535 = vld [vmem:[#allocation2 + $0xa1] sm:$0xff]
    %v1536 = vld [vmem:[#allocation2 + $0xa9] sm:$0xff]
    %v1537 = vld [vmem:[#allocation2 + $0xb1] sm:$0xff]
    %v1538 = vld [vmem:[#allocation2 + $0xb9] sm:$0xff]
    %v1539 = vld [vmem:[#allocation2 + $0xc1] sm:$0xff]
    %v1540 = vld [vmem:[#allocation2 + $0xc9] sm:$0xff]
    %v1541 = vld [vmem:[#allocation2 + $0xd1] sm:$0xff]
    %v1542 = vld [vmem:[#allocation2 + $0xd9] sm:$0xff]
    %v1543 = vld [vmem:[#allocation2 + $0xe1] sm:$0xff]
    %v1544 = vld [vmem:[#allocation2 + $0xe9] sm:$0xff]
    %v1545 = vld [vmem:[#allocation2 + $0xf1] sm:$0xff]
    %v1546 = vld [vmem:[#allocation2 + $0xf9] sm:$0xff]
    %v1547 = vld [vmem:[#allocation2 + $0x101] sm:$0xff]
    %v1548 = vld [vmem:[#allocation2 + $0x109] sm:$0xff]
    %v1549 = vld [vmem:[#allocation2 + $0x111] sm:$0xff]
    %v1550 = vld [vmem:[#allocation4 + $0x140] sm:$0xff]
    %v1551 = vld [vmem:[#allocation4 + $0x148] sm:$0xff]
    %v1552 = vld [vmem:[#allocation4 + $0x150] sm:$0xff]
    %v1553 = vld [vmem:[#allocation4 + $0x158] sm:$0xff]
    %v1554 = vld [vmem:[#allocation4 + $0x160] sm:$0xff]
    %v1555 = vld [vmem:[#allocation4 + $0x168] sm:$0xff]
    %v1556 = vld [vmem:[#allocation4 + $0x170] sm:$0xff]
    %v1557 = vld [vmem:[#allocation4 + $0x178] sm:$0xff]
    %v1559 = vsel %vm108, %v1518, 0
    %v1562 = vsel %vm108, %v1519, 0
    %v1565 = vsel %vm108, %v1520, 0
    %v1568 = vsel %vm108, %v1521, 0
    %v1571 = vsel %vm108, %v1522, 0
    %v1574 = vsel %vm108, %v1523, 0
    %v1577 = vsel %vm108, %v1524, 0
    %v1580 = vsel %vm108, %v1525, 0
    %v1583 = vsel %vm108, %v1526, 0
    %v1586 = vsel %vm108, %v1527, 0
    %v1589 = vsel %vm108, %v1528, 0
    %v1592 = vsel %vm108, %v1529, 0
    %v1595 = vsel %vm108, %v1530, 0
    %v1598 = vsel %vm108, %v1531, 0
    %v1601 = vsel %vm108, %v1532, 0
    %v1604 = vsel %vm108, %v1533, 0
    %v1607 = vsel %vm108, %v1534, 0
    %v1610 = vsel %vm108, %v1535, 0
    %v1613 = vsel %vm108, %v1536, 0
    %v1616 = vsel %vm108, %v1537, 0
    %v1619 = vsel %vm108, %v1538, 0
    %v1622 = vsel %vm108, %v1539, 0
    %v1625 = vsel %vm108, %v1540, 0
    %v1628 = vsel %vm108, %v1541, 0
    %v1631 = vsel %vm108, %v1542, 0
    %v1634 = vsel %vm108, %v1543, 0
    %v1637 = vsel %vm108, %v1544, 0
    %v1640 = vsel %vm108, %v1545, 0
    %v1643 = vsel %vm108, %v1546, 0
    %v1646 = vsel %vm108, %v1547, 0
    %v1649 = vsel %vm108, %v1548, 0
    %v1652 = vsel %vm108, %v1549, 0
    %1654 = vmatpush.msra.mxu0 0.0
    %1655 = vmatpush.msra.mxu0 0.0
    %1656 = vmatpush.msra.mxu0 0.0
    %1657 = vmatpush.msra.mxu0 0.0
    %1658 = vmatpush.msra.mxu0 0.0
    %1659 = vmatpush.msra.mxu0 0.0
    %1660 = vmatpush.msra.mxu0 0.0
    %1661 = vmatpush.msra.mxu0 0.0
    %1662 = vmatpush.msra.mxu0 %v1557
    %1663 = vmatpush.msra.mxu0 %v1556
    %1664 = vmatpush.msra.mxu0 %v1555
    %1665 = vmatpush.msra.mxu0 %v1554
    %1666 = vmatpush.msra.mxu0 %v1553
    %1667 = vmatpush.msra.mxu0 %v1552
    %1668 = vmatpush.msra.mxu0 %v1551
    %1669 = vmatpush.msra.mxu0 %v1550
    %1670 = vmatmul.f32.gmra.mxu0 %v1559
    %v1671 = vpop.f32.mrf.mxu0
    %v1672 = vadd.f32 0.0, %v1671
    %1673 = vmatmul.f32.gmra.mxu0 %v1562
    %v1674 = vpop.f32.mrf.mxu0
    %v1675 = vadd.f32 0.0, %v1674
    %1676 = vmatmul.f32.gmra.mxu0 %v1565
    %v1677 = vpop.f32.mrf.mxu0
    %v1678 = vadd.f32 0.0, %v1677
    %1679 = vmatmul.f32.gmra.mxu0 %v1568
    %v1680 = vpop.f32.mrf.mxu0
    %v1681 = vadd.f32 0.0, %v1680
    %1682 = vmatmul.f32.gmra.mxu0 %v1571
    %v1683 = vpop.f32.mrf.mxu0
    %v1684 = vadd.f32 0.0, %v1683
    %1685 = vmatmul.f32.gmra.mxu0 %v1574
    %v1686 = vpop.f32.mrf.mxu0
    %v1687 = vadd.f32 0.0, %v1686
    %1688 = vmatmul.f32.gmra.mxu0 %v1577
    %v1689 = vpop.f32.mrf.mxu0
    %v1690 = vadd.f32 0.0, %v1689
    %1691 = vmatmul.f32.gmra.mxu0 %v1580
    %v1692 = vpop.f32.mrf.mxu0
    %v1693 = vadd.f32 0.0, %v1692
    %1694 = vmatmul.f32.gmra.mxu0 %v1583
    %v1695 = vpop.f32.mrf.mxu0
    %v1696 = vadd.f32 0.0, %v1695
    %1697 = vmatmul.f32.gmra.mxu0 %v1586
    %v1698 = vpop.f32.mrf.mxu0
    %v1699 = vadd.f32 0.0, %v1698
    %1700 = vmatmul.f32.gmra.mxu0 %v1589
    %v1701 = vpop.f32.mrf.mxu0
    %v1702 = vadd.f32 0.0, %v1701
    %1703 = vmatmul.f32.gmra.mxu0 %v1592
    %v1704 = vpop.f32.mrf.mxu0
    %v1705 = vadd.f32 0.0, %v1704
    %1706 = vmatmul.f32.gmra.mxu0 %v1595
    %v1707 = vpop.f32.mrf.mxu0
    %v1708 = vadd.f32 0.0, %v1707
    %1709 = vmatmul.f32.gmra.mxu0 %v1598
    %v1710 = vpop.f32.mrf.mxu0
    %v1711 = vadd.f32 0.0, %v1710
    %1712 = vmatmul.f32.gmra.mxu0 %v1601
    %v1713 = vpop.f32.mrf.mxu0
    %v1714 = vadd.f32 0.0, %v1713
    %1715 = vmatmul.f32.gmra.mxu0 %v1604
    %v1716 = vpop.f32.mrf.mxu0
    %v1717 = vadd.f32 0.0, %v1716
    %1718 = vmatmul.f32.gmra.mxu0 %v1607
    %v1719 = vpop.f32.mrf.mxu0
    %v1720 = vadd.f32 0.0, %v1719
    %1721 = vmatmul.f32.gmra.mxu0 %v1610
    %v1722 = vpop.f32.mrf.mxu0
    %v1723 = vadd.f32 0.0, %v1722
    %1724 = vmatmul.f32.gmra.mxu0 %v1613
    %v1725 = vpop.f32.mrf.mxu0
    %v1726 = vadd.f32 0.0, %v1725
    %1727 = vmatmul.f32.gmra.mxu0 %v1616
    %v1728 = vpop.f32.mrf.mxu0
    %v1729 = vadd.f32 0.0, %v1728
    %1730 = vmatmul.f32.gmra.mxu0 %v1619
    %v1731 = vpop.f32.mrf.mxu0
    %v1732 = vadd.f32 0.0, %v1731
    %1733 = vmatmul.f32.gmra.mxu0 %v1622
    %v1734 = vpop.f32.mrf.mxu0
    %v1735 = vadd.f32 0.0, %v1734
    %1736 = vmatmul.f32.gmra.mxu0 %v1625
    %v1737 = vpop.f32.mrf.mxu0
    %v1738 = vadd.f32 0.0, %v1737
    %1739 = vmatmul.f32.gmra.mxu0 %v1628
    %v1740 = vpop.f32.mrf.mxu0
    %v1741 = vadd.f32 0.0, %v1740
    %1742 = vmatmul.f32.gmra.mxu0 %v1631
    %v1743 = vpop.f32.mrf.mxu0
    %v1744 = vadd.f32 0.0, %v1743
    %1745 = vmatmul.f32.gmra.mxu0 %v1634
    %v1746 = vpop.f32.mrf.mxu0
    %v1747 = vadd.f32 0.0, %v1746
    %1748 = vmatmul.f32.gmra.mxu0 %v1637
    %v1749 = vpop.f32.mrf.mxu0
    %v1750 = vadd.f32 0.0, %v1749
    %1751 = vmatmul.f32.gmra.mxu0 %v1640
    %v1752 = vpop.f32.mrf.mxu0
    %v1753 = vadd.f32 0.0, %v1752
    %1754 = vmatmul.f32.gmra.mxu0 %v1643
    %v1755 = vpop.f32.mrf.mxu0
    %v1756 = vadd.f32 0.0, %v1755
    %1757 = vmatmul.f32.gmra.mxu0 %v1646
    %v1758 = vpop.f32.mrf.mxu0
    %v1759 = vadd.f32 0.0, %v1758
    %1760 = vmatmul.f32.gmra.mxu0 %v1649
    %v1761 = vpop.f32.mrf.mxu0
    %v1762 = vadd.f32 0.0, %v1761
    %1763 = vmatmul.f32.gmra.mxu0 %v1652
    %v1764 = vpop.f32.mrf.mxu0
    %v1765 = vadd.f32 0.0, %v1764
    %1766 = vdwg.mxu0
    %v1767 = vadd.f32 %v1486, %v1672
    %v1768 = vadd.f32 %v1487, %v1675
    %v1769 = vadd.f32 %v1488, %v1678
    %v1770 = vadd.f32 %v1489, %v1681
    %v1771 = vadd.f32 %v1490, %v1684
    %v1772 = vadd.f32 %v1491, %v1687
    %v1773 = vadd.f32 %v1492, %v1690
    %v1774 = vadd.f32 %v1493, %v1693
    %v1775 = vadd.f32 %v1494, %v1696
    %v1776 = vadd.f32 %v1495, %v1699
    %v1777 = vadd.f32 %v1496, %v1702
    %v1778 = vadd.f32 %v1497, %v1705
    %v1779 = vadd.f32 %v1498, %v1708
    %v1780 = vadd.f32 %v1499, %v1711
    %v1781 = vadd.f32 %v1500, %v1714
    %v1782 = vadd.f32 %v1501, %v1717
    %v1783 = vadd.f32 %v1502, %v1720
    %v1784 = vadd.f32 %v1503, %v1723
    %v1785 = vadd.f32 %v1504, %v1726
    %v1786 = vadd.f32 %v1505, %v1729
    %v1787 = vadd.f32 %v1506, %v1732
    %v1788 = vadd.f32 %v1507, %v1735
    %v1789 = vadd.f32 %v1508, %v1738
    %v1790 = vadd.f32 %v1509, %v1741
    %v1791 = vadd.f32 %v1510, %v1744
    %v1792 = vadd.f32 %v1511, %v1747
    %v1793 = vadd.f32 %v1512, %v1750
    %v1794 = vadd.f32 %v1513, %v1753
    %v1795 = vadd.f32 %v1514, %v1756
    %v1796 = vadd.f32 %v1515, %v1759
    %v1797 = vadd.f32 %v1516, %v1762
    %v1798 = vadd.f32 %v1517, %v1765
    %v1799 = vld [vmem:[#allocation2 + $0xa] sm:$0xff]
    %v1800 = vld [vmem:[#allocation2 + $0x12] sm:$0xff]
    %v1801 = vld [vmem:[#allocation2 + $0x1a] sm:$0xff]
    %v1802 = vld [vmem:[#allocation2 + $0x22] sm:$0xff]
    %v1803 = vld [vmem:[#allocation2 + $0x2a] sm:$0xff]
    %v1804 = vld [vmem:[#allocation2 + $0x32] sm:$0xff]
    %v1805 = vld [vmem:[#allocation2 + $0x3a] sm:$0xff]
    %v1806 = vld [vmem:[#allocation2 + $0x42] sm:$0xff]
    %v1807 = vld [vmem:[#allocation2 + $0x4a] sm:$0xff]
    %v1808 = vld [vmem:[#allocation2 + $0x52] sm:$0xff]
    %v1809 = vld [vmem:[#allocation2 + $0x5a] sm:$0xff]
    %v1810 = vld [vmem:[#allocation2 + $0x62] sm:$0xff]
    %v1811 = vld [vmem:[#allocation2 + $0x6a] sm:$0xff]
    %v1812 = vld [vmem:[#allocation2 + $0x72] sm:$0xff]
    %v1813 = vld [vmem:[#allocation2 + $0x7a] sm:$0xff]
    %v1814 = vld [vmem:[#allocation2 + $0x82] sm:$0xff]
    %v1815 = vld [vmem:[#allocation2 + $0x9a] sm:$0xff]
    %v1816 = vld [vmem:[#allocation2 + $0xa2] sm:$0xff]
    %v1817 = vld [vmem:[#allocation2 + $0xaa] sm:$0xff]
    %v1818 = vld [vmem:[#allocation2 + $0xb2] sm:$0xff]
    %v1819 = vld [vmem:[#allocation2 + $0xba] sm:$0xff]
    %v1820 = vld [vmem:[#allocation2 + $0xc2] sm:$0xff]
    %v1821 = vld [vmem:[#allocation2 + $0xca] sm:$0xff]
    %v1822 = vld [vmem:[#allocation2 + $0xd2] sm:$0xff]
    %v1823 = vld [vmem:[#allocation2 + $0xda] sm:$0xff]
    %v1824 = vld [vmem:[#allocation2 + $0xe2] sm:$0xff]
    %v1825 = vld [vmem:[#allocation2 + $0xea] sm:$0xff]
    %v1826 = vld [vmem:[#allocation2 + $0xf2] sm:$0xff]
    %v1827 = vld [vmem:[#allocation2 + $0xfa] sm:$0xff]
    %v1828 = vld [vmem:[#allocation2 + $0x102] sm:$0xff]
    %v1829 = vld [vmem:[#allocation2 + $0x10a] sm:$0xff]
    %v1830 = vld [vmem:[#allocation2 + $0x112] sm:$0xff]
    %v1831 = vld [vmem:[#allocation4 + $0x180] sm:$0xff]
    %v1832 = vld [vmem:[#allocation4 + $0x188] sm:$0xff]
    %v1833 = vld [vmem:[#allocation4 + $0x190] sm:$0xff]
    %v1834 = vld [vmem:[#allocation4 + $0x198] sm:$0xff]
    %v1835 = vld [vmem:[#allocation4 + $0x1a0] sm:$0xff]
    %v1836 = vld [vmem:[#allocation4 + $0x1a8] sm:$0xff]
    %v1837 = vld [vmem:[#allocation4 + $0x1b0] sm:$0xff]
    %v1838 = vld [vmem:[#allocation4 + $0x1b8] sm:$0xff]
    %v1840 = vsel %vm108, %v1799, 0
    %v1843 = vsel %vm108, %v1800, 0
    %v1846 = vsel %vm108, %v1801, 0
    %v1849 = vsel %vm108, %v1802, 0
    %v1852 = vsel %vm108, %v1803, 0
    %v1855 = vsel %vm108, %v1804, 0
    %v1858 = vsel %vm108, %v1805, 0
    %v1861 = vsel %vm108, %v1806, 0
    %v1864 = vsel %vm108, %v1807, 0
    %v1867 = vsel %vm108, %v1808, 0
    %v1870 = vsel %vm108, %v1809, 0
    %v1873 = vsel %vm108, %v1810, 0
    %v1876 = vsel %vm108, %v1811, 0
    %v1879 = vsel %vm108, %v1812, 0
    %v1882 = vsel %vm108, %v1813, 0
    %v1885 = vsel %vm108, %v1814, 0
    %v1888 = vsel %vm108, %v1815, 0
    %v1891 = vsel %vm108, %v1816, 0
    %v1894 = vsel %vm108, %v1817, 0
    %v1897 = vsel %vm108, %v1818, 0
    %v1900 = vsel %vm108, %v1819, 0
    %v1903 = vsel %vm108, %v1820, 0
    %v1906 = vsel %vm108, %v1821, 0
    %v1909 = vsel %vm108, %v1822, 0
    %v1912 = vsel %vm108, %v1823, 0
    %v1915 = vsel %vm108, %v1824, 0
    %v1918 = vsel %vm108, %v1825, 0
    %v1921 = vsel %vm108, %v1826, 0
    %v1924 = vsel %vm108, %v1827, 0
    %v1927 = vsel %vm108, %v1828, 0
    %v1930 = vsel %vm108, %v1829, 0
    %v1933 = vsel %vm108, %v1830, 0
    %1935 = vmatpush.msra.mxu0 0.0
    %1936 = vmatpush.msra.mxu0 0.0
    %1937 = vmatpush.msra.mxu0 0.0
    %1938 = vmatpush.msra.mxu0 0.0
    %1939 = vmatpush.msra.mxu0 0.0
    %1940 = vmatpush.msra.mxu0 0.0
    %1941 = vmatpush.msra.mxu0 0.0
    %1942 = vmatpush.msra.mxu0 0.0
    %1943 = vmatpush.msra.mxu0 %v1838
    %1944 = vmatpush.msra.mxu0 %v1837
    %1945 = vmatpush.msra.mxu0 %v1836
    %1946 = vmatpush.msra.mxu0 %v1835
    %1947 = vmatpush.msra.mxu0 %v1834
    %1948 = vmatpush.msra.mxu0 %v1833
    %1949 = vmatpush.msra.mxu0 %v1832
    %1950 = vmatpush.msra.mxu0 %v1831
    %1951 = vmatmul.f32.gmra.mxu0 %v1840
    %v1952 = vpop.f32.mrf.mxu0
    %v1953 = vadd.f32 0.0, %v1952
    %1954 = vmatmul.f32.gmra.mxu0 %v1843
    %v1955 = vpop.f32.mrf.mxu0
    %v1956 = vadd.f32 0.0, %v1955
    %1957 = vmatmul.f32.gmra.mxu0 %v1846
    %v1958 = vpop.f32.mrf.mxu0
    %v1959 = vadd.f32 0.0, %v1958
    %1960 = vmatmul.f32.gmra.mxu0 %v1849
    %v1961 = vpop.f32.mrf.mxu0
    %v1962 = vadd.f32 0.0, %v1961
    %1963 = vmatmul.f32.gmra.mxu0 %v1852
    %v1964 = vpop.f32.mrf.mxu0
    %v1965 = vadd.f32 0.0, %v1964
    %1966 = vmatmul.f32.gmra.mxu0 %v1855
    %v1967 = vpop.f32.mrf.mxu0
    %v1968 = vadd.f32 0.0, %v1967
    %1969 = vmatmul.f32.gmra.mxu0 %v1858
    %v1970 = vpop.f32.mrf.mxu0
    %v1971 = vadd.f32 0.0, %v1970
    %1972 = vmatmul.f32.gmra.mxu0 %v1861
    %v1973 = vpop.f32.mrf.mxu0
    %v1974 = vadd.f32 0.0, %v1973
    %1975 = vmatmul.f32.gmra.mxu0 %v1864
    %v1976 = vpop.f32.mrf.mxu0
    %v1977 = vadd.f32 0.0, %v1976
    %1978 = vmatmul.f32.gmra.mxu0 %v1867
    %v1979 = vpop.f32.mrf.mxu0
    %v1980 = vadd.f32 0.0, %v1979
    %1981 = vmatmul.f32.gmra.mxu0 %v1870
    %v1982 = vpop.f32.mrf.mxu0
    %v1983 = vadd.f32 0.0, %v1982
    %1984 = vmatmul.f32.gmra.mxu0 %v1873
    %v1985 = vpop.f32.mrf.mxu0
    %v1986 = vadd.f32 0.0, %v1985
    %1987 = vmatmul.f32.gmra.mxu0 %v1876
    %v1988 = vpop.f32.mrf.mxu0
    %v1989 = vadd.f32 0.0, %v1988
    %1990 = vmatmul.f32.gmra.mxu0 %v1879
    %v1991 = vpop.f32.mrf.mxu0
    %v1992 = vadd.f32 0.0, %v1991
    %1993 = vmatmul.f32.gmra.mxu0 %v1882
    %v1994 = vpop.f32.mrf.mxu0
    %v1995 = vadd.f32 0.0, %v1994
    %1996 = vmatmul.f32.gmra.mxu0 %v1885
    %v1997 = vpop.f32.mrf.mxu0
    %v1998 = vadd.f32 0.0, %v1997
    %1999 = vmatmul.f32.gmra.mxu0 %v1888
    %v2000 = vpop.f32.mrf.mxu0
    %v2001 = vadd.f32 0.0, %v2000
    %2002 = vmatmul.f32.gmra.mxu0 %v1891
    %v2003 = vpop.f32.mrf.mxu0
    %v2004 = vadd.f32 0.0, %v2003
    %2005 = vmatmul.f32.gmra.mxu0 %v1894
    %v2006 = vpop.f32.mrf.mxu0
    %v2007 = vadd.f32 0.0, %v2006
    %2008 = vmatmul.f32.gmra.mxu0 %v1897
    %v2009 = vpop.f32.mrf.mxu0
    %v2010 = vadd.f32 0.0, %v2009
    %2011 = vmatmul.f32.gmra.mxu0 %v1900
    %v2012 = vpop.f32.mrf.mxu0
    %v2013 = vadd.f32 0.0, %v2012
    %2014 = vmatmul.f32.gmra.mxu0 %v1903
    %v2015 = vpop.f32.mrf.mxu0
    %v2016 = vadd.f32 0.0, %v2015
    %2017 = vmatmul.f32.gmra.mxu0 %v1906
    %v2018 = vpop.f32.mrf.mxu0
    %v2019 = vadd.f32 0.0, %v2018
    %2020 = vmatmul.f32.gmra.mxu0 %v1909
    %v2021 = vpop.f32.mrf.mxu0
    %v2022 = vadd.f32 0.0, %v2021
    %2023 = vmatmul.f32.gmra.mxu0 %v1912
    %v2024 = vpop.f32.mrf.mxu0
    %v2025 = vadd.f32 0.0, %v2024
    %2026 = vmatmul.f32.gmra.mxu0 %v1915
    %v2027 = vpop.f32.mrf.mxu0
    %v2028 = vadd.f32 0.0, %v2027
    %2029 = vmatmul.f32.gmra.mxu0 %v1918
    %v2030 = vpop.f32.mrf.mxu0
    %v2031 = vadd.f32 0.0, %v2030
    %2032 = vmatmul.f32.gmra.mxu0 %v1921
    %v2033 = vpop.f32.mrf.mxu0
    %v2034 = vadd.f32 0.0, %v2033
    %2035 = vmatmul.f32.gmra.mxu0 %v1924
    %v2036 = vpop.f32.mrf.mxu0
    %v2037 = vadd.f32 0.0, %v2036
    %2038 = vmatmul.f32.gmra.mxu0 %v1927
    %v2039 = vpop.f32.mrf.mxu0
    %v2040 = vadd.f32 0.0, %v2039
    %2041 = vmatmul.f32.gmra.mxu0 %v1930
    %v2042 = vpop.f32.mrf.mxu0
    %v2043 = vadd.f32 0.0, %v2042
    %2044 = vmatmul.f32.gmra.mxu0 %v1933
    %v2045 = vpop.f32.mrf.mxu0
    %v2046 = vadd.f32 0.0, %v2045
    %2047 = vdwg.mxu0
    %v2048 = vadd.f32 %v1767, %v1953
    %v2049 = vadd.f32 %v1768, %v1956
    %v2050 = vadd.f32 %v1769, %v1959
    %v2051 = vadd.f32 %v1770, %v1962
    %v2052 = vadd.f32 %v1771, %v1965
    %v2053 = vadd.f32 %v1772, %v1968
    %v2054 = vadd.f32 %v1773, %v1971
    %v2055 = vadd.f32 %v1774, %v1974
    %v2056 = vadd.f32 %v1775, %v1977
    %v2057 = vadd.f32 %v1776, %v1980
    %v2058 = vadd.f32 %v1777, %v1983
    %v2059 = vadd.f32 %v1778, %v1986
    %v2060 = vadd.f32 %v1779, %v1989
    %v2061 = vadd.f32 %v1780, %v1992
    %v2062 = vadd.f32 %v1781, %v1995
    %v2063 = vadd.f32 %v1782, %v1998
    %v2064 = vadd.f32 %v1783, %v2001
    %v2065 = vadd.f32 %v1784, %v2004
    %v2066 = vadd.f32 %v1785, %v2007
    %v2067 = vadd.f32 %v1786, %v2010
    %v2068 = vadd.f32 %v1787, %v2013
    %v2069 = vadd.f32 %v1788, %v2016
    %v2070 = vadd.f32 %v1789, %v2019
    %v2071 = vadd.f32 %v1790, %v2022
    %v2072 = vadd.f32 %v1791, %v2025
    %v2073 = vadd.f32 %v1792, %v2028
    %v2074 = vadd.f32 %v1793, %v2031
    %v2075 = vadd.f32 %v1794, %v2034
    %v2076 = vadd.f32 %v1795, %v2037
    %v2077 = vadd.f32 %v1796, %v2040
    %v2078 = vadd.f32 %v1797, %v2043
    %v2079 = vadd.f32 %v1798, %v2046
    %v2080 = vld [vmem:[#allocation2 + $0xb] sm:$0xff]
    %v2081 = vld [vmem:[#allocation2 + $0x13] sm:$0xff]
    %v2082 = vld [vmem:[#allocation2 + $0x1b] sm:$0xff]
    %v2083 = vld [vmem:[#allocation2 + $0x23] sm:$0xff]
    %v2084 = vld [vmem:[#allocation2 + $0x2b] sm:$0xff]
    %v2085 = vld [vmem:[#allocation2 + $0x33] sm:$0xff]
    %v2086 = vld [vmem:[#allocation2 + $0x3b] sm:$0xff]
    %v2087 = vld [vmem:[#allocation2 + $0x43] sm:$0xff]
    %v2088 = vld [vmem:[#allocation2 + $0x4b] sm:$0xff]
    %v2089 = vld [vmem:[#allocation2 + $0x53] sm:$0xff]
    %v2090 = vld [vmem:[#allocation2 + $0x5b] sm:$0xff]
    %v2091 = vld [vmem:[#allocation2 + $0x63] sm:$0xff]
    %v2092 = vld [vmem:[#allocation2 + $0x6b] sm:$0xff]
    %v2093 = vld [vmem:[#allocation2 + $0x73] sm:$0xff]
    %v2094 = vld [vmem:[#allocation2 + $0x7b] sm:$0xff]
    %v2095 = vld [vmem:[#allocation2 + $0x83] sm:$0xff]
    %v2096 = vld [vmem:[#allocation2 + $0x9b] sm:$0xff]
    %v2097 = vld [vmem:[#allocation2 + $0xa3] sm:$0xff]
    %v2098 = vld [vmem:[#allocation2 + $0xab] sm:$0xff]
    %v2099 = vld [vmem:[#allocation2 + $0xb3] sm:$0xff]
    %v2100 = vld [vmem:[#allocation2 + $0xbb] sm:$0xff]
    %v2101 = vld [vmem:[#allocation2 + $0xc3] sm:$0xff]
    %v2102 = vld [vmem:[#allocation2 + $0xcb] sm:$0xff]
    %v2103 = vld [vmem:[#allocation2 + $0xd3] sm:$0xff]
    %v2104 = vld [vmem:[#allocation2 + $0xdb] sm:$0xff]
    %v2105 = vld [vmem:[#allocation2 + $0xe3] sm:$0xff]
    %v2106 = vld [vmem:[#allocation2 + $0xeb] sm:$0xff]
    %v2107 = vld [vmem:[#allocation2 + $0xf3] sm:$0xff]
    %v2108 = vld [vmem:[#allocation2 + $0xfb] sm:$0xff]
    %v2109 = vld [vmem:[#allocation2 + $0x103] sm:$0xff]
    %v2110 = vld [vmem:[#allocation2 + $0x10b] sm:$0xff]
    %v2111 = vld [vmem:[#allocation2 + $0x113] sm:$0xff]
    %v2112 = vld [vmem:[#allocation4 + $0x1c0] sm:$0xff]
    %v2113 = vld [vmem:[#allocation4 + $0x1c8] sm:$0xff]
    %v2114 = vld [vmem:[#allocation4 + $0x1d0] sm:$0xff]
    %v2115 = vld [vmem:[#allocation4 + $0x1d8] sm:$0xff]
    %v2116 = vld [vmem:[#allocation4 + $0x1e0] sm:$0xff]
    %v2117 = vld [vmem:[#allocation4 + $0x1e8] sm:$0xff]
    %v2118 = vld [vmem:[#allocation4 + $0x1f0] sm:$0xff]
    %v2119 = vld [vmem:[#allocation4 + $0x1f8] sm:$0xff]
    %v2121 = vsel %vm108, %v2080, 0
    %v2124 = vsel %vm108, %v2081, 0
    %v2127 = vsel %vm108, %v2082, 0
    %v2130 = vsel %vm108, %v2083, 0
    %v2133 = vsel %vm108, %v2084, 0
    %v2136 = vsel %vm108, %v2085, 0
    %v2139 = vsel %vm108, %v2086, 0
    %v2142 = vsel %vm108, %v2087, 0
    %v2145 = vsel %vm108, %v2088, 0
    %v2148 = vsel %vm108, %v2089, 0
    %v2151 = vsel %vm108, %v2090, 0
    %v2154 = vsel %vm108, %v2091, 0
    %v2157 = vsel %vm108, %v2092, 0
    %v2160 = vsel %vm108, %v2093, 0
    %v2163 = vsel %vm108, %v2094, 0
    %v2166 = vsel %vm108, %v2095, 0
    %v2169 = vsel %vm108, %v2096, 0
    %v2172 = vsel %vm108, %v2097, 0
    %v2175 = vsel %vm108, %v2098, 0
    %v2178 = vsel %vm108, %v2099, 0
    %v2181 = vsel %vm108, %v2100, 0
    %v2184 = vsel %vm108, %v2101, 0
    %v2187 = vsel %vm108, %v2102, 0
    %v2190 = vsel %vm108, %v2103, 0
    %v2193 = vsel %vm108, %v2104, 0
    %v2196 = vsel %vm108, %v2105, 0
    %v2199 = vsel %vm108, %v2106, 0
    %v2202 = vsel %vm108, %v2107, 0
    %v2205 = vsel %vm108, %v2108, 0
    %v2208 = vsel %vm108, %v2109, 0
    %v2211 = vsel %vm108, %v2110, 0
    %v2214 = vsel %vm108, %v2111, 0
    %2216 = vmatpush.msra.mxu0 0.0
    %2217 = vmatpush.msra.mxu0 0.0
    %2218 = vmatpush.msra.mxu0 0.0
    %2219 = vmatpush.msra.mxu0 0.0
    %2220 = vmatpush.msra.mxu0 0.0
    %2221 = vmatpush.msra.mxu0 0.0
    %2222 = vmatpush.msra.mxu0 0.0
    %2223 = vmatpush.msra.mxu0 0.0
    %2224 = vmatpush.msra.mxu0 %v2119
    %2225 = vmatpush.msra.mxu0 %v2118
    %2226 = vmatpush.msra.mxu0 %v2117
    %2227 = vmatpush.msra.mxu0 %v2116
    %2228 = vmatpush.msra.mxu0 %v2115
    %2229 = vmatpush.msra.mxu0 %v2114
    %2230 = vmatpush.msra.mxu0 %v2113
    %2231 = vmatpush.msra.mxu0 %v2112
    %2232 = vmatmul.f32.gmra.mxu0 %v2121
    %v2233 = vpop.f32.mrf.mxu0
    %v2234 = vadd.f32 0.0, %v2233
    %2235 = vmatmul.f32.gmra.mxu0 %v2124
    %v2236 = vpop.f32.mrf.mxu0
    %v2237 = vadd.f32 0.0, %v2236
    %2238 = vmatmul.f32.gmra.mxu0 %v2127
    %v2239 = vpop.f32.mrf.mxu0
    %v2240 = vadd.f32 0.0, %v2239
    %2241 = vmatmul.f32.gmra.mxu0 %v2130
    %v2242 = vpop.f32.mrf.mxu0
    %v2243 = vadd.f32 0.0, %v2242
    %2244 = vmatmul.f32.gmra.mxu0 %v2133
    %v2245 = vpop.f32.mrf.mxu0
    %v2246 = vadd.f32 0.0, %v2245
    %2247 = vmatmul.f32.gmra.mxu0 %v2136
    %v2248 = vpop.f32.mrf.mxu0
    %v2249 = vadd.f32 0.0, %v2248
    %2250 = vmatmul.f32.gmra.mxu0 %v2139
    %v2251 = vpop.f32.mrf.mxu0
    %v2252 = vadd.f32 0.0, %v2251
    %2253 = vmatmul.f32.gmra.mxu0 %v2142
    %v2254 = vpop.f32.mrf.mxu0
    %v2255 = vadd.f32 0.0, %v2254
    %2256 = vmatmul.f32.gmra.mxu0 %v2145
    %v2257 = vpop.f32.mrf.mxu0
    %v2258 = vadd.f32 0.0, %v2257
    %2259 = vmatmul.f32.gmra.mxu0 %v2148
    %v2260 = vpop.f32.mrf.mxu0
    %v2261 = vadd.f32 0.0, %v2260
    %2262 = vmatmul.f32.gmra.mxu0 %v2151
    %v2263 = vpop.f32.mrf.mxu0
    %v2264 = vadd.f32 0.0, %v2263
    %2265 = vmatmul.f32.gmra.mxu0 %v2154
    %v2266 = vpop.f32.mrf.mxu0
    %v2267 = vadd.f32 0.0, %v2266
    %2268 = vmatmul.f32.gmra.mxu0 %v2157
    %v2269 = vpop.f32.mrf.mxu0
    %v2270 = vadd.f32 0.0, %v2269
    %2271 = vmatmul.f32.gmra.mxu0 %v2160
    %v2272 = vpop.f32.mrf.mxu0
    %v2273 = vadd.f32 0.0, %v2272
    %2274 = vmatmul.f32.gmra.mxu0 %v2163
    %v2275 = vpop.f32.mrf.mxu0
    %v2276 = vadd.f32 0.0, %v2275
    %2277 = vmatmul.f32.gmra.mxu0 %v2166
    %v2278 = vpop.f32.mrf.mxu0
    %v2279 = vadd.f32 0.0, %v2278
    %2280 = vmatmul.f32.gmra.mxu0 %v2169
    %v2281 = vpop.f32.mrf.mxu0
    %v2282 = vadd.f32 0.0, %v2281
    %2283 = vmatmul.f32.gmra.mxu0 %v2172
    %v2284 = vpop.f32.mrf.mxu0
    %v2285 = vadd.f32 0.0, %v2284
    %2286 = vmatmul.f32.gmra.mxu0 %v2175
    %v2287 = vpop.f32.mrf.mxu0
    %v2288 = vadd.f32 0.0, %v2287
    %2289 = vmatmul.f32.gmra.mxu0 %v2178
    %v2290 = vpop.f32.mrf.mxu0
    %v2291 = vadd.f32 0.0, %v2290
    %2292 = vmatmul.f32.gmra.mxu0 %v2181
    %v2293 = vpop.f32.mrf.mxu0
    %v2294 = vadd.f32 0.0, %v2293
    %2295 = vmatmul.f32.gmra.mxu0 %v2184
    %v2296 = vpop.f32.mrf.mxu0
    %v2297 = vadd.f32 0.0, %v2296
    %2298 = vmatmul.f32.gmra.mxu0 %v2187
    %v2299 = vpop.f32.mrf.mxu0
    %v2300 = vadd.f32 0.0, %v2299
    %2301 = vmatmul.f32.gmra.mxu0 %v2190
    %v2302 = vpop.f32.mrf.mxu0
    %v2303 = vadd.f32 0.0, %v2302
    %2304 = vmatmul.f32.gmra.mxu0 %v2193
    %v2305 = vpop.f32.mrf.mxu0
    %v2306 = vadd.f32 0.0, %v2305
    %2307 = vmatmul.f32.gmra.mxu0 %v2196
    %v2308 = vpop.f32.mrf.mxu0
    %v2309 = vadd.f32 0.0, %v2308
    %2310 = vmatmul.f32.gmra.mxu0 %v2199
    %v2311 = vpop.f32.mrf.mxu0
    %v2312 = vadd.f32 0.0, %v2311
    %2313 = vmatmul.f32.gmra.mxu0 %v2202
    %v2314 = vpop.f32.mrf.mxu0
    %v2315 = vadd.f32 0.0, %v2314
    %2316 = vmatmul.f32.gmra.mxu0 %v2205
    %v2317 = vpop.f32.mrf.mxu0
    %v2318 = vadd.f32 0.0, %v2317
    %2319 = vmatmul.f32.gmra.mxu0 %v2208
    %v2320 = vpop.f32.mrf.mxu0
    %v2321 = vadd.f32 0.0, %v2320
    %2322 = vmatmul.f32.gmra.mxu0 %v2211
    %v2323 = vpop.f32.mrf.mxu0
    %v2324 = vadd.f32 0.0, %v2323
    %2325 = vmatmul.f32.gmra.mxu0 %v2214
    %v2326 = vpop.f32.mrf.mxu0
    %v2327 = vadd.f32 0.0, %v2326
    %2328 = vdwg.mxu0
    %v2329 = vadd.f32 %v2048, %v2234
    %v2330 = vadd.f32 %v2049, %v2237
    %v2331 = vadd.f32 %v2050, %v2240
    %v2332 = vadd.f32 %v2051, %v2243
    %v2333 = vadd.f32 %v2052, %v2246
    %v2334 = vadd.f32 %v2053, %v2249
    %v2335 = vadd.f32 %v2054, %v2252
    %v2336 = vadd.f32 %v2055, %v2255
    %v2337 = vadd.f32 %v2056, %v2258
    %v2338 = vadd.f32 %v2057, %v2261
    %v2339 = vadd.f32 %v2058, %v2264
    %v2340 = vadd.f32 %v2059, %v2267
    %v2341 = vadd.f32 %v2060, %v2270
    %v2342 = vadd.f32 %v2061, %v2273
    %v2343 = vadd.f32 %v2062, %v2276
    %v2344 = vadd.f32 %v2063, %v2279
    %v2345 = vadd.f32 %v2064, %v2282
    %v2346 = vadd.f32 %v2065, %v2285
    %v2347 = vadd.f32 %v2066, %v2288
    %v2348 = vadd.f32 %v2067, %v2291
    %v2349 = vadd.f32 %v2068, %v2294
    %v2350 = vadd.f32 %v2069, %v2297
    %v2351 = vadd.f32 %v2070, %v2300
    %v2352 = vadd.f32 %v2071, %v2303
    %v2353 = vadd.f32 %v2072, %v2306
    %v2354 = vadd.f32 %v2073, %v2309
    %v2355 = vadd.f32 %v2074, %v2312
    %v2356 = vadd.f32 %v2075, %v2315
    %v2357 = vadd.f32 %v2076, %v2318
    %v2358 = vadd.f32 %v2077, %v2321
    %v2359 = vadd.f32 %v2078, %v2324
    %v2360 = vadd.f32 %v2079, %v2327
    %v2361 = vld [vmem:[#allocation2 + $0xc] sm:$0xff]
    %v2362 = vld [vmem:[#allocation2 + $0x14] sm:$0xff]
    %v2363 = vld [vmem:[#allocation2 + $0x1c] sm:$0xff]
    %v2364 = vld [vmem:[#allocation2 + $0x24] sm:$0xff]
    %v2365 = vld [vmem:[#allocation2 + $0x2c] sm:$0xff]
    %v2366 = vld [vmem:[#allocation2 + $0x34] sm:$0xff]
    %v2367 = vld [vmem:[#allocation2 + $0x3c] sm:$0xff]
    %v2368 = vld [vmem:[#allocation2 + $0x44] sm:$0xff]
    %v2369 = vld [vmem:[#allocation2 + $0x4c] sm:$0xff]
    %v2370 = vld [vmem:[#allocation2 + $0x54] sm:$0xff]
    %v2371 = vld [vmem:[#allocation2 + $0x5c] sm:$0xff]
    %v2372 = vld [vmem:[#allocation2 + $0x64] sm:$0xff]
    %v2373 = vld [vmem:[#allocation2 + $0x6c] sm:$0xff]
    %v2374 = vld [vmem:[#allocation2 + $0x74] sm:$0xff]
    %v2375 = vld [vmem:[#allocation2 + $0x7c] sm:$0xff]
    %v2376 = vld [vmem:[#allocation2 + $0x84] sm:$0xff]
    %v2377 = vld [vmem:[#allocation2 + $0x9c] sm:$0xff]
    %v2378 = vld [vmem:[#allocation2 + $0xa4] sm:$0xff]
    %v2379 = vld [vmem:[#allocation2 + $0xac] sm:$0xff]
    %v2380 = vld [vmem:[#allocation2 + $0xb4] sm:$0xff]
    %v2381 = vld [vmem:[#allocation2 + $0xbc] sm:$0xff]
    %v2382 = vld [vmem:[#allocation2 + $0xc4] sm:$0xff]
    %v2383 = vld [vmem:[#allocation2 + $0xcc] sm:$0xff]
    %v2384 = vld [vmem:[#allocation2 + $0xd4] sm:$0xff]
    %v2385 = vld [vmem:[#allocation2 + $0xdc] sm:$0xff]
    %v2386 = vld [vmem:[#allocation2 + $0xe4] sm:$0xff]
    %v2387 = vld [vmem:[#allocation2 + $0xec] sm:$0xff]
    %v2388 = vld [vmem:[#allocation2 + $0xf4] sm:$0xff]
    %v2389 = vld [vmem:[#allocation2 + $0xfc] sm:$0xff]
    %v2390 = vld [vmem:[#allocation2 + $0x104] sm:$0xff]
    %v2391 = vld [vmem:[#allocation2 + $0x10c] sm:$0xff]
    %v2392 = vld [vmem:[#allocation2 + $0x114] sm:$0xff]
    %v2393 = vld [vmem:[#allocation4 + $0x200] sm:$0xff]
    %v2394 = vld [vmem:[#allocation4 + $0x208] sm:$0xff]
    %v2395 = vld [vmem:[#allocation4 + $0x210] sm:$0xff]
    %v2396 = vld [vmem:[#allocation4 + $0x218] sm:$0xff]
    %v2397 = vld [vmem:[#allocation4 + $0x220] sm:$0xff]
    %v2398 = vld [vmem:[#allocation4 + $0x228] sm:$0xff]
    %v2399 = vld [vmem:[#allocation4 + $0x230] sm:$0xff]
    %v2400 = vld [vmem:[#allocation4 + $0x238] sm:$0xff]
    %v2402 = vsel %vm108, %v2361, 0
    %v2405 = vsel %vm108, %v2362, 0
    %v2408 = vsel %vm108, %v2363, 0
    %v2411 = vsel %vm108, %v2364, 0
    %v2414 = vsel %vm108, %v2365, 0
    %v2417 = vsel %vm108, %v2366, 0
    %v2420 = vsel %vm108, %v2367, 0
    %v2423 = vsel %vm108, %v2368, 0
    %v2426 = vsel %vm108, %v2369, 0
    %v2429 = vsel %vm108, %v2370, 0
    %v2432 = vsel %vm108, %v2371, 0
    %v2435 = vsel %vm108, %v2372, 0
    %v2438 = vsel %vm108, %v2373, 0
    %v2441 = vsel %vm108, %v2374, 0
    %v2444 = vsel %vm108, %v2375, 0
    %v2447 = vsel %vm108, %v2376, 0
    %v2450 = vsel %vm108, %v2377, 0
    %v2453 = vsel %vm108, %v2378, 0
    %v2456 = vsel %vm108, %v2379, 0
    %v2459 = vsel %vm108, %v2380, 0
    %v2462 = vsel %vm108, %v2381, 0
    %v2465 = vsel %vm108, %v2382, 0
    %v2468 = vsel %vm108, %v2383, 0
    %v2471 = vsel %vm108, %v2384, 0
    %v2474 = vsel %vm108, %v2385, 0
    %v2477 = vsel %vm108, %v2386, 0
    %v2480 = vsel %vm108, %v2387, 0
    %v2483 = vsel %vm108, %v2388, 0
    %v2486 = vsel %vm108, %v2389, 0
    %v2489 = vsel %vm108, %v2390, 0
    %v2492 = vsel %vm108, %v2391, 0
    %v2495 = vsel %vm108, %v2392, 0
    %2497 = vmatpush.msra.mxu0 0.0
    %2498 = vmatpush.msra.mxu0 0.0
    %2499 = vmatpush.msra.mxu0 0.0
    %2500 = vmatpush.msra.mxu0 0.0
    %2501 = vmatpush.msra.mxu0 0.0
    %2502 = vmatpush.msra.mxu0 0.0
    %2503 = vmatpush.msra.mxu0 0.0
    %2504 = vmatpush.msra.mxu0 0.0
    %2505 = vmatpush.msra.mxu0 %v2400
    %2506 = vmatpush.msra.mxu0 %v2399
    %2507 = vmatpush.msra.mxu0 %v2398
    %2508 = vmatpush.msra.mxu0 %v2397
    %2509 = vmatpush.msra.mxu0 %v2396
    %2510 = vmatpush.msra.mxu0 %v2395
    %2511 = vmatpush.msra.mxu0 %v2394
    %2512 = vmatpush.msra.mxu0 %v2393
    %2513 = vmatmul.f32.gmra.mxu0 %v2402
    %v2514 = vpop.f32.mrf.mxu0
    %v2515 = vadd.f32 0.0, %v2514
    %2516 = vmatmul.f32.gmra.mxu0 %v2405
    %v2517 = vpop.f32.mrf.mxu0
    %v2518 = vadd.f32 0.0, %v2517
    %2519 = vmatmul.f32.gmra.mxu0 %v2408
    %v2520 = vpop.f32.mrf.mxu0
    %v2521 = vadd.f32 0.0, %v2520
    %2522 = vmatmul.f32.gmra.mxu0 %v2411
    %v2523 = vpop.f32.mrf.mxu0
    %v2524 = vadd.f32 0.0, %v2523
    %2525 = vmatmul.f32.gmra.mxu0 %v2414
    %v2526 = vpop.f32.mrf.mxu0
    %v2527 = vadd.f32 0.0, %v2526
    %2528 = vmatmul.f32.gmra.mxu0 %v2417
    %v2529 = vpop.f32.mrf.mxu0
    %v2530 = vadd.f32 0.0, %v2529
    %2531 = vmatmul.f32.gmra.mxu0 %v2420
    %v2532 = vpop.f32.mrf.mxu0
    %v2533 = vadd.f32 0.0, %v2532
    %2534 = vmatmul.f32.gmra.mxu0 %v2423
    %v2535 = vpop.f32.mrf.mxu0
    %v2536 = vadd.f32 0.0, %v2535
    %2537 = vmatmul.f32.gmra.mxu0 %v2426
    %v2538 = vpop.f32.mrf.mxu0
    %v2539 = vadd.f32 0.0, %v2538
    %2540 = vmatmul.f32.gmra.mxu0 %v2429
    %v2541 = vpop.f32.mrf.mxu0
    %v2542 = vadd.f32 0.0, %v2541
    %2543 = vmatmul.f32.gmra.mxu0 %v2432
    %v2544 = vpop.f32.mrf.mxu0
    %v2545 = vadd.f32 0.0, %v2544
    %2546 = vmatmul.f32.gmra.mxu0 %v2435
    %v2547 = vpop.f32.mrf.mxu0
    %v2548 = vadd.f32 0.0, %v2547
    %2549 = vmatmul.f32.gmra.mxu0 %v2438
    %v2550 = vpop.f32.mrf.mxu0
    %v2551 = vadd.f32 0.0, %v2550
    %2552 = vmatmul.f32.gmra.mxu0 %v2441
    %v2553 = vpop.f32.mrf.mxu0
    %v2554 = vadd.f32 0.0, %v2553
    %2555 = vmatmul.f32.gmra.mxu0 %v2444
    %v2556 = vpop.f32.mrf.mxu0
    %v2557 = vadd.f32 0.0, %v2556
    %2558 = vmatmul.f32.gmra.mxu0 %v2447
    %v2559 = vpop.f32.mrf.mxu0
    %v2560 = vadd.f32 0.0, %v2559
    %2561 = vmatmul.f32.gmra.mxu0 %v2450
    %v2562 = vpop.f32.mrf.mxu0
    %v2563 = vadd.f32 0.0, %v2562
    %2564 = vmatmul.f32.gmra.mxu0 %v2453
    %v2565 = vpop.f32.mrf.mxu0
    %v2566 = vadd.f32 0.0, %v2565
    %2567 = vmatmul.f32.gmra.mxu0 %v2456
    %v2568 = vpop.f32.mrf.mxu0
    %v2569 = vadd.f32 0.0, %v2568
    %2570 = vmatmul.f32.gmra.mxu0 %v2459
    %v2571 = vpop.f32.mrf.mxu0
    %v2572 = vadd.f32 0.0, %v2571
    %2573 = vmatmul.f32.gmra.mxu0 %v2462
    %v2574 = vpop.f32.mrf.mxu0
    %v2575 = vadd.f32 0.0, %v2574
    %2576 = vmatmul.f32.gmra.mxu0 %v2465
    %v2577 = vpop.f32.mrf.mxu0
    %v2578 = vadd.f32 0.0, %v2577
    %2579 = vmatmul.f32.gmra.mxu0 %v2468
    %v2580 = vpop.f32.mrf.mxu0
    %v2581 = vadd.f32 0.0, %v2580
    %2582 = vmatmul.f32.gmra.mxu0 %v2471
    %v2583 = vpop.f32.mrf.mxu0
    %v2584 = vadd.f32 0.0, %v2583
    %2585 = vmatmul.f32.gmra.mxu0 %v2474
    %v2586 = vpop.f32.mrf.mxu0
    %v2587 = vadd.f32 0.0, %v2586
    %2588 = vmatmul.f32.gmra.mxu0 %v2477
    %v2589 = vpop.f32.mrf.mxu0
    %v2590 = vadd.f32 0.0, %v2589
    %2591 = vmatmul.f32.gmra.mxu0 %v2480
    %v2592 = vpop.f32.mrf.mxu0
    %v2593 = vadd.f32 0.0, %v2592
    %2594 = vmatmul.f32.gmra.mxu0 %v2483
    %v2595 = vpop.f32.mrf.mxu0
    %v2596 = vadd.f32 0.0, %v2595
    %2597 = vmatmul.f32.gmra.mxu0 %v2486
    %v2598 = vpop.f32.mrf.mxu0
    %v2599 = vadd.f32 0.0, %v2598
    %2600 = vmatmul.f32.gmra.mxu0 %v2489
    %v2601 = vpop.f32.mrf.mxu0
    %v2602 = vadd.f32 0.0, %v2601
    %2603 = vmatmul.f32.gmra.mxu0 %v2492
    %v2604 = vpop.f32.mrf.mxu0
    %v2605 = vadd.f32 0.0, %v2604
    %2606 = vmatmul.f32.gmra.mxu0 %v2495
    %v2607 = vpop.f32.mrf.mxu0
    %v2608 = vadd.f32 0.0, %v2607
    %2609 = vdwg.mxu0
    %v2610 = vadd.f32 %v2329, %v2515
    %v2611 = vadd.f32 %v2330, %v2518
    %v2612 = vadd.f32 %v2331, %v2521
    %v2613 = vadd.f32 %v2332, %v2524
    %v2614 = vadd.f32 %v2333, %v2527
    %v2615 = vadd.f32 %v2334, %v2530
    %v2616 = vadd.f32 %v2335, %v2533
    %v2617 = vadd.f32 %v2336, %v2536
    %v2618 = vadd.f32 %v2337, %v2539
    %v2619 = vadd.f32 %v2338, %v2542
    %v2620 = vadd.f32 %v2339, %v2545
    %v2621 = vadd.f32 %v2340, %v2548
    %v2622 = vadd.f32 %v2341, %v2551
    %v2623 = vadd.f32 %v2342, %v2554
    %v2624 = vadd.f32 %v2343, %v2557
    %v2625 = vadd.f32 %v2344, %v2560
    %v2626 = vadd.f32 %v2345, %v2563
    %v2627 = vadd.f32 %v2346, %v2566
    %v2628 = vadd.f32 %v2347, %v2569
    %v2629 = vadd.f32 %v2348, %v2572
    %v2630 = vadd.f32 %v2349, %v2575
    %v2631 = vadd.f32 %v2350, %v2578
    %v2632 = vadd.f32 %v2351, %v2581
    %v2633 = vadd.f32 %v2352, %v2584
    %v2634 = vadd.f32 %v2353, %v2587
    %v2635 = vadd.f32 %v2354, %v2590
    %v2636 = vadd.f32 %v2355, %v2593
    %v2637 = vadd.f32 %v2356, %v2596
    %v2638 = vadd.f32 %v2357, %v2599
    %v2639 = vadd.f32 %v2358, %v2602
    %v2640 = vadd.f32 %v2359, %v2605
    %v2641 = vadd.f32 %v2360, %v2608
    %v2642 = vld [vmem:[%s2] sm:$0x1]
    %v2644 = vperm.slane %v2642, 0
    %v2646 = vadd.f32 %v2610, %v2644
    %v2647 = vadd.f32 %v2611, %v2644
    %v2648 = vadd.f32 %v2612, %v2644
    %v2649 = vadd.f32 %v2613, %v2644
    %v2650 = vadd.f32 %v2614, %v2644
    %v2651 = vadd.f32 %v2615, %v2644
    %v2652 = vadd.f32 %v2616, %v2644
    %v2653 = vadd.f32 %v2617, %v2644
    %v2654 = vadd.f32 %v2618, %v2644
    %v2655 = vadd.f32 %v2619, %v2644
    %v2656 = vadd.f32 %v2620, %v2644
    %v2657 = vadd.f32 %v2621, %v2644
    %v2658 = vadd.f32 %v2622, %v2644
    %v2659 = vadd.f32 %v2623, %v2644
    %v2660 = vadd.f32 %v2624, %v2644
    %v2661 = vadd.f32 %v2625, %v2644
    %v2662 = vadd.f32 %v2626, %v2644
    %v2663 = vadd.f32 %v2627, %v2644
    %v2664 = vadd.f32 %v2628, %v2644
    %v2665 = vadd.f32 %v2629, %v2644
    %v2666 = vadd.f32 %v2630, %v2644
    %v2667 = vadd.f32 %v2631, %v2644
    %v2668 = vadd.f32 %v2632, %v2644
    %v2669 = vadd.f32 %v2633, %v2644
    %v2670 = vadd.f32 %v2634, %v2644
    %v2671 = vadd.f32 %v2635, %v2644
    %v2672 = vadd.f32 %v2636, %v2644
    %v2673 = vadd.f32 %v2637, %v2644
    %v2674 = vadd.f32 %v2638, %v2644
    %v2675 = vadd.f32 %v2639, %v2644
    %v2676 = vadd.f32 %v2640, %v2644
    %v2677 = vadd.f32 %v2641, %v2644
    %v2678 = vld [vmem:[%s3] sm:$0x1]
    %v2679 = vld [vmem:[%s4] sm:$0x1]
    %v2680 = vadd.f32 %v2646, %v2647
    %v2681 = vadd.f32 %v2680, %v2648
    %v2682 = vadd.f32 %v2681, %v2649
    %v2683 = vadd.f32 %v2682, %v2650
    %v2684 = vadd.f32 %v2683, %v2651
    %v2685 = vadd.f32 %v2684, %v2652
    %v2686 = vadd.f32 %v2685, %v2653
    %v2687 = vadd.f32 %v2686, %v2654
    %v2688 = vadd.f32 %v2687, %v2655
    %v2689 = vadd.f32 %v2688, %v2656
    %v2690 = vadd.f32 %v2689, %v2657
    %v2691 = vadd.f32 %v2690, %v2658
    %v2692 = vadd.f32 %v2691, %v2659
    %v2693 = vadd.f32 %v2692, %v2660
    %v2694 = vadd.f32 %v2693, %v2661
    %v2695 = vadd.f32 %v2694, %v2662
    %v2696 = vadd.f32 %v2695, %v2663
    %v2697 = vadd.f32 %v2696, %v2664
    %v2698 = vadd.f32 %v2697, %v2665
    %v2699 = vadd.f32 %v2698, %v2666
    %v2700 = vadd.f32 %v2699, %v2667
    %v2701 = vadd.f32 %v2700, %v2668
    %v2702 = vadd.f32 %v2701, %v2669
    %v2703 = vadd.f32 %v2702, %v2670
    %v2704 = vadd.f32 %v2703, %v2671
    %v2705 = vadd.f32 %v2704, %v2672
    %v2706 = vadd.f32 %v2705, %v2673
    %v2707 = vadd.f32 %v2706, %v2674
    %v2708 = vadd.f32 %v2707, %v2675
    %v2709 = vadd.f32 %v2708, %v2676
    %v2710 = vadd.f32 %v2709, %v2677
    %v2711 = vrot.slane %v2710, 4
    %v2712 = vadd.f32 %v2710, %v2711
    %v2713 = vrot.slane %v2712, 2
    %v2714 = vadd.f32 %v2712, %v2713
    %v2715 = vrot.slane %v2714, 1
    %v2716 = vadd.f32 %v2714, %v2715
    %v2717 = vmul.f32 %v2716, 0.00390625
    %v2718 = vsub.f32 %v2646, %v2717
    %v2719 = vsub.f32 %v2647, %v2717
    %v2720 = vsub.f32 %v2648, %v2717
    %v2721 = vsub.f32 %v2649, %v2717
    %v2722 = vsub.f32 %v2650, %v2717
    %v2723 = vsub.f32 %v2651, %v2717
    %v2724 = vsub.f32 %v2652, %v2717
    %v2725 = vsub.f32 %v2653, %v2717
    %v2726 = vsub.f32 %v2654, %v2717
    %v2727 = vsub.f32 %v2655, %v2717
    %v2728 = vsub.f32 %v2656, %v2717
    %v2729 = vsub.f32 %v2657, %v2717
    %v2730 = vsub.f32 %v2658, %v2717
    %v2731 = vsub.f32 %v2659, %v2717
    %v2732 = vsub.f32 %v2660, %v2717
    %v2733 = vsub.f32 %v2661, %v2717
    %v2734 = vsub.f32 %v2662, %v2717
    %v2735 = vsub.f32 %v2663, %v2717
    %v2736 = vsub.f32 %v2664, %v2717
    %v2737 = vsub.f32 %v2665, %v2717
    %v2738 = vsub.f32 %v2666, %v2717
    %v2739 = vsub.f32 %v2667, %v2717
    %v2740 = vsub.f32 %v2668, %v2717
    %v2741 = vsub.f32 %v2669, %v2717
    %v2742 = vsub.f32 %v2670, %v2717
    %v2743 = vsub.f32 %v2671, %v2717
    %v2744 = vsub.f32 %v2672, %v2717
    %v2745 = vsub.f32 %v2673, %v2717
    %v2746 = vsub.f32 %v2674, %v2717
    %v2747 = vsub.f32 %v2675, %v2717
    %v2748 = vsub.f32 %v2676, %v2717
    %v2749 = vsub.f32 %v2677, %v2717
    %v2750 = vmul.f32 %v2718, %v2718
    %v2751 = vmul.f32 %v2719, %v2719
    %v2752 = vmul.f32 %v2720, %v2720
    %v2753 = vmul.f32 %v2721, %v2721
    %v2754 = vmul.f32 %v2722, %v2722
    %v2755 = vmul.f32 %v2723, %v2723
    %v2756 = vmul.f32 %v2724, %v2724
    %v2757 = vmul.f32 %v2725, %v2725
    %v2758 = vmul.f32 %v2726, %v2726
    %v2759 = vmul.f32 %v2727, %v2727
    %v2760 = vmul.f32 %v2728, %v2728
    %v2761 = vmul.f32 %v2729, %v2729
    %v2762 = vmul.f32 %v2730, %v2730
    %v2763 = vmul.f32 %v2731, %v2731
    %v2764 = vmul.f32 %v2732, %v2732
    %v2765 = vmul.f32 %v2733, %v2733
    %v2766 = vmul.f32 %v2734, %v2734
    %v2767 = vmul.f32 %v2735, %v2735
    %v2768 = vmul.f32 %v2736, %v2736
    %v2769 = vmul.f32 %v2737, %v2737
    %v2770 = vmul.f32 %v2738, %v2738
    %v2771 = vmul.f32 %v2739, %v2739
    %v2772 = vmul.f32 %v2740, %v2740
    %v2773 = vmul.f32 %v2741, %v2741
    %v2774 = vmul.f32 %v2742, %v2742
    %v2775 = vmul.f32 %v2743, %v2743
    %v2776 = vmul.f32 %v2744, %v2744
    %v2777 = vmul.f32 %v2745, %v2745
    %v2778 = vmul.f32 %v2746, %v2746
    %v2779 = vmul.f32 %v2747, %v2747
    %v2780 = vmul.f32 %v2748, %v2748
    %v2781 = vmul.f32 %v2749, %v2749
    %v2782 = vadd.f32 %v2750, %v2751
    %v2783 = vadd.f32 %v2782, %v2752
    %v2784 = vadd.f32 %v2783, %v2753
    %v2785 = vadd.f32 %v2784, %v2754
    %v2786 = vadd.f32 %v2785, %v2755
    %v2787 = vadd.f32 %v2786, %v2756
    %v2788 = vadd.f32 %v2787, %v2757
    %v2789 = vadd.f32 %v2788, %v2758
    %v2790 = vadd.f32 %v2789, %v2759
    %v2791 = vadd.f32 %v2790, %v2760
    %v2792 = vadd.f32 %v2791, %v2761
    %v2793 = vadd.f32 %v2792, %v2762
    %v2794 = vadd.f32 %v2793, %v2763
    %v2795 = vadd.f32 %v2794, %v2764
    %v2796 = vadd.f32 %v2795, %v2765
    %v2797 = vadd.f32 %v2796, %v2766
    %v2798 = vadd.f32 %v2797, %v2767
    %v2799 = vadd.f32 %v2798, %v2768
    %v2800 = vadd.f32 %v2799, %v2769
    %v2801 = vadd.f32 %v2800, %v2770
    %v2802 = vadd.f32 %v2801, %v2771
    %v2803 = vadd.f32 %v2802, %v2772
    %v2804 = vadd.f32 %v2803, %v2773
    %v2805 = vadd.f32 %v2804, %v2774
    %v2806 = vadd.f32 %v2805, %v2775
    %v2807 = vadd.f32 %v2806, %v2776
    %v2808 = vadd.f32 %v2807, %v2777
    %v2809 = vadd.f32 %v2808, %v2778
    %v2810 = vadd.f32 %v2809, %v2779
    %v2811 = vadd.f32 %v2810, %v2780
    %v2812 = vadd.f32 %v2811, %v2781
    %v2813 = vrot.slane %v2812, 4
    %v2814 = vadd.f32 %v2812, %v2813
    %v2815 = vrot.slane %v2814, 2
    %v2816 = vadd.f32 %v2814, %v2815
    %v2817 = vrot.slane %v2816, 1
    %v2818 = vadd.f32 %v2816, %v2817
    %v2819 = vmul.f32 %v2818, 0.00390625
    %v2820 = vadd.f32 %v2819, 1e-05
    %v2821 = vrsqrt.pop %v2820
    %v2822 = vmul.f32 %v2821, %v2820
    %v2823 = vmul.f32 %v2822, %v2821
    %v2824 = vmul.f32 0.5, %v2823
    %v2825 = vsub.f32 1.5, %v2824
    %v2826 = vmul.f32 %v2821, %v2825
    %vm2827 = vweird.f32 %v2820
    %vm2828 = vweird.f32 %v2821
    %vm2829 = vmor %vm2827, %vm2828
    %v2830 = vsel %vm2829, %v2821, %v2826
    %v2831 = vmul.f32 %v2718, %v2830
    %v2832 = vmul.f32 %v2719, %v2830
    %v2833 = vmul.f32 %v2720, %v2830
    %v2834 = vmul.f32 %v2721, %v2830
    %v2835 = vmul.f32 %v2722, %v2830
    %v2836 = vmul.f32 %v2723, %v2830
    %v2837 = vmul.f32 %v2724, %v2830
    %v2838 = vmul.f32 %v2725, %v2830
    %v2839 = vmul.f32 %v2726, %v2830
    %v2840 = vmul.f32 %v2727, %v2830
    %v2841 = vmul.f32 %v2728, %v2830
    %v2842 = vmul.f32 %v2729, %v2830
    %v2843 = vmul.f32 %v2730, %v2830
    %v2844 = vmul.f32 %v2731, %v2830
    %v2845 = vmul.f32 %v2732, %v2830
    %v2846 = vmul.f32 %v2733, %v2830
    %v2847 = vmul.f32 %v2734, %v2830
    %v2848 = vmul.f32 %v2735, %v2830
    %v2849 = vmul.f32 %v2736, %v2830
    %v2850 = vmul.f32 %v2737, %v2830
    %v2851 = vmul.f32 %v2738, %v2830
    %v2852 = vmul.f32 %v2739, %v2830
    %v2853 = vmul.f32 %v2740, %v2830
    %v2854 = vmul.f32 %v2741, %v2830
    %v2855 = vmul.f32 %v2742, %v2830
    %v2856 = vmul.f32 %v2743, %v2830
    %v2857 = vmul.f32 %v2744, %v2830
    %v2858 = vmul.f32 %v2745, %v2830
    %v2859 = vmul.f32 %v2746, %v2830
    %v2860 = vmul.f32 %v2747, %v2830
    %v2861 = vmul.f32 %v2748, %v2830
    %v2862 = vmul.f32 %v2749, %v2830
    %v2864 = vperm.slane %v2678, 0
    %v2866 = vmul.f32 %v2831, %v2864
    %v2867 = vmul.f32 %v2832, %v2864
    %v2868 = vmul.f32 %v2833, %v2864
    %v2869 = vmul.f32 %v2834, %v2864
    %v2870 = vmul.f32 %v2835, %v2864
    %v2871 = vmul.f32 %v2836, %v2864
    %v2872 = vmul.f32 %v2837, %v2864
    %v2873 = vmul.f32 %v2838, %v2864
    %v2874 = vmul.f32 %v2839, %v2864
    %v2875 = vmul.f32 %v2840, %v2864
    %v2876 = vmul.f32 %v2841, %v2864
    %v2877 = vmul.f32 %v2842, %v2864
    %v2878 = vmul.f32 %v2843, %v2864
    %v2879 = vmul.f32 %v2844, %v2864
    %v2880 = vmul.f32 %v2845, %v2864
    %v2881 = vmul.f32 %v2846, %v2864
    %v2882 = vmul.f32 %v2847, %v2864
    %v2883 = vmul.f32 %v2848, %v2864
    %v2884 = vmul.f32 %v2849, %v2864
    %v2885 = vmul.f32 %v2850, %v2864
    %v2886 = vmul.f32 %v2851, %v2864
    %v2887 = vmul.f32 %v2852, %v2864
    %v2888 = vmul.f32 %v2853, %v2864
    %v2889 = vmul.f32 %v2854, %v2864
    %v2890 = vmul.f32 %v2855, %v2864
    %v2891 = vmul.f32 %v2856, %v2864
    %v2892 = vmul.f32 %v2857, %v2864
    %v2893 = vmul.f32 %v2858, %v2864
    %v2894 = vmul.f32 %v2859, %v2864
    %v2895 = vmul.f32 %v2860, %v2864
    %v2896 = vmul.f32 %v2861, %v2864
    %v2897 = vmul.f32 %v2862, %v2864
    %v2899 = vperm.slane %v2679, 0
    %v2901 = vadd.f32 %v2866, %v2899
    %v2902 = vadd.f32 %v2867, %v2899
    %v2903 = vadd.f32 %v2868, %v2899
    %v2904 = vadd.f32 %v2869, %v2899
    %v2905 = vadd.f32 %v2870, %v2899
    %v2906 = vadd.f32 %v2871, %v2899
    %v2907 = vadd.f32 %v2872, %v2899
    %v2908 = vadd.f32 %v2873, %v2899
    %v2909 = vadd.f32 %v2874, %v2899
    %v2910 = vadd.f32 %v2875, %v2899
    %v2911 = vadd.f32 %v2876, %v2899
    %v2912 = vadd.f32 %v2877, %v2899
    %v2913 = vadd.f32 %v2878, %v2899
    %v2914 = vadd.f32 %v2879, %v2899
    %v2915 = vadd.f32 %v2880, %v2899
    %v2916 = vadd.f32 %v2881, %v2899
    %v2917 = vadd.f32 %v2882, %v2899
    %v2918 = vadd.f32 %v2883, %v2899
    %v2919 = vadd.f32 %v2884, %v2899
    %v2920 = vadd.f32 %v2885, %v2899
    %v2921 = vadd.f32 %v2886, %v2899
    %v2922 = vadd.f32 %v2887, %v2899
    %v2923 = vadd.f32 %v2888, %v2899
    %v2924 = vadd.f32 %v2889, %v2899
    %v2925 = vadd.f32 %v2890, %v2899
    %v2926 = vadd.f32 %v2891, %v2899
    %v2927 = vadd.f32 %v2892, %v2899
    %v2928 = vadd.f32 %v2893, %v2899
    %v2929 = vadd.f32 %v2894, %v2899
    %v2930 = vadd.f32 %v2895, %v2899
    %v2931 = vadd.f32 %v2896, %v2899
    %v2932 = vadd.f32 %v2897, %v2899
    %v2933 = vmax.f32 %v2901, 0.0
    %v2934 = vmax.f32 %v2902, 0.0
    %v2935 = vmax.f32 %v2903, 0.0
    %v2936 = vmax.f32 %v2904, 0.0
    %v2937 = vmax.f32 %v2905, 0.0
    %v2938 = vmax.f32 %v2906, 0.0
    %v2939 = vmax.f32 %v2907, 0.0
    %v2940 = vmax.f32 %v2908, 0.0
    %v2941 = vmax.f32 %v2909, 0.0
    %v2942 = vmax.f32 %v2910, 0.0
    %v2943 = vmax.f32 %v2911, 0.0
    %v2944 = vmax.f32 %v2912, 0.0
    %v2945 = vmax.f32 %v2913, 0.0
    %v2946 = vmax.f32 %v2914, 0.0
    %v2947 = vmax.f32 %v2915, 0.0
    %v2948 = vmax.f32 %v2916, 0.0
    %v2949 = vmax.f32 %v2917, 0.0
    %v2950 = vmax.f32 %v2918, 0.0
    %v2951 = vmax.f32 %v2919, 0.0
    %v2952 = vmax.f32 %v2920, 0.0
    %v2953 = vmax.f32 %v2921, 0.0
    %v2954 = vmax.f32 %v2922, 0.0
    %v2955 = vmax.f32 %v2923, 0.0
    %v2956 = vmax.f32 %v2924, 0.0
    %v2957 = vmax.f32 %v2925, 0.0
    %v2958 = vmax.f32 %v2926, 0.0
    %v2959 = vmax.f32 %v2927, 0.0
    %v2960 = vmax.f32 %v2928, 0.0
    %v2961 = vmax.f32 %v2929, 0.0
    %v2962 = vmax.f32 %v2930, 0.0
    %v2963 = vmax.f32 %v2931, 0.0
    %v2964 = vmax.f32 %v2932, 0.0
    %2965 = vst [vmem:[#allocation3] sm:$0xff] 0.0
    %2966 = vst [vmem:[#allocation3 + $0x8] sm:$0xff] 0.0
    %2967 = vst [vmem:[#allocation3 + $0x10] sm:$0xff] 0.0
    %2968 = vst [vmem:[#allocation3 + $0x18] sm:$0xff] 0.0
    %2969 = vst [vmem:[#allocation3 + $0x20] sm:$0xff] 0.0
    %2970 = vst [vmem:[#allocation3 + $0x28] sm:$0xff] 0.0
    %2971 = vst [vmem:[#allocation3 + $0x30] sm:$0xff] 0.0
    %2972 = vst [vmem:[#allocation3 + $0x38] sm:$0xff] 0.0
    %2973 = vst [vmem:[#allocation3 + $0x40] sm:$0xff] 0.0
    %2974 = vst [vmem:[#allocation3 + $0x48] sm:$0xff] 0.0
    %2975 = vst [vmem:[#allocation3 + $0x50] sm:$0xff] 0.0
    %2976 = vst [vmem:[#allocation3 + $0x58] sm:$0xff] 0.0
    %2977 = vst [vmem:[#allocation3 + $0x60] sm:$0xff] 0.0
    %2978 = vst [vmem:[#allocation3 + $0x68] sm:$0xff] 0.0
    %2979 = vst [vmem:[#allocation3 + $0x70] sm:$0xff] 0.0
    %2980 = vst [vmem:[#allocation3 + $0x78] sm:$0xff] 0.0
    %2981 = vst [vmem:[#allocation3 + $0x80] sm:$0xff] 0.0
    %2982 = vst [vmem:[#allocation3 + $0x88] sm:$0xff] 0.0
    %2983 = vst [vmem:[#allocation3 + $0x90] sm:$0xff] 0.0
    %2984 = vst [vmem:[#allocation3 + $0x98] sm:$0xff] 0.0
    %2985 = vst [vmem:[#allocation3 + $0xa0] sm:$0xff] 0.0
    %2986 = vst [vmem:[#allocation3 + $0xa8] sm:$0xff] 0.0
    %2987 = vst [vmem:[#allocation3 + $0xb0] sm:$0xff] 0.0
    %2988 = vst [vmem:[#allocation3 + $0xb8] sm:$0xff] 0.0
    %2989 = vst [vmem:[#allocation3 + $0xc0] sm:$0xff] 0.0
    %2990 = vst [vmem:[#allocation3 + $0xc8] sm:$0xff] 0.0
    %2991 = vst [vmem:[#allocation3 + $0xd0] sm:$0xff] 0.0
    %2992 = vst [vmem:[#allocation3 + $0xd8] sm:$0xff] 0.0
    %2993 = vst [vmem:[#allocation3 + $0xe0] sm:$0xff] 0.0
    %2994 = vst [vmem:[#allocation3 + $0xe8] sm:$0xff] 0.0
    %2995 = vst [vmem:[#allocation3 + $0xf0] sm:$0xff] 0.0
    %2996 = vst [vmem:[#allocation3 + $0xf8] sm:$0xff] 0.0
    %2997 = vst [vmem:[#allocation3 + $0x100] sm:$0xff] 0.0
    %2998 = vst [vmem:[#allocation3 + $0x108] sm:$0xff] 0.0
    %2999 = vst [vmem:[#allocation3 + $0x110] sm:$0xff] 0.0
    %3000 = vst [vmem:[#allocation3 + $0x118] sm:$0xff] 0.0
    %3001 = vst [vmem:[#allocation3 + $0x8] sm:$0xff] %v2933
    %3002 = vst [vmem:[#allocation3 + $0x10] sm:$0xff] %v2934
    %3003 = vst [vmem:[#allocation3 + $0x18] sm:$0xff] %v2935
    %3004 = vst [vmem:[#allocation3 + $0x20] sm:$0xff] %v2936
    %3005 = vst [vmem:[#allocation3 + $0x28] sm:$0xff] %v2937
    %3006 = vst [vmem:[#allocation3 + $0x30] sm:$0xff] %v2938
    %3007 = vst [vmem:[#allocation3 + $0x38] sm:$0xff] %v2939
    %3008 = vst [vmem:[#allocation3 + $0x40] sm:$0xff] %v2940
    %3009 = vst [vmem:[#allocation3 + $0x48] sm:$0xff] %v2941
    %3010 = vst [vmem:[#allocation3 + $0x50] sm:$0xff] %v2942
    %3011 = vst [vmem:[#allocation3 + $0x58] sm:$0xff] %v2943
    %3012 = vst [vmem:[#allocation3 + $0x60] sm:$0xff] %v2944
    %3013 = vst [vmem:[#allocation3 + $0x68] sm:$0xff] %v2945
    %3014 = vst [vmem:[#allocation3 + $0x70] sm:$0xff] %v2946
    %3015 = vst [vmem:[#allocation3 + $0x78] sm:$0xff] %v2947
    %3016 = vst [vmem:[#allocation3 + $0x80] sm:$0xff] %v2948
    %3017 = vst [vmem:[#allocation3 + $0x98] sm:$0xff] %v2949
    %3018 = vst [vmem:[#allocation3 + $0xa0] sm:$0xff] %v2950
    %3019 = vst [vmem:[#allocation3 + $0xa8] sm:$0xff] %v2951
    %3020 = vst [vmem:[#allocation3 + $0xb0] sm:$0xff] %v2952
    %3021 = vst [vmem:[#allocation3 + $0xb8] sm:$0xff] %v2953
    %3022 = vst [vmem:[#allocation3 + $0xc0] sm:$0xff] %v2954
    %3023 = vst [vmem:[#allocation3 + $0xc8] sm:$0xff] %v2955
    %3024 = vst [vmem:[#allocation3 + $0xd0] sm:$0xff] %v2956
    %3025 = vst [vmem:[#allocation3 + $0xd8] sm:$0xff] %v2957
    %3026 = vst [vmem:[#allocation3 + $0xe0] sm:$0xff] %v2958
    %3027 = vst [vmem:[#allocation3 + $0xe8] sm:$0xff] %v2959
    %3028 = vst [vmem:[#allocation3 + $0xf0] sm:$0xff] %v2960
    %3029 = vst [vmem:[#allocation3 + $0xf8] sm:$0xff] %v2961
    %3030 = vst [vmem:[#allocation3 + $0x100] sm:$0xff] %v2962
    %3031 = vst [vmem:[#allocation3 + $0x108] sm:$0xff] %v2963
    %3032 = vst [vmem:[#allocation3 + $0x110] sm:$0xff] %v2964
    %v3033 = vld [vmem:[#allocation3 + $0x4] sm:$0xff]
    %v3034 = vld [vmem:[#allocation3 + $0xc] sm:$0xff]
    %v3035 = vld [vmem:[#allocation3 + $0x14] sm:$0xff]
    %v3036 = vld [vmem:[#allocation3 + $0x1c] sm:$0xff]
    %v3037 = vld [vmem:[#allocation3 + $0x24] sm:$0xff]
    %v3038 = vld [vmem:[#allocation3 + $0x2c] sm:$0xff]
    %v3039 = vld [vmem:[#allocation3 + $0x34] sm:$0xff]
    %v3040 = vld [vmem:[#allocation3 + $0x3c] sm:$0xff]
    %v3041 = vld [vmem:[#allocation3 + $0x44] sm:$0xff]
    %v3042 = vld [vmem:[#allocation3 + $0x4c] sm:$0xff]
    %v3043 = vld [vmem:[#allocation3 + $0x54] sm:$0xff]
    %v3044 = vld [vmem:[#allocation3 + $0x5c] sm:$0xff]
    %v3045 = vld [vmem:[#allocation3 + $0x64] sm:$0xff]
    %v3046 = vld [vmem:[#allocation3 + $0x6c] sm:$0xff]
    %v3047 = vld [vmem:[#allocation3 + $0x74] sm:$0xff]
    %v3048 = vld [vmem:[#allocation3 + $0x7c] sm:$0xff]
    %v3049 = vld [vmem:[#allocation3 + $0x94] sm:$0xff]
    %v3050 = vld [vmem:[#allocation3 + $0x9c] sm:$0xff]
    %v3051 = vld [vmem:[#allocation3 + $0xa4] sm:$0xff]
    %v3052 = vld [vmem:[#allocation3 + $0xac] sm:$0xff]
    %v3053 = vld [vmem:[#allocation3 + $0xb4] sm:$0xff]
    %v3054 = vld [vmem:[#allocation3 + $0xbc] sm:$0xff]
    %v3055 = vld [vmem:[#allocation3 + $0xc4] sm:$0xff]
    %v3056 = vld [vmem:[#allocation3 + $0xcc] sm:$0xff]
    %v3057 = vld [vmem:[#allocation3 + $0xd4] sm:$0xff]
    %v3058 = vld [vmem:[#allocation3 + $0xdc] sm:$0xff]
    %v3059 = vld [vmem:[#allocation3 + $0xe4] sm:$0xff]
    %v3060 = vld [vmem:[#allocation3 + $0xec] sm:$0xff]
    %v3061 = vld [vmem:[#allocation3 + $0xf4] sm:$0xff]
    %v3062 = vld [vmem:[#allocation3 + $0xfc] sm:$0xff]
    %v3063 = vld [vmem:[#allocation3 + $0x104] sm:$0xff]
    %v3064 = vld [vmem:[#allocation3 + $0x10c] sm:$0xff]
    %v3065 = vld [vmem:[#allocation6] sm:$0xff]
    %v3066 = vld [vmem:[#allocation6 + $0x8] sm:$0xff]
    %v3067 = vld [vmem:[#allocation6 + $0x10] sm:$0xff]
    %v3068 = vld [vmem:[#allocation6 + $0x18] sm:$0xff]
    %v3069 = vld [vmem:[#allocation6 + $0x20] sm:$0xff]
    %v3070 = vld [vmem:[#allocation6 + $0x28] sm:$0xff]
    %v3071 = vld [vmem:[#allocation6 + $0x30] sm:$0xff]
    %v3072 = vld [vmem:[#allocation6 + $0x38] sm:$0xff]
    %v3073 = vld [vmem:[#allocation6 + $0x40] sm:$0xff]
    %v3074 = vld [vmem:[#allocation6 + $0x48] sm:$0xff]
    %v3075 = vld [vmem:[#allocation6 + $0x50] sm:$0xff]
    %v3076 = vld [vmem:[#allocation6 + $0x58] sm:$0xff]
    %v3077 = vld [vmem:[#allocation6 + $0x60] sm:$0xff]
    %v3078 = vld [vmem:[#allocation6 + $0x68] sm:$0xff]
    %v3079 = vld [vmem:[#allocation6 + $0x70] sm:$0xff]
    %v3080 = vld [vmem:[#allocation6 + $0x78] sm:$0xff]
    %v3081 = vld [vmem:[#allocation3 + $0x5] sm:$0xff]
    %v3082 = vld [vmem:[#allocation3 + $0xd] sm:$0xff]
    %v3083 = vld [vmem:[#allocation3 + $0x15] sm:$0xff]
    %v3084 = vld [vmem:[#allocation3 + $0x1d] sm:$0xff]
    %v3085 = vld [vmem:[#allocation3 + $0x25] sm:$0xff]
    %v3086 = vld [vmem:[#allocation3 + $0x2d] sm:$0xff]
    %v3087 = vld [vmem:[#allocation3 + $0x35] sm:$0xff]
    %v3088 = vld [vmem:[#allocation3 + $0x3d] sm:$0xff]
    %v3089 = vld [vmem:[#allocation3 + $0x45] sm:$0xff]
    %v3090 = vld [vmem:[#allocation3 + $0x4d] sm:$0xff]
    %v3091 = vld [vmem:[#allocation3 + $0x55] sm:$0xff]
    %v3092 = vld [vmem:[#allocation3 + $0x5d] sm:$0xff]
    %v3093 = vld [vmem:[#allocation3 + $0x65] sm:$0xff]
    %v3094 = vld [vmem:[#allocation3 + $0x6d] sm:$0xff]
    %v3095 = vld [vmem:[#allocation3 + $0x75] sm:$0xff]
    %v3096 = vld [vmem:[#allocation3 + $0x7d] sm:$0xff]
    %v3097 = vld [vmem:[#allocation3 + $0x95] sm:$0xff]
    %v3098 = vld [vmem:[#allocation3 + $0x9d] sm:$0xff]
    %v3099 = vld [vmem:[#allocation3 + $0xa5] sm:$0xff]
    %v3100 = vld [vmem:[#allocation3 + $0xad] sm:$0xff]
    %v3101 = vld [vmem:[#allocation3 + $0xb5] sm:$0xff]
    %v3102 = vld [vmem:[#allocation3 + $0xbd] sm:$0xff]
    %v3103 = vld [vmem:[#allocation3 + $0xc5] sm:$0xff]
    %v3104 = vld [vmem:[#allocation3 + $0xcd] sm:$0xff]
    %v3105 = vld [vmem:[#allocation3 + $0xd5] sm:$0xff]
    %v3106 = vld [vmem:[#allocation3 + $0xdd] sm:$0xff]
    %v3107 = vld [vmem:[#allocation3 + $0xe5] sm:$0xff]
    %v3108 = vld [vmem:[#allocation3 + $0xed] sm:$0xff]
    %v3109 = vld [vmem:[#allocation3 + $0xf5] sm:$0xff]
    %v3110 = vld [vmem:[#allocation3 + $0xfd] sm:$0xff]
    %v3111 = vld [vmem:[#allocation3 + $0x105] sm:$0xff]
    %v3112 = vld [vmem:[#allocation3 + $0x10d] sm:$0xff]
    %v3113 = vld [vmem:[#allocation6 + $0x80] sm:$0xff]
    %v3114 = vld [vmem:[#allocation6 + $0x88] sm:$0xff]
    %v3115 = vld [vmem:[#allocation6 + $0x90] sm:$0xff]
    %v3116 = vld [vmem:[#allocation6 + $0x98] sm:$0xff]
    %v3117 = vld [vmem:[#allocation6 + $0xa0] sm:$0xff]
    %v3118 = vld [vmem:[#allocation6 + $0xa8] sm:$0xff]
    %v3119 = vld [vmem:[#allocation6 + $0xb0] sm:$0xff]
    %v3120 = vld [vmem:[#allocation6 + $0xb8] sm:$0xff]
    %v3121 = vld [vmem:[#allocation6 + $0xc0] sm:$0xff]
    %v3122 = vld [vmem:[#allocation6 + $0xc8] sm:$0xff]
    %v3123 = vld [vmem:[#allocation6 + $0xd0] sm:$0xff]
    %v3124 = vld [vmem:[#allocation6 + $0xd8] sm:$0xff]
    %v3125 = vld [vmem:[#allocation6 + $0xe0] sm:$0xff]
    %v3126 = vld [vmem:[#allocation6 + $0xe8] sm:$0xff]
    %v3127 = vld [vmem:[#allocation6 + $0xf0] sm:$0xff]
    %v3128 = vld [vmem:[#allocation6 + $0xf8] sm:$0xff]
    %3129 = vmatpush.msra.mxu0 %v3128
    %3130 = vmatpush.msra.mxu0 %v3127
    %3131 = vmatpush.msra.mxu0 %v3126
    %3132 = vmatpush.msra.mxu0 %v3125
    %3133 = vmatpush.msra.mxu0 %v3124
    %3134 = vmatpush.msra.mxu0 %v3123
    %3135 = vmatpush.msra.mxu0 %v3122
    %3136 = vmatpush.msra.mxu0 %v3121
    %3137 = vmatpush.msra.mxu0 %v3120
    %3138 = vmatpush.msra.mxu0 %v3119
    %3139 = vmatpush.msra.mxu0 %v3118
    %3140 = vmatpush.msra.mxu0 %v3117
    %3141 = vmatpush.msra.mxu0 %v3116
    %3142 = vmatpush.msra.mxu0 %v3115
    %3143 = vmatpush.msra.mxu0 %v3114
    %3144 = vmatpush.msra.mxu0 %v3113
    %3145 = vmatmul.f32.gmra.mxu0 %v3081
    %v3146 = vpop.f32.mrf.mxu0
    %v3147 = vadd.f32 0.0, %v3146
    %3148 = vmatmul.f32.gmra.mxu0 %v3082
    %v3149 = vpop.f32.mrf.mxu0
    %v3150 = vadd.f32 0.0, %v3149
    %3151 = vmatmul.f32.gmra.mxu0 %v3083
    %v3152 = vpop.f32.mrf.mxu0
    %v3153 = vadd.f32 0.0, %v3152
    %3154 = vmatmul.f32.gmra.mxu0 %v3084
    %v3155 = vpop.f32.mrf.mxu0
    %v3156 = vadd.f32 0.0, %v3155
    %3157 = vmatmul.f32.gmra.mxu0 %v3085
    %v3158 = vpop.f32.mrf.mxu0
    %v3159 = vadd.f32 0.0, %v3158
    %3160 = vmatmul.f32.gmra.mxu0 %v3086
    %v3161 = vpop.f32.mrf.mxu0
    %v3162 = vadd.f32 0.0, %v3161
    %3163 = vmatmul.f32.gmra.mxu0 %v3087
    %v3164 = vpop.f32.mrf.mxu0
    %v3165 = vadd.f32 0.0, %v3164
    %3166 = vmatmul.f32.gmra.mxu0 %v3088
    %v3167 = vpop.f32.mrf.mxu0
    %v3168 = vadd.f32 0.0, %v3167
    %3169 = vmatmul.f32.gmra.mxu0 %v3089
    %v3170 = vpop.f32.mrf.mxu0
    %v3171 = vadd.f32 0.0, %v3170
    %3172 = vmatmul.f32.gmra.mxu0 %v3090
    %v3173 = vpop.f32.mrf.mxu0
    %v3174 = vadd.f32 0.0, %v3173
    %3175 = vmatmul.f32.gmra.mxu0 %v3091
    %v3176 = vpop.f32.mrf.mxu0
    %v3177 = vadd.f32 0.0, %v3176
    %3178 = vmatmul.f32.gmra.mxu0 %v3092
    %v3179 = vpop.f32.mrf.mxu0
    %v3180 = vadd.f32 0.0, %v3179
    %3181 = vmatmul.f32.gmra.mxu0 %v3093
    %v3182 = vpop.f32.mrf.mxu0
    %v3183 = vadd.f32 0.0, %v3182
    %3184 = vmatmul.f32.gmra.mxu0 %v3094
    %v3185 = vpop.f32.mrf.mxu0
    %v3186 = vadd.f32 0.0, %v3185
    %3187 = vmatmul.f32.gmra.mxu0 %v3095
    %v3188 = vpop.f32.mrf.mxu0
    %v3189 = vadd.f32 0.0, %v3188
    %3190 = vmatmul.f32.gmra.mxu0 %v3096
    %v3191 = vpop.f32.mrf.mxu0
    %v3192 = vadd.f32 0.0, %v3191
    %3193 = vmatmul.f32.gmra.mxu0 %v3097
    %v3194 = vpop.f32.mrf.mxu0
    %v3195 = vadd.f32 0.0, %v3194
    %3196 = vmatmul.f32.gmra.mxu0 %v3098
    %v3197 = vpop.f32.mrf.mxu0
    %v3198 = vadd.f32 0.0, %v3197
    %3199 = vmatmul.f32.gmra.mxu0 %v3099
    %v3200 = vpop.f32.mrf.mxu0
    %v3201 = vadd.f32 0.0, %v3200
    %3202 = vmatmul.f32.gmra.mxu0 %v3100
    %v3203 = vpop.f32.mrf.mxu0
    %v3204 = vadd.f32 0.0, %v3203
    %3205 = vmatmul.f32.gmra.mxu0 %v3101
    %v3206 = vpop.f32.mrf.mxu0
    %v3207 = vadd.f32 0.0, %v3206
    %3208 = vmatmul.f32.gmra.mxu0 %v3102
    %v3209 = vpop.f32.mrf.mxu0
    %v3210 = vadd.f32 0.0, %v3209
    %3211 = vmatmul.f32.gmra.mxu0 %v3103
    %v3212 = vpop.f32.mrf.mxu0
    %v3213 = vadd.f32 0.0, %v3212
    %3214 = vmatmul.f32.gmra.mxu0 %v3104
    %v3215 = vpop.f32.mrf.mxu0
    %v3216 = vadd.f32 0.0, %v3215
    %3217 = vmatmul.f32.gmra.mxu0 %v3105
    %v3218 = vpop.f32.mrf.mxu0
    %v3219 = vadd.f32 0.0, %v3218
    %3220 = vmatmul.f32.gmra.mxu0 %v3106
    %v3221 = vpop.f32.mrf.mxu0
    %v3222 = vadd.f32 0.0, %v3221
    %3223 = vmatmul.f32.gmra.mxu0 %v3107
    %v3224 = vpop.f32.mrf.mxu0
    %v3225 = vadd.f32 0.0, %v3224
    %3226 = vmatmul.f32.gmra.mxu0 %v3108
    %v3227 = vpop.f32.mrf.mxu0
    %v3228 = vadd.f32 0.0, %v3227
    %3229 = vmatmul.f32.gmra.mxu0 %v3109
    %v3230 = vpop.f32.mrf.mxu0
    %v3231 = vadd.f32 0.0, %v3230
    %3232 = vmatmul.f32.gmra.mxu0 %v3110
    %v3233 = vpop.f32.mrf.mxu0
    %v3234 = vadd.f32 0.0, %v3233
    %3235 = vmatmul.f32.gmra.mxu0 %v3111
    %v3236 = vpop.f32.mrf.mxu0
    %v3237 = vadd.f32 0.0, %v3236
    %3238 = vmatmul.f32.gmra.mxu0 %v3112
    %v3239 = vpop.f32.mrf.mxu0
    %v3240 = vadd.f32 0.0, %v3239
    %3241 = vdwg.mxu0
    %3242 = vmatpush.msra.mxu0 %v3080
    %3243 = vmatpush.msra.mxu0 %v3079
    %3244 = vmatpush.msra.mxu0 %v3078
    %3245 = vmatpush.msra.mxu0 %v3077
    %3246 = vmatpush.msra.mxu0 %v3076
    %3247 = vmatpush.msra.mxu0 %v3075
    %3248 = vmatpush.msra.mxu0 %v3074
    %3249 = vmatpush.msra.mxu0 %v3073
    %3250 = vmatpush.msra.mxu0 %v3072
    %3251 = vmatpush.msra.mxu0 %v3071
    %3252 = vmatpush.msra.mxu0 %v3070
    %3253 = vmatpush.msra.mxu0 %v3069
    %3254 = vmatpush.msra.mxu0 %v3068
    %3255 = vmatpush.msra.mxu0 %v3067
    %3256 = vmatpush.msra.mxu0 %v3066
    %3257 = vmatpush.msra.mxu0 %v3065
    %3258 = vmatmul.f32.gmra.mxu0 %v3033
    %v3259 = vpop.f32.mrf.mxu0
    %v3260 = vadd.f32 %v3147, %v3259
    %3261 = vmatmul.f32.gmra.mxu0 %v3034
    %v3262 = vpop.f32.mrf.mxu0
    %v3263 = vadd.f32 %v3150, %v3262
    %3264 = vmatmul.f32.gmra.mxu0 %v3035
    %v3265 = vpop.f32.mrf.mxu0
    %v3266 = vadd.f32 %v3153, %v3265
    %3267 = vmatmul.f32.gmra.mxu0 %v3036
    %v3268 = vpop.f32.mrf.mxu0
    %v3269 = vadd.f32 %v3156, %v3268
    %3270 = vmatmul.f32.gmra.mxu0 %v3037
    %v3271 = vpop.f32.mrf.mxu0
    %v3272 = vadd.f32 %v3159, %v3271
    %3273 = vmatmul.f32.gmra.mxu0 %v3038
    %v3274 = vpop.f32.mrf.mxu0
    %v3275 = vadd.f32 %v3162, %v3274
    %3276 = vmatmul.f32.gmra.mxu0 %v3039
    %v3277 = vpop.f32.mrf.mxu0
    %v3278 = vadd.f32 %v3165, %v3277
    %3279 = vmatmul.f32.gmra.mxu0 %v3040
    %v3280 = vpop.f32.mrf.mxu0
    %v3281 = vadd.f32 %v3168, %v3280
    %3282 = vmatmul.f32.gmra.mxu0 %v3041
    %v3283 = vpop.f32.mrf.mxu0
    %v3284 = vadd.f32 %v3171, %v3283
    %3285 = vmatmul.f32.gmra.mxu0 %v3042
    %v3286 = vpop.f32.mrf.mxu0
    %v3287 = vadd.f32 %v3174, %v3286
    %3288 = vmatmul.f32.gmra.mxu0 %v3043
    %v3289 = vpop.f32.mrf.mxu0
    %v3290 = vadd.f32 %v3177, %v3289
    %3291 = vmatmul.f32.gmra.mxu0 %v3044
    %v3292 = vpop.f32.mrf.mxu0
    %v3293 = vadd.f32 %v3180, %v3292
    %3294 = vmatmul.f32.gmra.mxu0 %v3045
    %v3295 = vpop.f32.mrf.mxu0
    %v3296 = vadd.f32 %v3183, %v3295
    %3297 = vmatmul.f32.gmra.mxu0 %v3046
    %v3298 = vpop.f32.mrf.mxu0
    %v3299 = vadd.f32 %v3186, %v3298
    %3300 = vmatmul.f32.gmra.mxu0 %v3047
    %v3301 = vpop.f32.mrf.mxu0
    %v3302 = vadd.f32 %v3189, %v3301
    %3303 = vmatmul.f32.gmra.mxu0 %v3048
    %v3304 = vpop.f32.mrf.mxu0
    %v3305 = vadd.f32 %v3192, %v3304
    %3306 = vmatmul.f32.gmra.mxu0 %v3049
    %v3307 = vpop.f32.mrf.mxu0
    %v3308 = vadd.f32 %v3195, %v3307
    %3309 = vmatmul.f32.gmra.mxu0 %v3050
    %v3310 = vpop.f32.mrf.mxu0
    %v3311 = vadd.f32 %v3198, %v3310
    %3312 = vmatmul.f32.gmra.mxu0 %v3051
    %v3313 = vpop.f32.mrf.mxu0
    %v3314 = vadd.f32 %v3201, %v3313
    %3315 = vmatmul.f32.gmra.mxu0 %v3052
    %v3316 = vpop.f32.mrf.mxu0
    %v3317 = vadd.f32 %v3204, %v3316
    %3318 = vmatmul.f32.gmra.mxu0 %v3053
    %v3319 = vpop.f32.mrf.mxu0
    %v3320 = vadd.f32 %v3207, %v3319
    %3321 = vmatmul.f32.gmra.mxu0 %v3054
    %v3322 = vpop.f32.mrf.mxu0
    %v3323 = vadd.f32 %v3210, %v3322
    %3324 = vmatmul.f32.gmra.mxu0 %v3055
    %v3325 = vpop.f32.mrf.mxu0
    %v3326 = vadd.f32 %v3213, %v3325
    %3327 = vmatmul.f32.gmra.mxu0 %v3056
    %v3328 = vpop.f32.mrf.mxu0
    %v3329 = vadd.f32 %v3216, %v3328
    %3330 = vmatmul.f32.gmra.mxu0 %v3057
    %v3331 = vpop.f32.mrf.mxu0
    %v3332 = vadd.f32 %v3219, %v3331
    %3333 = vmatmul.f32.gmra.mxu0 %v3058
    %v3334 = vpop.f32.mrf.mxu0
    %v3335 = vadd.f32 %v3222, %v3334
    %3336 = vmatmul.f32.gmra.mxu0 %v3059
    %v3337 = vpop.f32.mrf.mxu0
    %v3338 = vadd.f32 %v3225, %v3337
    %3339 = vmatmul.f32.gmra.mxu0 %v3060
    %v3340 = vpop.f32.mrf.mxu0
    %v3341 = vadd.f32 %v3228, %v3340
    %3342 = vmatmul.f32.gmra.mxu0 %v3061
    %v3343 = vpop.f32.mrf.mxu0
    %v3344 = vadd.f32 %v3231, %v3343
    %3345 = vmatmul.f32.gmra.mxu0 %v3062
    %v3346 = vpop.f32.mrf.mxu0
    %v3347 = vadd.f32 %v3234, %v3346
    %3348 = vmatmul.f32.gmra.mxu0 %v3063
    %v3349 = vpop.f32.mrf.mxu0
    %v3350 = vadd.f32 %v3237, %v3349
    %3351 = vmatmul.f32.gmra.mxu0 %v3064
    %v3352 = vpop.f32.mrf.mxu0
    %v3353 = vadd.f32 %v3240, %v3352
    %3354 = vdwg.mxu0
    %v3355 = vld [vmem:[#allocation3 + $0x6] sm:$0xff]
    %v3356 = vld [vmem:[#allocation3 + $0xe] sm:$0xff]
    %v3357 = vld [vmem:[#allocation3 + $0x16] sm:$0xff]
    %v3358 = vld [vmem:[#allocation3 + $0x1e] sm:$0xff]
    %v3359 = vld [vmem:[#allocation3 + $0x26] sm:$0xff]
    %v3360 = vld [vmem:[#allocation3 + $0x2e] sm:$0xff]
    %v3361 = vld [vmem:[#allocation3 + $0x36] sm:$0xff]
    %v3362 = vld [vmem:[#allocation3 + $0x3e] sm:$0xff]
    %v3363 = vld [vmem:[#allocation3 + $0x46] sm:$0xff]
    %v3364 = vld [vmem:[#allocation3 + $0x4e] sm:$0xff]
    %v3365 = vld [vmem:[#allocation3 + $0x56] sm:$0xff]
    %v3366 = vld [vmem:[#allocation3 + $0x5e] sm:$0xff]
    %v3367 = vld [vmem:[#allocation3 + $0x66] sm:$0xff]
    %v3368 = vld [vmem:[#allocation3 + $0x6e] sm:$0xff]
    %v3369 = vld [vmem:[#allocation3 + $0x76] sm:$0xff]
    %v3370 = vld [vmem:[#allocation3 + $0x7e] sm:$0xff]
    %v3371 = vld [vmem:[#allocation3 + $0x96] sm:$0xff]
    %v3372 = vld [vmem:[#allocation3 + $0x9e] sm:$0xff]
    %v3373 = vld [vmem:[#allocation3 + $0xa6] sm:$0xff]
    %v3374 = vld [vmem:[#allocation3 + $0xae] sm:$0xff]
    %v3375 = vld [vmem:[#allocation3 + $0xb6] sm:$0xff]
    %v3376 = vld [vmem:[#allocation3 + $0xbe] sm:$0xff]
    %v3377 = vld [vmem:[#allocation3 + $0xc6] sm:$0xff]
    %v3378 = vld [vmem:[#allocation3 + $0xce] sm:$0xff]
    %v3379 = vld [vmem:[#allocation3 + $0xd6] sm:$0xff]
    %v3380 = vld [vmem:[#allocation3 + $0xde] sm:$0xff]
    %v3381 = vld [vmem:[#allocation3 + $0xe6] sm:$0xff]
    %v3382 = vld [vmem:[#allocation3 + $0xee] sm:$0xff]
    %v3383 = vld [vmem:[#allocation3 + $0xf6] sm:$0xff]
    %v3384 = vld [vmem:[#allocation3 + $0xfe] sm:$0xff]
    %v3385 = vld [vmem:[#allocation3 + $0x106] sm:$0xff]
    %v3386 = vld [vmem:[#allocation3 + $0x10e] sm:$0xff]
    %v3387 = vld [vmem:[#allocation6 + $0x100] sm:$0xff]
    %v3388 = vld [vmem:[#allocation6 + $0x108] sm:$0xff]
    %v3389 = vld [vmem:[#allocation6 + $0x110] sm:$0xff]
    %v3390 = vld [vmem:[#allocation6 + $0x118] sm:$0xff]
    %v3391 = vld [vmem:[#allocation6 + $0x120] sm:$0xff]
    %v3392 = vld [vmem:[#allocation6 + $0x128] sm:$0xff]
    %v3393 = vld [vmem:[#allocation6 + $0x130] sm:$0xff]
    %v3394 = vld [vmem:[#allocation6 + $0x138] sm:$0xff]
    %v3395 = vld [vmem:[#allocation6 + $0x140] sm:$0xff]
    %v3396 = vld [vmem:[#allocation6 + $0x148] sm:$0xff]
    %v3397 = vld [vmem:[#allocation6 + $0x150] sm:$0xff]
    %v3398 = vld [vmem:[#allocation6 + $0x158] sm:$0xff]
    %v3399 = vld [vmem:[#allocation6 + $0x160] sm:$0xff]
    %v3400 = vld [vmem:[#allocation6 + $0x168] sm:$0xff]
    %v3401 = vld [vmem:[#allocation6 + $0x170] sm:$0xff]
    %v3402 = vld [vmem:[#allocation6 + $0x178] sm:$0xff]
    %3403 = vmatpush.msra.mxu0 %v3402
    %3404 = vmatpush.msra.mxu0 %v3401
    %3405 = vmatpush.msra.mxu0 %v3400
    %3406 = vmatpush.msra.mxu0 %v3399
    %3407 = vmatpush.msra.mxu0 %v3398
    %3408 = vmatpush.msra.mxu0 %v3397
    %3409 = vmatpush.msra.mxu0 %v3396
    %3410 = vmatpush.msra.mxu0 %v3395
    %3411 = vmatpush.msra.mxu0 %v3394
    %3412 = vmatpush.msra.mxu0 %v3393
    %3413 = vmatpush.msra.mxu0 %v3392
    %3414 = vmatpush.msra.mxu0 %v3391
    %3415 = vmatpush.msra.mxu0 %v3390
    %3416 = vmatpush.msra.mxu0 %v3389
    %3417 = vmatpush.msra.mxu0 %v3388
    %3418 = vmatpush.msra.mxu0 %v3387
    %3419 = vmatmul.f32.gmra.mxu0 %v3355
    %v3420 = vpop.f32.mrf.mxu0
    %v3421 = vadd.f32 0.0, %v3420
    %3422 = vmatmul.f32.gmra.mxu0 %v3356
    %v3423 = vpop.f32.mrf.mxu0
    %v3424 = vadd.f32 0.0, %v3423
    %3425 = vmatmul.f32.gmra.mxu0 %v3357
    %v3426 = vpop.f32.mrf.mxu0
    %v3427 = vadd.f32 0.0, %v3426
    %3428 = vmatmul.f32.gmra.mxu0 %v3358
    %v3429 = vpop.f32.mrf.mxu0
    %v3430 = vadd.f32 0.0, %v3429
    %3431 = vmatmul.f32.gmra.mxu0 %v3359
    %v3432 = vpop.f32.mrf.mxu0
    %v3433 = vadd.f32 0.0, %v3432
    %3434 = vmatmul.f32.gmra.mxu0 %v3360
    %v3435 = vpop.f32.mrf.mxu0
    %v3436 = vadd.f32 0.0, %v3435
    %3437 = vmatmul.f32.gmra.mxu0 %v3361
    %v3438 = vpop.f32.mrf.mxu0
    %v3439 = vadd.f32 0.0, %v3438
    %3440 = vmatmul.f32.gmra.mxu0 %v3362
    %v3441 = vpop.f32.mrf.mxu0
    %v3442 = vadd.f32 0.0, %v3441
    %3443 = vmatmul.f32.gmra.mxu0 %v3363
    %v3444 = vpop.f32.mrf.mxu0
    %v3445 = vadd.f32 0.0, %v3444
    %3446 = vmatmul.f32.gmra.mxu0 %v3364
    %v3447 = vpop.f32.mrf.mxu0
    %v3448 = vadd.f32 0.0, %v3447
    %3449 = vmatmul.f32.gmra.mxu0 %v3365
    %v3450 = vpop.f32.mrf.mxu0
    %v3451 = vadd.f32 0.0, %v3450
    %3452 = vmatmul.f32.gmra.mxu0 %v3366
    %v3453 = vpop.f32.mrf.mxu0
    %v3454 = vadd.f32 0.0, %v3453
    %3455 = vmatmul.f32.gmra.mxu0 %v3367
    %v3456 = vpop.f32.mrf.mxu0
    %v3457 = vadd.f32 0.0, %v3456
    %3458 = vmatmul.f32.gmra.mxu0 %v3368
    %v3459 = vpop.f32.mrf.mxu0
    %v3460 = vadd.f32 0.0, %v3459
    %3461 = vmatmul.f32.gmra.mxu0 %v3369
    %v3462 = vpop.f32.mrf.mxu0
    %v3463 = vadd.f32 0.0, %v3462
    %3464 = vmatmul.f32.gmra.mxu0 %v3370
    %v3465 = vpop.f32.mrf.mxu0
    %v3466 = vadd.f32 0.0, %v3465
    %3467 = vmatmul.f32.gmra.mxu0 %v3371
    %v3468 = vpop.f32.mrf.mxu0
    %v3469 = vadd.f32 0.0, %v3468
    %3470 = vmatmul.f32.gmra.mxu0 %v3372
    %v3471 = vpop.f32.mrf.mxu0
    %v3472 = vadd.f32 0.0, %v3471
    %3473 = vmatmul.f32.gmra.mxu0 %v3373
    %v3474 = vpop.f32.mrf.mxu0
    %v3475 = vadd.f32 0.0, %v3474
    %3476 = vmatmul.f32.gmra.mxu0 %v3374
    %v3477 = vpop.f32.mrf.mxu0
    %v3478 = vadd.f32 0.0, %v3477
    %3479 = vmatmul.f32.gmra.mxu0 %v3375
    %v3480 = vpop.f32.mrf.mxu0
    %v3481 = vadd.f32 0.0, %v3480
    %3482 = vmatmul.f32.gmra.mxu0 %v3376
    %v3483 = vpop.f32.mrf.mxu0
    %v3484 = vadd.f32 0.0, %v3483
    %3485 = vmatmul.f32.gmra.mxu0 %v3377
    %v3486 = vpop.f32.mrf.mxu0
    %v3487 = vadd.f32 0.0, %v3486
    %3488 = vmatmul.f32.gmra.mxu0 %v3378
    %v3489 = vpop.f32.mrf.mxu0
    %v3490 = vadd.f32 0.0, %v3489
    %3491 = vmatmul.f32.gmra.mxu0 %v3379
    %v3492 = vpop.f32.mrf.mxu0
    %v3493 = vadd.f32 0.0, %v3492
    %3494 = vmatmul.f32.gmra.mxu0 %v3380
    %v3495 = vpop.f32.mrf.mxu0
    %v3496 = vadd.f32 0.0, %v3495
    %3497 = vmatmul.f32.gmra.mxu0 %v3381
    %v3498 = vpop.f32.mrf.mxu0
    %v3499 = vadd.f32 0.0, %v3498
    %3500 = vmatmul.f32.gmra.mxu0 %v3382
    %v3501 = vpop.f32.mrf.mxu0
    %v3502 = vadd.f32 0.0, %v3501
    %3503 = vmatmul.f32.gmra.mxu0 %v3383
    %v3504 = vpop.f32.mrf.mxu0
    %v3505 = vadd.f32 0.0, %v3504
    %3506 = vmatmul.f32.gmra.mxu0 %v3384
    %v3507 = vpop.f32.mrf.mxu0
    %v3508 = vadd.f32 0.0, %v3507
    %3509 = vmatmul.f32.gmra.mxu0 %v3385
    %v3510 = vpop.f32.mrf.mxu0
    %v3511 = vadd.f32 0.0, %v3510
    %3512 = vmatmul.f32.gmra.mxu0 %v3386
    %v3513 = vpop.f32.mrf.mxu0
    %v3514 = vadd.f32 0.0, %v3513
    %3515 = vdwg.mxu0
    %v3516 = vadd.f32 %v3260, %v3421
    %v3517 = vadd.f32 %v3263, %v3424
    %v3518 = vadd.f32 %v3266, %v3427
    %v3519 = vadd.f32 %v3269, %v3430
    %v3520 = vadd.f32 %v3272, %v3433
    %v3521 = vadd.f32 %v3275, %v3436
    %v3522 = vadd.f32 %v3278, %v3439
    %v3523 = vadd.f32 %v3281, %v3442
    %v3524 = vadd.f32 %v3284, %v3445
    %v3525 = vadd.f32 %v3287, %v3448
    %v3526 = vadd.f32 %v3290, %v3451
    %v3527 = vadd.f32 %v3293, %v3454
    %v3528 = vadd.f32 %v3296, %v3457
    %v3529 = vadd.f32 %v3299, %v3460
    %v3530 = vadd.f32 %v3302, %v3463
    %v3531 = vadd.f32 %v3305, %v3466
    %v3532 = vadd.f32 %v3308, %v3469
    %v3533 = vadd.f32 %v3311, %v3472
    %v3534 = vadd.f32 %v3314, %v3475
    %v3535 = vadd.f32 %v3317, %v3478
    %v3536 = vadd.f32 %v3320, %v3481
    %v3537 = vadd.f32 %v3323, %v3484
    %v3538 = vadd.f32 %v3326, %v3487
    %v3539 = vadd.f32 %v3329, %v3490
    %v3540 = vadd.f32 %v3332, %v3493
    %v3541 = vadd.f32 %v3335, %v3496
    %v3542 = vadd.f32 %v3338, %v3499
    %v3543 = vadd.f32 %v3341, %v3502
    %v3544 = vadd.f32 %v3344, %v3505
    %v3545 = vadd.f32 %v3347, %v3508
    %v3546 = vadd.f32 %v3350, %v3511
    %v3547 = vadd.f32 %v3353, %v3514
    %v3548 = vld [vmem:[#allocation3 + $0x7] sm:$0xff]
    %v3549 = vld [vmem:[#allocation3 + $0xf] sm:$0xff]
    %v3550 = vld [vmem:[#allocation3 + $0x17] sm:$0xff]
    %v3551 = vld [vmem:[#allocation3 + $0x1f] sm:$0xff]
    %v3552 = vld [vmem:[#allocation3 + $0x27] sm:$0xff]
    %v3553 = vld [vmem:[#allocation3 + $0x2f] sm:$0xff]
    %v3554 = vld [vmem:[#allocation3 + $0x37] sm:$0xff]
    %v3555 = vld [vmem:[#allocation3 + $0x3f] sm:$0xff]
    %v3556 = vld [vmem:[#allocation3 + $0x47] sm:$0xff]
    %v3557 = vld [vmem:[#allocation3 + $0x4f] sm:$0xff]
    %v3558 = vld [vmem:[#allocation3 + $0x57] sm:$0xff]
    %v3559 = vld [vmem:[#allocation3 + $0x5f] sm:$0xff]
    %v3560 = vld [vmem:[#allocation3 + $0x67] sm:$0xff]
    %v3561 = vld [vmem:[#allocation3 + $0x6f] sm:$0xff]
    %v3562 = vld [vmem:[#allocation3 + $0x77] sm:$0xff]
    %v3563 = vld [vmem:[#allocation3 + $0x7f] sm:$0xff]
    %v3564 = vld [vmem:[#allocation3 + $0x97] sm:$0xff]
    %v3565 = vld [vmem:[#allocation3 + $0x9f] sm:$0xff]
    %v3566 = vld [vmem:[#allocation3 + $0xa7] sm:$0xff]
    %v3567 = vld [vmem:[#allocation3 + $0xaf] sm:$0xff]
    %v3568 = vld [vmem:[#allocation3 + $0xb7] sm:$0xff]
    %v3569 = vld [vmem:[#allocation3 + $0xbf] sm:$0xff]
    %v3570 = vld [vmem:[#allocation3 + $0xc7] sm:$0xff]
    %v3571 = vld [vmem:[#allocation3 + $0xcf] sm:$0xff]
    %v3572 = vld [vmem:[#allocation3 + $0xd7] sm:$0xff]
    %v3573 = vld [vmem:[#allocation3 + $0xdf] sm:$0xff]
    %v3574 = vld [vmem:[#allocation3 + $0xe7] sm:$0xff]
    %v3575 = vld [vmem:[#allocation3 + $0xef] sm:$0xff]
    %v3576 = vld [vmem:[#allocation3 + $0xf7] sm:$0xff]
    %v3577 = vld [vmem:[#allocation3 + $0xff] sm:$0xff]
    %v3578 = vld [vmem:[#allocation3 + $0x107] sm:$0xff]
    %v3579 = vld [vmem:[#allocation3 + $0x10f] sm:$0xff]
    %v3580 = vld [vmem:[#allocation6 + $0x180] sm:$0xff]
    %v3581 = vld [vmem:[#allocation6 + $0x188] sm:$0xff]
    %v3582 = vld [vmem:[#allocation6 + $0x190] sm:$0xff]
    %v3583 = vld [vmem:[#allocation6 + $0x198] sm:$0xff]
    %v3584 = vld [vmem:[#allocation6 + $0x1a0] sm:$0xff]
    %v3585 = vld [vmem:[#allocation6 + $0x1a8] sm:$0xff]
    %v3586 = vld [vmem:[#allocation6 + $0x1b0] sm:$0xff]
    %v3587 = vld [vmem:[#allocation6 + $0x1b8] sm:$0xff]
    %v3588 = vld [vmem:[#allocation6 + $0x1c0] sm:$0xff]
    %v3589 = vld [vmem:[#allocation6 + $0x1c8] sm:$0xff]
    %v3590 = vld [vmem:[#allocation6 + $0x1d0] sm:$0xff]
    %v3591 = vld [vmem:[#allocation6 + $0x1d8] sm:$0xff]
    %v3592 = vld [vmem:[#allocation6 + $0x1e0] sm:$0xff]
    %v3593 = vld [vmem:[#allocation6 + $0x1e8] sm:$0xff]
    %v3594 = vld [vmem:[#allocation6 + $0x1f0] sm:$0xff]
    %v3595 = vld [vmem:[#allocation6 + $0x1f8] sm:$0xff]
    %3596 = vmatpush.msra.mxu0 %v3595
    %3597 = vmatpush.msra.mxu0 %v3594
    %3598 = vmatpush.msra.mxu0 %v3593
    %3599 = vmatpush.msra.mxu0 %v3592
    %3600 = vmatpush.msra.mxu0 %v3591
    %3601 = vmatpush.msra.mxu0 %v3590
    %3602 = vmatpush.msra.mxu0 %v3589
    %3603 = vmatpush.msra.mxu0 %v3588
    %3604 = vmatpush.msra.mxu0 %v3587
    %3605 = vmatpush.msra.mxu0 %v3586
    %3606 = vmatpush.msra.mxu0 %v3585
    %3607 = vmatpush.msra.mxu0 %v3584
    %3608 = vmatpush.msra.mxu0 %v3583
    %3609 = vmatpush.msra.mxu0 %v3582
    %3610 = vmatpush.msra.mxu0 %v3581
    %3611 = vmatpush.msra.mxu0 %v3580
    %3612 = vmatmul.f32.gmra.mxu0 %v3548
    %v3613 = vpop.f32.mrf.mxu0
    %v3614 = vadd.f32 0.0, %v3613
    %3615 = vmatmul.f32.gmra.mxu0 %v3549
    %v3616 = vpop.f32.mrf.mxu0
    %v3617 = vadd.f32 0.0, %v3616
    %3618 = vmatmul.f32.gmra.mxu0 %v3550
    %v3619 = vpop.f32.mrf.mxu0
    %v3620 = vadd.f32 0.0, %v3619
    %3621 = vmatmul.f32.gmra.mxu0 %v3551
    %v3622 = vpop.f32.mrf.mxu0
    %v3623 = vadd.f32 0.0, %v3622
    %3624 = vmatmul.f32.gmra.mxu0 %v3552
    %v3625 = vpop.f32.mrf.mxu0
    %v3626 = vadd.f32 0.0, %v3625
    %3627 = vmatmul.f32.gmra.mxu0 %v3553
    %v3628 = vpop.f32.mrf.mxu0
    %v3629 = vadd.f32 0.0, %v3628
    %3630 = vmatmul.f32.gmra.mxu0 %v3554
    %v3631 = vpop.f32.mrf.mxu0
    %v3632 = vadd.f32 0.0, %v3631
    %3633 = vmatmul.f32.gmra.mxu0 %v3555
    %v3634 = vpop.f32.mrf.mxu0
    %v3635 = vadd.f32 0.0, %v3634
    %3636 = vmatmul.f32.gmra.mxu0 %v3556
    %v3637 = vpop.f32.mrf.mxu0
    %v3638 = vadd.f32 0.0, %v3637
    %3639 = vmatmul.f32.gmra.mxu0 %v3557
    %v3640 = vpop.f32.mrf.mxu0
    %v3641 = vadd.f32 0.0, %v3640
    %3642 = vmatmul.f32.gmra.mxu0 %v3558
    %v3643 = vpop.f32.mrf.mxu0
    %v3644 = vadd.f32 0.0, %v3643
    %3645 = vmatmul.f32.gmra.mxu0 %v3559
    %v3646 = vpop.f32.mrf.mxu0
    %v3647 = vadd.f32 0.0, %v3646
    %3648 = vmatmul.f32.gmra.mxu0 %v3560
    %v3649 = vpop.f32.mrf.mxu0
    %v3650 = vadd.f32 0.0, %v3649
    %3651 = vmatmul.f32.gmra.mxu0 %v3561
    %v3652 = vpop.f32.mrf.mxu0
    %v3653 = vadd.f32 0.0, %v3652
    %3654 = vmatmul.f32.gmra.mxu0 %v3562
    %v3655 = vpop.f32.mrf.mxu0
    %v3656 = vadd.f32 0.0, %v3655
    %3657 = vmatmul.f32.gmra.mxu0 %v3563
    %v3658 = vpop.f32.mrf.mxu0
    %v3659 = vadd.f32 0.0, %v3658
    %3660 = vmatmul.f32.gmra.mxu0 %v3564
    %v3661 = vpop.f32.mrf.mxu0
    %v3662 = vadd.f32 0.0, %v3661
    %3663 = vmatmul.f32.gmra.mxu0 %v3565
    %v3664 = vpop.f32.mrf.mxu0
    %v3665 = vadd.f32 0.0, %v3664
    %3666 = vmatmul.f32.gmra.mxu0 %v3566
    %v3667 = vpop.f32.mrf.mxu0
    %v3668 = vadd.f32 0.0, %v3667
    %3669 = vmatmul.f32.gmra.mxu0 %v3567
    %v3670 = vpop.f32.mrf.mxu0
    %v3671 = vadd.f32 0.0, %v3670
    %3672 = vmatmul.f32.gmra.mxu0 %v3568
    %v3673 = vpop.f32.mrf.mxu0
    %v3674 = vadd.f32 0.0, %v3673
    %3675 = vmatmul.f32.gmra.mxu0 %v3569
    %v3676 = vpop.f32.mrf.mxu0
    %v3677 = vadd.f32 0.0, %v3676
    %3678 = vmatmul.f32.gmra.mxu0 %v3570
    %v3679 = vpop.f32.mrf.mxu0
    %v3680 = vadd.f32 0.0, %v3679
    %3681 = vmatmul.f32.gmra.mxu0 %v3571
    %v3682 = vpop.f32.mrf.mxu0
    %v3683 = vadd.f32 0.0, %v3682
    %3684 = vmatmul.f32.gmra.mxu0 %v3572
    %v3685 = vpop.f32.mrf.mxu0
    %v3686 = vadd.f32 0.0, %v3685
    %3687 = vmatmul.f32.gmra.mxu0 %v3573
    %v3688 = vpop.f32.mrf.mxu0
    %v3689 = vadd.f32 0.0, %v3688
    %3690 = vmatmul.f32.gmra.mxu0 %v3574
    %v3691 = vpop.f32.mrf.mxu0
    %v3692 = vadd.f32 0.0, %v3691
    %3693 = vmatmul.f32.gmra.mxu0 %v3575
    %v3694 = vpop.f32.mrf.mxu0
    %v3695 = vadd.f32 0.0, %v3694
    %3696 = vmatmul.f32.gmra.mxu0 %v3576
    %v3697 = vpop.f32.mrf.mxu0
    %v3698 = vadd.f32 0.0, %v3697
    %3699 = vmatmul.f32.gmra.mxu0 %v3577
    %v3700 = vpop.f32.mrf.mxu0
    %v3701 = vadd.f32 0.0, %v3700
    %3702 = vmatmul.f32.gmra.mxu0 %v3578
    %v3703 = vpop.f32.mrf.mxu0
    %v3704 = vadd.f32 0.0, %v3703
    %3705 = vmatmul.f32.gmra.mxu0 %v3579
    %v3706 = vpop.f32.mrf.mxu0
    %v3707 = vadd.f32 0.0, %v3706
    %3708 = vdwg.mxu0
    %v3709 = vadd.f32 %v3516, %v3614
    %v3710 = vadd.f32 %v3517, %v3617
    %v3711 = vadd.f32 %v3518, %v3620
    %v3712 = vadd.f32 %v3519, %v3623
    %v3713 = vadd.f32 %v3520, %v3626
    %v3714 = vadd.f32 %v3521, %v3629
    %v3715 = vadd.f32 %v3522, %v3632
    %v3716 = vadd.f32 %v3523, %v3635
    %v3717 = vadd.f32 %v3524, %v3638
    %v3718 = vadd.f32 %v3525, %v3641
    %v3719 = vadd.f32 %v3526, %v3644
    %v3720 = vadd.f32 %v3527, %v3647
    %v3721 = vadd.f32 %v3528, %v3650
    %v3722 = vadd.f32 %v3529, %v3653
    %v3723 = vadd.f32 %v3530, %v3656
    %v3724 = vadd.f32 %v3531, %v3659
    %v3725 = vadd.f32 %v3532, %v3662
    %v3726 = vadd.f32 %v3533, %v3665
    %v3727 = vadd.f32 %v3534, %v3668
    %v3728 = vadd.f32 %v3535, %v3671
    %v3729 = vadd.f32 %v3536, %v3674
    %v3730 = vadd.f32 %v3537, %v3677
    %v3731 = vadd.f32 %v3538, %v3680
    %v3732 = vadd.f32 %v3539, %v3683
    %v3733 = vadd.f32 %v3540, %v3686
    %v3734 = vadd.f32 %v3541, %v3689
    %v3735 = vadd.f32 %v3542, %v3692
    %v3736 = vadd.f32 %v3543, %v3695
    %v3737 = vadd.f32 %v3544, %v3698
    %v3738 = vadd.f32 %v3545, %v3701
    %v3739 = vadd.f32 %v3546, %v3704
    %v3740 = vadd.f32 %v3547, %v3707
    %v3741 = vld [vmem:[#allocation3 + $0x8] sm:$0xff]
    %v3742 = vld [vmem:[#allocation3 + $0x10] sm:$0xff]
    %v3743 = vld [vmem:[#allocation3 + $0x18] sm:$0xff]
    %v3744 = vld [vmem:[#allocation3 + $0x20] sm:$0xff]
    %v3745 = vld [vmem:[#allocation3 + $0x28] sm:$0xff]
    %v3746 = vld [vmem:[#allocation3 + $0x30] sm:$0xff]
    %v3747 = vld [vmem:[#allocation3 + $0x38] sm:$0xff]
    %v3748 = vld [vmem:[#allocation3 + $0x40] sm:$0xff]
    %v3749 = vld [vmem:[#allocation3 + $0x48] sm:$0xff]
    %v3750 = vld [vmem:[#allocation3 + $0x50] sm:$0xff]
    %v3751 = vld [vmem:[#allocation3 + $0x58] sm:$0xff]
    %v3752 = vld [vmem:[#allocation3 + $0x60] sm:$0xff]
    %v3753 = vld [vmem:[#allocation3 + $0x68] sm:$0xff]
    %v3754 = vld [vmem:[#allocation3 + $0x70] sm:$0xff]
    %v3755 = vld [vmem:[#allocation3 + $0x78] sm:$0xff]
    %v3756 = vld [vmem:[#allocation3 + $0x80] sm:$0xff]
    %v3757 = vld [vmem:[#allocation3 + $0x98] sm:$0xff]
    %v3758 = vld [vmem:[#allocation3 + $0xa0] sm:$0xff]
    %v3759 = vld [vmem:[#allocation3 + $0xa8] sm:$0xff]
    %v3760 = vld [vmem:[#allocation3 + $0xb0] sm:$0xff]
    %v3761 = vld [vmem:[#allocation3 + $0xb8] sm:$0xff]
    %v3762 = vld [vmem:[#allocation3 + $0xc0] sm:$0xff]
    %v3763 = vld [vmem:[#allocation3 + $0xc8] sm:$0xff]
    %v3764 = vld [vmem:[#allocation3 + $0xd0] sm:$0xff]
    %v3765 = vld [vmem:[#allocation3 + $0xd8] sm:$0xff]
    %v3766 = vld [vmem:[#allocation3 + $0xe0] sm:$0xff]
    %v3767 = vld [vmem:[#allocation3 + $0xe8] sm:$0xff]
    %v3768 = vld [vmem:[#allocation3 + $0xf0] sm:$0xff]
    %v3769 = vld [vmem:[#allocation3 + $0xf8] sm:$0xff]
    %v3770 = vld [vmem:[#allocation3 + $0x100] sm:$0xff]
    %v3771 = vld [vmem:[#allocation3 + $0x108] sm:$0xff]
    %v3772 = vld [vmem:[#allocation3 + $0x110] sm:$0xff]
    %v3773 = vld [vmem:[#allocation6 + $0x200] sm:$0xff]
    %v3774 = vld [vmem:[#allocation6 + $0x208] sm:$0xff]
    %v3775 = vld [vmem:[#allocation6 + $0x210] sm:$0xff]
    %v3776 = vld [vmem:[#allocation6 + $0x218] sm:$0xff]
    %v3777 = vld [vmem:[#allocation6 + $0x220] sm:$0xff]
    %v3778 = vld [vmem:[#allocation6 + $0x228] sm:$0xff]
    %v3779 = vld [vmem:[#allocation6 + $0x230] sm:$0xff]
    %v3780 = vld [vmem:[#allocation6 + $0x238] sm:$0xff]
    %v3781 = vld [vmem:[#allocation6 + $0x240] sm:$0xff]
    %v3782 = vld [vmem:[#allocation6 + $0x248] sm:$0xff]
    %v3783 = vld [vmem:[#allocation6 + $0x250] sm:$0xff]
    %v3784 = vld [vmem:[#allocation6 + $0x258] sm:$0xff]
    %v3785 = vld [vmem:[#allocation6 + $0x260] sm:$0xff]
    %v3786 = vld [vmem:[#allocation6 + $0x268] sm:$0xff]
    %v3787 = vld [vmem:[#allocation6 + $0x270] sm:$0xff]
    %v3788 = vld [vmem:[#allocation6 + $0x278] sm:$0xff]
    %3789 = vmatpush.msra.mxu0 %v3788
    %3790 = vmatpush.msra.mxu0 %v3787
    %3791 = vmatpush.msra.mxu0 %v3786
    %3792 = vmatpush.msra.mxu0 %v3785
    %3793 = vmatpush.msra.mxu0 %v3784
    %3794 = vmatpush.msra.mxu0 %v3783
    %3795 = vmatpush.msra.mxu0 %v3782
    %3796 = vmatpush.msra.mxu0 %v3781
    %3797 = vmatpush.msra.mxu0 %v3780
    %3798 = vmatpush.msra.mxu0 %v3779
    %3799 = vmatpush.msra.mxu0 %v3778
    %3800 = vmatpush.msra.mxu0 %v3777
    %3801 = vmatpush.msra.mxu0 %v3776
    %3802 = vmatpush.msra.mxu0 %v3775
    %3803 = vmatpush.msra.mxu0 %v3774
    %3804 = vmatpush.msra.mxu0 %v3773
    %3805 = vmatmul.f32.gmra.mxu0 %v3741
    %v3806 = vpop.f32.mrf.mxu0
    %v3807 = vadd.f32 0.0, %v3806
    %3808 = vmatmul.f32.gmra.mxu0 %v3742
    %v3809 = vpop.f32.mrf.mxu0
    %v3810 = vadd.f32 0.0, %v3809
    %3811 = vmatmul.f32.gmra.mxu0 %v3743
    %v3812 = vpop.f32.mrf.mxu0
    %v3813 = vadd.f32 0.0, %v3812
    %3814 = vmatmul.f32.gmra.mxu0 %v3744
    %v3815 = vpop.f32.mrf.mxu0
    %v3816 = vadd.f32 0.0, %v3815
    %3817 = vmatmul.f32.gmra.mxu0 %v3745
    %v3818 = vpop.f32.mrf.mxu0
    %v3819 = vadd.f32 0.0, %v3818
    %3820 = vmatmul.f32.gmra.mxu0 %v3746
    %v3821 = vpop.f32.mrf.mxu0
    %v3822 = vadd.f32 0.0, %v3821
    %3823 = vmatmul.f32.gmra.mxu0 %v3747
    %v3824 = vpop.f32.mrf.mxu0
    %v3825 = vadd.f32 0.0, %v3824
    %3826 = vmatmul.f32.gmra.mxu0 %v3748
    %v3827 = vpop.f32.mrf.mxu0
    %v3828 = vadd.f32 0.0, %v3827
    %3829 = vmatmul.f32.gmra.mxu0 %v3749
    %v3830 = vpop.f32.mrf.mxu0
    %v3831 = vadd.f32 0.0, %v3830
    %3832 = vmatmul.f32.gmra.mxu0 %v3750
    %v3833 = vpop.f32.mrf.mxu0
    %v3834 = vadd.f32 0.0, %v3833
    %3835 = vmatmul.f32.gmra.mxu0 %v3751
    %v3836 = vpop.f32.mrf.mxu0
    %v3837 = vadd.f32 0.0, %v3836
    %3838 = vmatmul.f32.gmra.mxu0 %v3752
    %v3839 = vpop.f32.mrf.mxu0
    %v3840 = vadd.f32 0.0, %v3839
    %3841 = vmatmul.f32.gmra.mxu0 %v3753
    %v3842 = vpop.f32.mrf.mxu0
    %v3843 = vadd.f32 0.0, %v3842
    %3844 = vmatmul.f32.gmra.mxu0 %v3754
    %v3845 = vpop.f32.mrf.mxu0
    %v3846 = vadd.f32 0.0, %v3845
    %3847 = vmatmul.f32.gmra.mxu0 %v3755
    %v3848 = vpop.f32.mrf.mxu0
    %v3849 = vadd.f32 0.0, %v3848
    %3850 = vmatmul.f32.gmra.mxu0 %v3756
    %v3851 = vpop.f32.mrf.mxu0
    %v3852 = vadd.f32 0.0, %v3851
    %3853 = vmatmul.f32.gmra.mxu0 %v3757
    %v3854 = vpop.f32.mrf.mxu0
    %v3855 = vadd.f32 0.0, %v3854
    %3856 = vmatmul.f32.gmra.mxu0 %v3758
    %v3857 = vpop.f32.mrf.mxu0
    %v3858 = vadd.f32 0.0, %v3857
    %3859 = vmatmul.f32.gmra.mxu0 %v3759
    %v3860 = vpop.f32.mrf.mxu0
    %v3861 = vadd.f32 0.0, %v3860
    %3862 = vmatmul.f32.gmra.mxu0 %v3760
    %v3863 = vpop.f32.mrf.mxu0
    %v3864 = vadd.f32 0.0, %v3863
    %3865 = vmatmul.f32.gmra.mxu0 %v3761
    %v3866 = vpop.f32.mrf.mxu0
    %v3867 = vadd.f32 0.0, %v3866
    %3868 = vmatmul.f32.gmra.mxu0 %v3762
    %v3869 = vpop.f32.mrf.mxu0
    %v3870 = vadd.f32 0.0, %v3869
    %3871 = vmatmul.f32.gmra.mxu0 %v3763
    %v3872 = vpop.f32.mrf.mxu0
    %v3873 = vadd.f32 0.0, %v3872
    %3874 = vmatmul.f32.gmra.mxu0 %v3764
    %v3875 = vpop.f32.mrf.mxu0
    %v3876 = vadd.f32 0.0, %v3875
    %3877 = vmatmul.f32.gmra.mxu0 %v3765
    %v3878 = vpop.f32.mrf.mxu0
    %v3879 = vadd.f32 0.0, %v3878
    %3880 = vmatmul.f32.gmra.mxu0 %v3766
    %v3881 = vpop.f32.mrf.mxu0
    %v3882 = vadd.f32 0.0, %v3881
    %3883 = vmatmul.f32.gmra.mxu0 %v3767
    %v3884 = vpop.f32.mrf.mxu0
    %v3885 = vadd.f32 0.0, %v3884
    %3886 = vmatmul.f32.gmra.mxu0 %v3768
    %v3887 = vpop.f32.mrf.mxu0
    %v3888 = vadd.f32 0.0, %v3887
    %3889 = vmatmul.f32.gmra.mxu0 %v3769
    %v3890 = vpop.f32.mrf.mxu0
    %v3891 = vadd.f32 0.0, %v3890
    %3892 = vmatmul.f32.gmra.mxu0 %v3770
    %v3893 = vpop.f32.mrf.mxu0
    %v3894 = vadd.f32 0.0, %v3893
    %3895 = vmatmul.f32.gmra.mxu0 %v3771
    %v3896 = vpop.f32.mrf.mxu0
    %v3897 = vadd.f32 0.0, %v3896
    %3898 = vmatmul.f32.gmra.mxu0 %v3772
    %v3899 = vpop.f32.mrf.mxu0
    %v3900 = vadd.f32 0.0, %v3899
    %3901 = vdwg.mxu0
    %v3902 = vadd.f32 %v3709, %v3807
    %v3903 = vadd.f32 %v3710, %v3810
    %v3904 = vadd.f32 %v3711, %v3813
    %v3905 = vadd.f32 %v3712, %v3816
    %v3906 = vadd.f32 %v3713, %v3819
    %v3907 = vadd.f32 %v3714, %v3822
    %v3908 = vadd.f32 %v3715, %v3825
    %v3909 = vadd.f32 %v3716, %v3828
    %v3910 = vadd.f32 %v3717, %v3831
    %v3911 = vadd.f32 %v3718, %v3834
    %v3912 = vadd.f32 %v3719, %v3837
    %v3913 = vadd.f32 %v3720, %v3840
    %v3914 = vadd.f32 %v3721, %v3843
    %v3915 = vadd.f32 %v3722, %v3846
    %v3916 = vadd.f32 %v3723, %v3849
    %v3917 = vadd.f32 %v3724, %v3852
    %v3918 = vadd.f32 %v3725, %v3855
    %v3919 = vadd.f32 %v3726, %v3858
    %v3920 = vadd.f32 %v3727, %v3861
    %v3921 = vadd.f32 %v3728, %v3864
    %v3922 = vadd.f32 %v3729, %v3867
    %v3923 = vadd.f32 %v3730, %v3870
    %v3924 = vadd.f32 %v3731, %v3873
    %v3925 = vadd.f32 %v3732, %v3876
    %v3926 = vadd.f32 %v3733, %v3879
    %v3927 = vadd.f32 %v3734, %v3882
    %v3928 = vadd.f32 %v3735, %v3885
    %v3929 = vadd.f32 %v3736, %v3888
    %v3930 = vadd.f32 %v3737, %v3891
    %v3931 = vadd.f32 %v3738, %v3894
    %v3932 = vadd.f32 %v3739, %v3897
    %v3933 = vadd.f32 %v3740, %v3900
    %v3934 = vld [vmem:[#allocation3 + $0x9] sm:$0xff]
    %v3935 = vld [vmem:[#allocation3 + $0x11] sm:$0xff]
    %v3936 = vld [vmem:[#allocation3 + $0x19] sm:$0xff]
    %v3937 = vld [vmem:[#allocation3 + $0x21] sm:$0xff]
    %v3938 = vld [vmem:[#allocation3 + $0x29] sm:$0xff]
    %v3939 = vld [vmem:[#allocation3 + $0x31] sm:$0xff]
    %v3940 = vld [vmem:[#allocation3 + $0x39] sm:$0xff]
    %v3941 = vld [vmem:[#allocation3 + $0x41] sm:$0xff]
    %v3942 = vld [vmem:[#allocation3 + $0x49] sm:$0xff]
    %v3943 = vld [vmem:[#allocation3 + $0x51] sm:$0xff]
    %v3944 = vld [vmem:[#allocation3 + $0x59] sm:$0xff]
    %v3945 = vld [vmem:[#allocation3 + $0x61] sm:$0xff]
    %v3946 = vld [vmem:[#allocation3 + $0x69] sm:$0xff]
    %v3947 = vld [vmem:[#allocation3 + $0x71] sm:$0xff]
    %v3948 = vld [vmem:[#allocation3 + $0x79] sm:$0xff]
    %v3949 = vld [vmem:[#allocation3 + $0x81] sm:$0xff]
    %v3950 = vld [vmem:[#allocation3 + $0x99] sm:$0xff]
    %v3951 = vld [vmem:[#allocation3 + $0xa1] sm:$0xff]
    %v3952 = vld [vmem:[#allocation3 + $0xa9] sm:$0xff]
    %v3953 = vld [vmem:[#allocation3 + $0xb1] sm:$0xff]
    %v3954 = vld [vmem:[#allocation3 + $0xb9] sm:$0xff]
    %v3955 = vld [vmem:[#allocation3 + $0xc1] sm:$0xff]
    %v3956 = vld [vmem:[#allocation3 + $0xc9] sm:$0xff]
    %v3957 = vld [vmem:[#allocation3 + $0xd1] sm:$0xff]
    %v3958 = vld [vmem:[#allocation3 + $0xd9] sm:$0xff]
    %v3959 = vld [vmem:[#allocation3 + $0xe1] sm:$0xff]
    %v3960 = vld [vmem:[#allocation3 + $0xe9] sm:$0xff]
    %v3961 = vld [vmem:[#allocation3 + $0xf1] sm:$0xff]
    %v3962 = vld [vmem:[#allocation3 + $0xf9] sm:$0xff]
    %v3963 = vld [vmem:[#allocation3 + $0x101] sm:$0xff]
    %v3964 = vld [vmem:[#allocation3 + $0x109] sm:$0xff]
    %v3965 = vld [vmem:[#allocation3 + $0x111] sm:$0xff]
    %v3966 = vld [vmem:[#allocation6 + $0x280] sm:$0xff]
    %v3967 = vld [vmem:[#allocation6 + $0x288] sm:$0xff]
    %v3968 = vld [vmem:[#allocation6 + $0x290] sm:$0xff]
    %v3969 = vld [vmem:[#allocation6 + $0x298] sm:$0xff]
    %v3970 = vld [vmem:[#allocation6 + $0x2a0] sm:$0xff]
    %v3971 = vld [vmem:[#allocation6 + $0x2a8] sm:$0xff]
    %v3972 = vld [vmem:[#allocation6 + $0x2b0] sm:$0xff]
    %v3973 = vld [vmem:[#allocation6 + $0x2b8] sm:$0xff]
    %v3974 = vld [vmem:[#allocation6 + $0x2c0] sm:$0xff]
    %v3975 = vld [vmem:[#allocation6 + $0x2c8] sm:$0xff]
    %v3976 = vld [vmem:[#allocation6 + $0x2d0] sm:$0xff]
    %v3977 = vld [vmem:[#allocation6 + $0x2d8] sm:$0xff]
    %v3978 = vld [vmem:[#allocation6 + $0x2e0] sm:$0xff]
    %v3979 = vld [vmem:[#allocation6 + $0x2e8] sm:$0xff]
    %v3980 = vld [vmem:[#allocation6 + $0x2f0] sm:$0xff]
    %v3981 = vld [vmem:[#allocation6 + $0x2f8] sm:$0xff]
    %3982 = vmatpush.msra.mxu0 %v3981
    %3983 = vmatpush.msra.mxu0 %v3980
    %3984 = vmatpush.msra.mxu0 %v3979
    %3985 = vmatpush.msra.mxu0 %v3978
    %3986 = vmatpush.msra.mxu0 %v3977
    %3987 = vmatpush.msra.mxu0 %v3976
    %3988 = vmatpush.msra.mxu0 %v3975
    %3989 = vmatpush.msra.mxu0 %v3974
    %3990 = vmatpush.msra.mxu0 %v3973
    %3991 = vmatpush.msra.mxu0 %v3972
    %3992 = vmatpush.msra.mxu0 %v3971
    %3993 = vmatpush.msra.mxu0 %v3970
    %3994 = vmatpush.msra.mxu0 %v3969
    %3995 = vmatpush.msra.mxu0 %v3968
    %3996 = vmatpush.msra.mxu0 %v3967
    %3997 = vmatpush.msra.mxu0 %v3966
    %3998 = vmatmul.f32.gmra.mxu0 %v3934
    %v3999 = vpop.f32.mrf.mxu0
    %v4000 = vadd.f32 0.0, %v3999
    %4001 = vmatmul.f32.gmra.mxu0 %v3935
    %v4002 = vpop.f32.mrf.mxu0
    %v4003 = vadd.f32 0.0, %v4002
    %4004 = vmatmul.f32.gmra.mxu0 %v3936
    %v4005 = vpop.f32.mrf.mxu0
    %v4006 = vadd.f32 0.0, %v4005
    %4007 = vmatmul.f32.gmra.mxu0 %v3937
    %v4008 = vpop.f32.mrf.mxu0
    %v4009 = vadd.f32 0.0, %v4008
    %4010 = vmatmul.f32.gmra.mxu0 %v3938
    %v4011 = vpop.f32.mrf.mxu0
    %v4012 = vadd.f32 0.0, %v4011
    %4013 = vmatmul.f32.gmra.mxu0 %v3939
    %v4014 = vpop.f32.mrf.mxu0
    %v4015 = vadd.f32 0.0, %v4014
    %4016 = vmatmul.f32.gmra.mxu0 %v3940
    %v4017 = vpop.f32.mrf.mxu0
    %v4018 = vadd.f32 0.0, %v4017
    %4019 = vmatmul.f32.gmra.mxu0 %v3941
    %v4020 = vpop.f32.mrf.mxu0
    %v4021 = vadd.f32 0.0, %v4020
    %4022 = vmatmul.f32.gmra.mxu0 %v3942
    %v4023 = vpop.f32.mrf.mxu0
    %v4024 = vadd.f32 0.0, %v4023
    %4025 = vmatmul.f32.gmra.mxu0 %v3943
    %v4026 = vpop.f32.mrf.mxu0
    %v4027 = vadd.f32 0.0, %v4026
    %4028 = vmatmul.f32.gmra.mxu0 %v3944
    %v4029 = vpop.f32.mrf.mxu0
    %v4030 = vadd.f32 0.0, %v4029
    %4031 = vmatmul.f32.gmra.mxu0 %v3945
    %v4032 = vpop.f32.mrf.mxu0
    %v4033 = vadd.f32 0.0, %v4032
    %4034 = vmatmul.f32.gmra.mxu0 %v3946
    %v4035 = vpop.f32.mrf.mxu0
    %v4036 = vadd.f32 0.0, %v4035
    %4037 = vmatmul.f32.gmra.mxu0 %v3947
    %v4038 = vpop.f32.mrf.mxu0
    %v4039 = vadd.f32 0.0, %v4038
    %4040 = vmatmul.f32.gmra.mxu0 %v3948
    %v4041 = vpop.f32.mrf.mxu0
    %v4042 = vadd.f32 0.0, %v4041
    %4043 = vmatmul.f32.gmra.mxu0 %v3949
    %v4044 = vpop.f32.mrf.mxu0
    %v4045 = vadd.f32 0.0, %v4044
    %4046 = vmatmul.f32.gmra.mxu0 %v3950
    %v4047 = vpop.f32.mrf.mxu0
    %v4048 = vadd.f32 0.0, %v4047
    %4049 = vmatmul.f32.gmra.mxu0 %v3951
    %v4050 = vpop.f32.mrf.mxu0
    %v4051 = vadd.f32 0.0, %v4050
    %4052 = vmatmul.f32.gmra.mxu0 %v3952
    %v4053 = vpop.f32.mrf.mxu0
    %v4054 = vadd.f32 0.0, %v4053
    %4055 = vmatmul.f32.gmra.mxu0 %v3953
    %v4056 = vpop.f32.mrf.mxu0
    %v4057 = vadd.f32 0.0, %v4056
    %4058 = vmatmul.f32.gmra.mxu0 %v3954
    %v4059 = vpop.f32.mrf.mxu0
    %v4060 = vadd.f32 0.0, %v4059
    %4061 = vmatmul.f32.gmra.mxu0 %v3955
    %v4062 = vpop.f32.mrf.mxu0
    %v4063 = vadd.f32 0.0, %v4062
    %4064 = vmatmul.f32.gmra.mxu0 %v3956
    %v4065 = vpop.f32.mrf.mxu0
    %v4066 = vadd.f32 0.0, %v4065
    %4067 = vmatmul.f32.gmra.mxu0 %v3957
    %v4068 = vpop.f32.mrf.mxu0
    %v4069 = vadd.f32 0.0, %v4068
    %4070 = vmatmul.f32.gmra.mxu0 %v3958
    %v4071 = vpop.f32.mrf.mxu0
    %v4072 = vadd.f32 0.0, %v4071
    %4073 = vmatmul.f32.gmra.mxu0 %v3959
    %v4074 = vpop.f32.mrf.mxu0
    %v4075 = vadd.f32 0.0, %v4074
    %4076 = vmatmul.f32.gmra.mxu0 %v3960
    %v4077 = vpop.f32.mrf.mxu0
    %v4078 = vadd.f32 0.0, %v4077
    %4079 = vmatmul.f32.gmra.mxu0 %v3961
    %v4080 = vpop.f32.mrf.mxu0
    %v4081 = vadd.f32 0.0, %v4080
    %4082 = vmatmul.f32.gmra.mxu0 %v3962
    %v4083 = vpop.f32.mrf.mxu0
    %v4084 = vadd.f32 0.0, %v4083
    %4085 = vmatmul.f32.gmra.mxu0 %v3963
    %v4086 = vpop.f32.mrf.mxu0
    %v4087 = vadd.f32 0.0, %v4086
    %4088 = vmatmul.f32.gmra.mxu0 %v3964
    %v4089 = vpop.f32.mrf.mxu0
    %v4090 = vadd.f32 0.0, %v4089
    %4091 = vmatmul.f32.gmra.mxu0 %v3965
    %v4092 = vpop.f32.mrf.mxu0
    %v4093 = vadd.f32 0.0, %v4092
    %4094 = vdwg.mxu0
    %v4095 = vadd.f32 %v3902, %v4000
    %v4096 = vadd.f32 %v3903, %v4003
    %v4097 = vadd.f32 %v3904, %v4006
    %v4098 = vadd.f32 %v3905, %v4009
    %v4099 = vadd.f32 %v3906, %v4012
    %v4100 = vadd.f32 %v3907, %v4015
    %v4101 = vadd.f32 %v3908, %v4018
    %v4102 = vadd.f32 %v3909, %v4021
    %v4103 = vadd.f32 %v3910, %v4024
    %v4104 = vadd.f32 %v3911, %v4027
    %v4105 = vadd.f32 %v3912, %v4030
    %v4106 = vadd.f32 %v3913, %v4033
    %v4107 = vadd.f32 %v3914, %v4036
    %v4108 = vadd.f32 %v3915, %v4039
    %v4109 = vadd.f32 %v3916, %v4042
    %v4110 = vadd.f32 %v3917, %v4045
    %v4111 = vadd.f32 %v3918, %v4048
    %v4112 = vadd.f32 %v3919, %v4051
    %v4113 = vadd.f32 %v3920, %v4054
    %v4114 = vadd.f32 %v3921, %v4057
    %v4115 = vadd.f32 %v3922, %v4060
    %v4116 = vadd.f32 %v3923, %v4063
    %v4117 = vadd.f32 %v3924, %v4066
    %v4118 = vadd.f32 %v3925, %v4069
    %v4119 = vadd.f32 %v3926, %v4072
    %v4120 = vadd.f32 %v3927, %v4075
    %v4121 = vadd.f32 %v3928, %v4078
    %v4122 = vadd.f32 %v3929, %v4081
    %v4123 = vadd.f32 %v3930, %v4084
    %v4124 = vadd.f32 %v3931, %v4087
    %v4125 = vadd.f32 %v3932, %v4090
    %v4126 = vadd.f32 %v3933, %v4093
    %v4127 = vld [vmem:[#allocation3 + $0xa] sm:$0xff]
    %v4128 = vld [vmem:[#allocation3 + $0x12] sm:$0xff]
    %v4129 = vld [vmem:[#allocation3 + $0x1a] sm:$0xff]
    %v4130 = vld [vmem:[#allocation3 + $0x22] sm:$0xff]
    %v4131 = vld [vmem:[#allocation3 + $0x2a] sm:$0xff]
    %v4132 = vld [vmem:[#allocation3 + $0x32] sm:$0xff]
    %v4133 = vld [vmem:[#allocation3 + $0x3a] sm:$0xff]
    %v4134 = vld [vmem:[#allocation3 + $0x42] sm:$0xff]
    %v4135 = vld [vmem:[#allocation3 + $0x4a] sm:$0xff]
    %v4136 = vld [vmem:[#allocation3 + $0x52] sm:$0xff]
    %v4137 = vld [vmem:[#allocation3 + $0x5a] sm:$0xff]
    %v4138 = vld [vmem:[#allocation3 + $0x62] sm:$0xff]
    %v4139 = vld [vmem:[#allocation3 + $0x6a] sm:$0xff]
    %v4140 = vld [vmem:[#allocation3 + $0x72] sm:$0xff]
    %v4141 = vld [vmem:[#allocation3 + $0x7a] sm:$0xff]
    %v4142 = vld [vmem:[#allocation3 + $0x82] sm:$0xff]
    %v4143 = vld [vmem:[#allocation3 + $0x9a] sm:$0xff]
    %v4144 = vld [vmem:[#allocation3 + $0xa2] sm:$0xff]
    %v4145 = vld [vmem:[#allocation3 + $0xaa] sm:$0xff]
    %v4146 = vld [vmem:[#allocation3 + $0xb2] sm:$0xff]
    %v4147 = vld [vmem:[#allocation3 + $0xba] sm:$0xff]
    %v4148 = vld [vmem:[#allocation3 + $0xc2] sm:$0xff]
    %v4149 = vld [vmem:[#allocation3 + $0xca] sm:$0xff]
    %v4150 = vld [vmem:[#allocation3 + $0xd2] sm:$0xff]
    %v4151 = vld [vmem:[#allocation3 + $0xda] sm:$0xff]
    %v4152 = vld [vmem:[#allocation3 + $0xe2] sm:$0xff]
    %v4153 = vld [vmem:[#allocation3 + $0xea] sm:$0xff]
    %v4154 = vld [vmem:[#allocation3 + $0xf2] sm:$0xff]
    %v4155 = vld [vmem:[#allocation3 + $0xfa] sm:$0xff]
    %v4156 = vld [vmem:[#allocation3 + $0x102] sm:$0xff]
    %v4157 = vld [vmem:[#allocation3 + $0x10a] sm:$0xff]
    %v4158 = vld [vmem:[#allocation3 + $0x112] sm:$0xff]
    %v4159 = vld [vmem:[#allocation6 + $0x300] sm:$0xff]
    %v4160 = vld [vmem:[#allocation6 + $0x308] sm:$0xff]
    %v4161 = vld [vmem:[#allocation6 + $0x310] sm:$0xff]
    %v4162 = vld [vmem:[#allocation6 + $0x318] sm:$0xff]
    %v4163 = vld [vmem:[#allocation6 + $0x320] sm:$0xff]
    %v4164 = vld [vmem:[#allocation6 + $0x328] sm:$0xff]
    %v4165 = vld [vmem:[#allocation6 + $0x330] sm:$0xff]
    %v4166 = vld [vmem:[#allocation6 + $0x338] sm:$0xff]
    %v4167 = vld [vmem:[#allocation6 + $0x340] sm:$0xff]
    %v4168 = vld [vmem:[#allocation6 + $0x348] sm:$0xff]
    %v4169 = vld [vmem:[#allocation6 + $0x350] sm:$0xff]
    %v4170 = vld [vmem:[#allocation6 + $0x358] sm:$0xff]
    %v4171 = vld [vmem:[#allocation6 + $0x360] sm:$0xff]
    %v4172 = vld [vmem:[#allocation6 + $0x368] sm:$0xff]
    %v4173 = vld [vmem:[#allocation6 + $0x370] sm:$0xff]
    %v4174 = vld [vmem:[#allocation6 + $0x378] sm:$0xff]
    %4175 = vmatpush.msra.mxu0 %v4174
    %4176 = vmatpush.msra.mxu0 %v4173
    %4177 = vmatpush.msra.mxu0 %v4172
    %4178 = vmatpush.msra.mxu0 %v4171
    %4179 = vmatpush.msra.mxu0 %v4170
    %4180 = vmatpush.msra.mxu0 %v4169
    %4181 = vmatpush.msra.mxu0 %v4168
    %4182 = vmatpush.msra.mxu0 %v4167
    %4183 = vmatpush.msra.mxu0 %v4166
    %4184 = vmatpush.msra.mxu0 %v4165
    %4185 = vmatpush.msra.mxu0 %v4164
    %4186 = vmatpush.msra.mxu0 %v4163
    %4187 = vmatpush.msra.mxu0 %v4162
    %4188 = vmatpush.msra.mxu0 %v4161
    %4189 = vmatpush.msra.mxu0 %v4160
    %4190 = vmatpush.msra.mxu0 %v4159
    %4191 = vmatmul.f32.gmra.mxu0 %v4127
    %v4192 = vpop.f32.mrf.mxu0
    %v4193 = vadd.f32 0.0, %v4192
    %4194 = vmatmul.f32.gmra.mxu0 %v4128
    %v4195 = vpop.f32.mrf.mxu0
    %v4196 = vadd.f32 0.0, %v4195
    %4197 = vmatmul.f32.gmra.mxu0 %v4129
    %v4198 = vpop.f32.mrf.mxu0
    %v4199 = vadd.f32 0.0, %v4198
    %4200 = vmatmul.f32.gmra.mxu0 %v4130
    %v4201 = vpop.f32.mrf.mxu0
    %v4202 = vadd.f32 0.0, %v4201
    %4203 = vmatmul.f32.gmra.mxu0 %v4131
    %v4204 = vpop.f32.mrf.mxu0
    %v4205 = vadd.f32 0.0, %v4204
    %4206 = vmatmul.f32.gmra.mxu0 %v4132
    %v4207 = vpop.f32.mrf.mxu0
    %v4208 = vadd.f32 0.0, %v4207
    %4209 = vmatmul.f32.gmra.mxu0 %v4133
    %v4210 = vpop.f32.mrf.mxu0
    %v4211 = vadd.f32 0.0, %v4210
    %4212 = vmatmul.f32.gmra.mxu0 %v4134
    %v4213 = vpop.f32.mrf.mxu0
    %v4214 = vadd.f32 0.0, %v4213
    %4215 = vmatmul.f32.gmra.mxu0 %v4135
    %v4216 = vpop.f32.mrf.mxu0
    %v4217 = vadd.f32 0.0, %v4216
    %4218 = vmatmul.f32.gmra.mxu0 %v4136
    %v4219 = vpop.f32.mrf.mxu0
    %v4220 = vadd.f32 0.0, %v4219
    %4221 = vmatmul.f32.gmra.mxu0 %v4137
    %v4222 = vpop.f32.mrf.mxu0
    %v4223 = vadd.f32 0.0, %v4222
    %4224 = vmatmul.f32.gmra.mxu0 %v4138
    %v4225 = vpop.f32.mrf.mxu0
    %v4226 = vadd.f32 0.0, %v4225
    %4227 = vmatmul.f32.gmra.mxu0 %v4139
    %v4228 = vpop.f32.mrf.mxu0
    %v4229 = vadd.f32 0.0, %v4228
    %4230 = vmatmul.f32.gmra.mxu0 %v4140
    %v4231 = vpop.f32.mrf.mxu0
    %v4232 = vadd.f32 0.0, %v4231
    %4233 = vmatmul.f32.gmra.mxu0 %v4141
    %v4234 = vpop.f32.mrf.mxu0
    %v4235 = vadd.f32 0.0, %v4234
    %4236 = vmatmul.f32.gmra.mxu0 %v4142
    %v4237 = vpop.f32.mrf.mxu0
    %v4238 = vadd.f32 0.0, %v4237
    %4239 = vmatmul.f32.gmra.mxu0 %v4143
    %v4240 = vpop.f32.mrf.mxu0
    %v4241 = vadd.f32 0.0, %v4240
    %4242 = vmatmul.f32.gmra.mxu0 %v4144
    %v4243 = vpop.f32.mrf.mxu0
    %v4244 = vadd.f32 0.0, %v4243
    %4245 = vmatmul.f32.gmra.mxu0 %v4145
    %v4246 = vpop.f32.mrf.mxu0
    %v4247 = vadd.f32 0.0, %v4246
    %4248 = vmatmul.f32.gmra.mxu0 %v4146
    %v4249 = vpop.f32.mrf.mxu0
    %v4250 = vadd.f32 0.0, %v4249
    %4251 = vmatmul.f32.gmra.mxu0 %v4147
    %v4252 = vpop.f32.mrf.mxu0
    %v4253 = vadd.f32 0.0, %v4252
    %4254 = vmatmul.f32.gmra.mxu0 %v4148
    %v4255 = vpop.f32.mrf.mxu0
    %v4256 = vadd.f32 0.0, %v4255
    %4257 = vmatmul.f32.gmra.mxu0 %v4149
    %v4258 = vpop.f32.mrf.mxu0
    %v4259 = vadd.f32 0.0, %v4258
    %4260 = vmatmul.f32.gmra.mxu0 %v4150
    %v4261 = vpop.f32.mrf.mxu0
    %v4262 = vadd.f32 0.0, %v4261
    %4263 = vmatmul.f32.gmra.mxu0 %v4151
    %v4264 = vpop.f32.mrf.mxu0
    %v4265 = vadd.f32 0.0, %v4264
    %4266 = vmatmul.f32.gmra.mxu0 %v4152
    %v4267 = vpop.f32.mrf.mxu0
    %v4268 = vadd.f32 0.0, %v4267
    %4269 = vmatmul.f32.gmra.mxu0 %v4153
    %v4270 = vpop.f32.mrf.mxu0
    %v4271 = vadd.f32 0.0, %v4270
    %4272 = vmatmul.f32.gmra.mxu0 %v4154
    %v4273 = vpop.f32.mrf.mxu0
    %v4274 = vadd.f32 0.0, %v4273
    %4275 = vmatmul.f32.gmra.mxu0 %v4155
    %v4276 = vpop.f32.mrf.mxu0
    %v4277 = vadd.f32 0.0, %v4276
    %4278 = vmatmul.f32.gmra.mxu0 %v4156
    %v4279 = vpop.f32.mrf.mxu0
    %v4280 = vadd.f32 0.0, %v4279
    %4281 = vmatmul.f32.gmra.mxu0 %v4157
    %v4282 = vpop.f32.mrf.mxu0
    %v4283 = vadd.f32 0.0, %v4282
    %4284 = vmatmul.f32.gmra.mxu0 %v4158
    %v4285 = vpop.f32.mrf.mxu0
    %v4286 = vadd.f32 0.0, %v4285
    %4287 = vdwg.mxu0
    %v4288 = vadd.f32 %v4095, %v4193
    %v4289 = vadd.f32 %v4096, %v4196
    %v4290 = vadd.f32 %v4097, %v4199
    %v4291 = vadd.f32 %v4098, %v4202
    %v4292 = vadd.f32 %v4099, %v4205
    %v4293 = vadd.f32 %v4100, %v4208
    %v4294 = vadd.f32 %v4101, %v4211
    %v4295 = vadd.f32 %v4102, %v4214
    %v4296 = vadd.f32 %v4103, %v4217
    %v4297 = vadd.f32 %v4104, %v4220
    %v4298 = vadd.f32 %v4105, %v4223
    %v4299 = vadd.f32 %v4106, %v4226
    %v4300 = vadd.f32 %v4107, %v4229
    %v4301 = vadd.f32 %v4108, %v4232
    %v4302 = vadd.f32 %v4109, %v4235
    %v4303 = vadd.f32 %v4110, %v4238
    %v4304 = vadd.f32 %v4111, %v4241
    %v4305 = vadd.f32 %v4112, %v4244
    %v4306 = vadd.f32 %v4113, %v4247
    %v4307 = vadd.f32 %v4114, %v4250
    %v4308 = vadd.f32 %v4115, %v4253
    %v4309 = vadd.f32 %v4116, %v4256
    %v4310 = vadd.f32 %v4117, %v4259
    %v4311 = vadd.f32 %v4118, %v4262
    %v4312 = vadd.f32 %v4119, %v4265
    %v4313 = vadd.f32 %v4120, %v4268
    %v4314 = vadd.f32 %v4121, %v4271
    %v4315 = vadd.f32 %v4122, %v4274
    %v4316 = vadd.f32 %v4123, %v4277
    %v4317 = vadd.f32 %v4124, %v4280
    %v4318 = vadd.f32 %v4125, %v4283
    %v4319 = vadd.f32 %v4126, %v4286
    %v4320 = vld [vmem:[#allocation3 + $0xb] sm:$0xff]
    %v4321 = vld [vmem:[#allocation3 + $0x13] sm:$0xff]
    %v4322 = vld [vmem:[#allocation3 + $0x1b] sm:$0xff]
    %v4323 = vld [vmem:[#allocation3 + $0x23] sm:$0xff]
    %v4324 = vld [vmem:[#allocation3 + $0x2b] sm:$0xff]
    %v4325 = vld [vmem:[#allocation3 + $0x33] sm:$0xff]
    %v4326 = vld [vmem:[#allocation3 + $0x3b] sm:$0xff]
    %v4327 = vld [vmem:[#allocation3 + $0x43] sm:$0xff]
    %v4328 = vld [vmem:[#allocation3 + $0x4b] sm:$0xff]
    %v4329 = vld [vmem:[#allocation3 + $0x53] sm:$0xff]
    %v4330 = vld [vmem:[#allocation3 + $0x5b] sm:$0xff]
    %v4331 = vld [vmem:[#allocation3 + $0x63] sm:$0xff]
    %v4332 = vld [vmem:[#allocation3 + $0x6b] sm:$0xff]
    %v4333 = vld [vmem:[#allocation3 + $0x73] sm:$0xff]
    %v4334 = vld [vmem:[#allocation3 + $0x7b] sm:$0xff]
    %v4335 = vld [vmem:[#allocation3 + $0x83] sm:$0xff]
    %v4336 = vld [vmem:[#allocation3 + $0x9b] sm:$0xff]
    %v4337 = vld [vmem:[#allocation3 + $0xa3] sm:$0xff]
    %v4338 = vld [vmem:[#allocation3 + $0xab] sm:$0xff]
    %v4339 = vld [vmem:[#allocation3 + $0xb3] sm:$0xff]
    %v4340 = vld [vmem:[#allocation3 + $0xbb] sm:$0xff]
    %v4341 = vld [vmem:[#allocation3 + $0xc3] sm:$0xff]
    %v4342 = vld [vmem:[#allocation3 + $0xcb] sm:$0xff]
    %v4343 = vld [vmem:[#allocation3 + $0xd3] sm:$0xff]
    %v4344 = vld [vmem:[#allocation3 + $0xdb] sm:$0xff]
    %v4345 = vld [vmem:[#allocation3 + $0xe3] sm:$0xff]
    %v4346 = vld [vmem:[#allocation3 + $0xeb] sm:$0xff]
    %v4347 = vld [vmem:[#allocation3 + $0xf3] sm:$0xff]
    %v4348 = vld [vmem:[#allocation3 + $0xfb] sm:$0xff]
    %v4349 = vld [vmem:[#allocation3 + $0x103] sm:$0xff]
    %v4350 = vld [vmem:[#allocation3 + $0x10b] sm:$0xff]
    %v4351 = vld [vmem:[#allocation3 + $0x113] sm:$0xff]
    %v4352 = vld [vmem:[#allocation6 + $0x380] sm:$0xff]
    %v4353 = vld [vmem:[#allocation6 + $0x388] sm:$0xff]
    %v4354 = vld [vmem:[#allocation6 + $0x390] sm:$0xff]
    %v4355 = vld [vmem:[#allocation6 + $0x398] sm:$0xff]
    %v4356 = vld [vmem:[#allocation6 + $0x3a0] sm:$0xff]
    %v4357 = vld [vmem:[#allocation6 + $0x3a8] sm:$0xff]
    %v4358 = vld [vmem:[#allocation6 + $0x3b0] sm:$0xff]
    %v4359 = vld [vmem:[#allocation6 + $0x3b8] sm:$0xff]
    %v4360 = vld [vmem:[#allocation6 + $0x3c0] sm:$0xff]
    %v4361 = vld [vmem:[#allocation6 + $0x3c8] sm:$0xff]
    %v4362 = vld [vmem:[#allocation6 + $0x3d0] sm:$0xff]
    %v4363 = vld [vmem:[#allocation6 + $0x3d8] sm:$0xff]
    %v4364 = vld [vmem:[#allocation6 + $0x3e0] sm:$0xff]
    %v4365 = vld [vmem:[#allocation6 + $0x3e8] sm:$0xff]
    %v4366 = vld [vmem:[#allocation6 + $0x3f0] sm:$0xff]
    %v4367 = vld [vmem:[#allocation6 + $0x3f8] sm:$0xff]
    %4368 = vmatpush.msra.mxu0 %v4367
    %4369 = vmatpush.msra.mxu0 %v4366
    %4370 = vmatpush.msra.mxu0 %v4365
    %4371 = vmatpush.msra.mxu0 %v4364
    %4372 = vmatpush.msra.mxu0 %v4363
    %4373 = vmatpush.msra.mxu0 %v4362
    %4374 = vmatpush.msra.mxu0 %v4361
    %4375 = vmatpush.msra.mxu0 %v4360
    %4376 = vmatpush.msra.mxu0 %v4359
    %4377 = vmatpush.msra.mxu0 %v4358
    %4378 = vmatpush.msra.mxu0 %v4357
    %4379 = vmatpush.msra.mxu0 %v4356
    %4380 = vmatpush.msra.mxu0 %v4355
    %4381 = vmatpush.msra.mxu0 %v4354
    %4382 = vmatpush.msra.mxu0 %v4353
    %4383 = vmatpush.msra.mxu0 %v4352
    %4384 = vmatmul.f32.gmra.mxu0 %v4320
    %v4385 = vpop.f32.mrf.mxu0
    %v4386 = vadd.f32 0.0, %v4385
    %4387 = vmatmul.f32.gmra.mxu0 %v4321
    %v4388 = vpop.f32.mrf.mxu0
    %v4389 = vadd.f32 0.0, %v4388
    %4390 = vmatmul.f32.gmra.mxu0 %v4322
    %v4391 = vpop.f32.mrf.mxu0
    %v4392 = vadd.f32 0.0, %v4391
    %4393 = vmatmul.f32.gmra.mxu0 %v4323
    %v4394 = vpop.f32.mrf.mxu0
    %v4395 = vadd.f32 0.0, %v4394
    %4396 = vmatmul.f32.gmra.mxu0 %v4324
    %v4397 = vpop.f32.mrf.mxu0
    %v4398 = vadd.f32 0.0, %v4397
    %4399 = vmatmul.f32.gmra.mxu0 %v4325
    %v4400 = vpop.f32.mrf.mxu0
    %v4401 = vadd.f32 0.0, %v4400
    %4402 = vmatmul.f32.gmra.mxu0 %v4326
    %v4403 = vpop.f32.mrf.mxu0
    %v4404 = vadd.f32 0.0, %v4403
    %4405 = vmatmul.f32.gmra.mxu0 %v4327
    %v4406 = vpop.f32.mrf.mxu0
    %v4407 = vadd.f32 0.0, %v4406
    %4408 = vmatmul.f32.gmra.mxu0 %v4328
    %v4409 = vpop.f32.mrf.mxu0
    %v4410 = vadd.f32 0.0, %v4409
    %4411 = vmatmul.f32.gmra.mxu0 %v4329
    %v4412 = vpop.f32.mrf.mxu0
    %v4413 = vadd.f32 0.0, %v4412
    %4414 = vmatmul.f32.gmra.mxu0 %v4330
    %v4415 = vpop.f32.mrf.mxu0
    %v4416 = vadd.f32 0.0, %v4415
    %4417 = vmatmul.f32.gmra.mxu0 %v4331
    %v4418 = vpop.f32.mrf.mxu0
    %v4419 = vadd.f32 0.0, %v4418
    %4420 = vmatmul.f32.gmra.mxu0 %v4332
    %v4421 = vpop.f32.mrf.mxu0
    %v4422 = vadd.f32 0.0, %v4421
    %4423 = vmatmul.f32.gmra.mxu0 %v4333
    %v4424 = vpop.f32.mrf.mxu0
    %v4425 = vadd.f32 0.0, %v4424
    %4426 = vmatmul.f32.gmra.mxu0 %v4334
    %v4427 = vpop.f32.mrf.mxu0
    %v4428 = vadd.f32 0.0, %v4427
    %4429 = vmatmul.f32.gmra.mxu0 %v4335
    %v4430 = vpop.f32.mrf.mxu0
    %v4431 = vadd.f32 0.0, %v4430
    %4432 = vmatmul.f32.gmra.mxu0 %v4336
    %v4433 = vpop.f32.mrf.mxu0
    %v4434 = vadd.f32 0.0, %v4433
    %4435 = vmatmul.f32.gmra.mxu0 %v4337
    %v4436 = vpop.f32.mrf.mxu0
    %v4437 = vadd.f32 0.0, %v4436
    %4438 = vmatmul.f32.gmra.mxu0 %v4338
    %v4439 = vpop.f32.mrf.mxu0
    %v4440 = vadd.f32 0.0, %v4439
    %4441 = vmatmul.f32.gmra.mxu0 %v4339
    %v4442 = vpop.f32.mrf.mxu0
    %v4443 = vadd.f32 0.0, %v4442
    %4444 = vmatmul.f32.gmra.mxu0 %v4340
    %v4445 = vpop.f32.mrf.mxu0
    %v4446 = vadd.f32 0.0, %v4445
    %4447 = vmatmul.f32.gmra.mxu0 %v4341
    %v4448 = vpop.f32.mrf.mxu0
    %v4449 = vadd.f32 0.0, %v4448
    %4450 = vmatmul.f32.gmra.mxu0 %v4342
    %v4451 = vpop.f32.mrf.mxu0
    %v4452 = vadd.f32 0.0, %v4451
    %4453 = vmatmul.f32.gmra.mxu0 %v4343
    %v4454 = vpop.f32.mrf.mxu0
    %v4455 = vadd.f32 0.0, %v4454
    %4456 = vmatmul.f32.gmra.mxu0 %v4344
    %v4457 = vpop.f32.mrf.mxu0
    %v4458 = vadd.f32 0.0, %v4457
    %4459 = vmatmul.f32.gmra.mxu0 %v4345
    %v4460 = vpop.f32.mrf.mxu0
    %v4461 = vadd.f32 0.0, %v4460
    %4462 = vmatmul.f32.gmra.mxu0 %v4346
    %v4463 = vpop.f32.mrf.mxu0
    %v4464 = vadd.f32 0.0, %v4463
    %4465 = vmatmul.f32.gmra.mxu0 %v4347
    %v4466 = vpop.f32.mrf.mxu0
    %v4467 = vadd.f32 0.0, %v4466
    %4468 = vmatmul.f32.gmra.mxu0 %v4348
    %v4469 = vpop.f32.mrf.mxu0
    %v4470 = vadd.f32 0.0, %v4469
    %4471 = vmatmul.f32.gmra.mxu0 %v4349
    %v4472 = vpop.f32.mrf.mxu0
    %v4473 = vadd.f32 0.0, %v4472
    %4474 = vmatmul.f32.gmra.mxu0 %v4350
    %v4475 = vpop.f32.mrf.mxu0
    %v4476 = vadd.f32 0.0, %v4475
    %4477 = vmatmul.f32.gmra.mxu0 %v4351
    %v4478 = vpop.f32.mrf.mxu0
    %v4479 = vadd.f32 0.0, %v4478
    %4480 = vdwg.mxu0
    %v4481 = vadd.f32 %v4288, %v4386
    %v4482 = vadd.f32 %v4289, %v4389
    %v4483 = vadd.f32 %v4290, %v4392
    %v4484 = vadd.f32 %v4291, %v4395
    %v4485 = vadd.f32 %v4292, %v4398
    %v4486 = vadd.f32 %v4293, %v4401
    %v4487 = vadd.f32 %v4294, %v4404
    %v4488 = vadd.f32 %v4295, %v4407
    %v4489 = vadd.f32 %v4296, %v4410
    %v4490 = vadd.f32 %v4297, %v4413
    %v4491 = vadd.f32 %v4298, %v4416
    %v4492 = vadd.f32 %v4299, %v4419
    %v4493 = vadd.f32 %v4300, %v4422
    %v4494 = vadd.f32 %v4301, %v4425
    %v4495 = vadd.f32 %v4302, %v4428
    %v4496 = vadd.f32 %v4303, %v4431
    %v4497 = vadd.f32 %v4304, %v4434
    %v4498 = vadd.f32 %v4305, %v4437
    %v4499 = vadd.f32 %v4306, %v4440
    %v4500 = vadd.f32 %v4307, %v4443
    %v4501 = vadd.f32 %v4308, %v4446
    %v4502 = vadd.f32 %v4309, %v4449
    %v4503 = vadd.f32 %v4310, %v4452
    %v4504 = vadd.f32 %v4311, %v4455
    %v4505 = vadd.f32 %v4312, %v4458
    %v4506 = vadd.f32 %v4313, %v4461
    %v4507 = vadd.f32 %v4314, %v4464
    %v4508 = vadd.f32 %v4315, %v4467
    %v4509 = vadd.f32 %v4316, %v4470
    %v4510 = vadd.f32 %v4317, %v4473
    %v4511 = vadd.f32 %v4318, %v4476
    %v4512 = vadd.f32 %v4319, %v4479
    %v4513 = vld [vmem:[#allocation3 + $0xc] sm:$0xff]
    %v4514 = vld [vmem:[#allocation3 + $0x14] sm:$0xff]
    %v4515 = vld [vmem:[#allocation3 + $0x1c] sm:$0xff]
    %v4516 = vld [vmem:[#allocation3 + $0x24] sm:$0xff]
    %v4517 = vld [vmem:[#allocation3 + $0x2c] sm:$0xff]
    %v4518 = vld [vmem:[#allocation3 + $0x34] sm:$0xff]
    %v4519 = vld [vmem:[#allocation3 + $0x3c] sm:$0xff]
    %v4520 = vld [vmem:[#allocation3 + $0x44] sm:$0xff]
    %v4521 = vld [vmem:[#allocation3 + $0x4c] sm:$0xff]
    %v4522 = vld [vmem:[#allocation3 + $0x54] sm:$0xff]
    %v4523 = vld [vmem:[#allocation3 + $0x5c] sm:$0xff]
    %v4524 = vld [vmem:[#allocation3 + $0x64] sm:$0xff]
    %v4525 = vld [vmem:[#allocation3 + $0x6c] sm:$0xff]
    %v4526 = vld [vmem:[#allocation3 + $0x74] sm:$0xff]
    %v4527 = vld [vmem:[#allocation3 + $0x7c] sm:$0xff]
    %v4528 = vld [vmem:[#allocation3 + $0x84] sm:$0xff]
    %v4529 = vld [vmem:[#allocation3 + $0x9c] sm:$0xff]
    %v4530 = vld [vmem:[#allocation3 + $0xa4] sm:$0xff]
    %v4531 = vld [vmem:[#allocation3 + $0xac] sm:$0xff]
    %v4532 = vld [vmem:[#allocation3 + $0xb4] sm:$0xff]
    %v4533 = vld [vmem:[#allocation3 + $0xbc] sm:$0xff]
    %v4534 = vld [vmem:[#allocation3 + $0xc4] sm:$0xff]
    %v4535 = vld [vmem:[#allocation3 + $0xcc] sm:$0xff]
    %v4536 = vld [vmem:[#allocation3 + $0xd4] sm:$0xff]
    %v4537 = vld [vmem:[#allocation3 + $0xdc] sm:$0xff]
    %v4538 = vld [vmem:[#allocation3 + $0xe4] sm:$0xff]
    %v4539 = vld [vmem:[#allocation3 + $0xec] sm:$0xff]
    %v4540 = vld [vmem:[#allocation3 + $0xf4] sm:$0xff]
    %v4541 = vld [vmem:[#allocation3 + $0xfc] sm:$0xff]
    %v4542 = vld [vmem:[#allocation3 + $0x104] sm:$0xff]
    %v4543 = vld [vmem:[#allocation3 + $0x10c] sm:$0xff]
    %v4544 = vld [vmem:[#allocation3 + $0x114] sm:$0xff]
    %v4545 = vld [vmem:[#allocation6 + $0x400] sm:$0xff]
    %v4546 = vld [vmem:[#allocation6 + $0x408] sm:$0xff]
    %v4547 = vld [vmem:[#allocation6 + $0x410] sm:$0xff]
    %v4548 = vld [vmem:[#allocation6 + $0x418] sm:$0xff]
    %v4549 = vld [vmem:[#allocation6 + $0x420] sm:$0xff]
    %v4550 = vld [vmem:[#allocation6 + $0x428] sm:$0xff]
    %v4551 = vld [vmem:[#allocation6 + $0x430] sm:$0xff]
    %v4552 = vld [vmem:[#allocation6 + $0x438] sm:$0xff]
    %v4553 = vld [vmem:[#allocation6 + $0x440] sm:$0xff]
    %v4554 = vld [vmem:[#allocation6 + $0x448] sm:$0xff]
    %v4555 = vld [vmem:[#allocation6 + $0x450] sm:$0xff]
    %v4556 = vld [vmem:[#allocation6 + $0x458] sm:$0xff]
    %v4557 = vld [vmem:[#allocation6 + $0x460] sm:$0xff]
    %v4558 = vld [vmem:[#allocation6 + $0x468] sm:$0xff]
    %v4559 = vld [vmem:[#allocation6 + $0x470] sm:$0xff]
    %v4560 = vld [vmem:[#allocation6 + $0x478] sm:$0xff]
    %4561 = vmatpush.msra.mxu0 %v4560
    %4562 = vmatpush.msra.mxu0 %v4559
    %4563 = vmatpush.msra.mxu0 %v4558
    %4564 = vmatpush.msra.mxu0 %v4557
    %4565 = vmatpush.msra.mxu0 %v4556
    %4566 = vmatpush.msra.mxu0 %v4555
    %4567 = vmatpush.msra.mxu0 %v4554
    %4568 = vmatpush.msra.mxu0 %v4553
    %4569 = vmatpush.msra.mxu0 %v4552
    %4570 = vmatpush.msra.mxu0 %v4551
    %4571 = vmatpush.msra.mxu0 %v4550
    %4572 = vmatpush.msra.mxu0 %v4549
    %4573 = vmatpush.msra.mxu0 %v4548
    %4574 = vmatpush.msra.mxu0 %v4547
    %4575 = vmatpush.msra.mxu0 %v4546
    %4576 = vmatpush.msra.mxu0 %v4545
    %4577 = vmatmul.f32.gmra.mxu0 %v4513
    %v4578 = vpop.f32.mrf.mxu0
    %v4579 = vadd.f32 0.0, %v4578
    %4580 = vmatmul.f32.gmra.mxu0 %v4514
    %v4581 = vpop.f32.mrf.mxu0
    %v4582 = vadd.f32 0.0, %v4581
    %4583 = vmatmul.f32.gmra.mxu0 %v4515
    %v4584 = vpop.f32.mrf.mxu0
    %v4585 = vadd.f32 0.0, %v4584
    %4586 = vmatmul.f32.gmra.mxu0 %v4516
    %v4587 = vpop.f32.mrf.mxu0
    %v4588 = vadd.f32 0.0, %v4587
    %4589 = vmatmul.f32.gmra.mxu0 %v4517
    %v4590 = vpop.f32.mrf.mxu0
    %v4591 = vadd.f32 0.0, %v4590
    %4592 = vmatmul.f32.gmra.mxu0 %v4518
    %v4593 = vpop.f32.mrf.mxu0
    %v4594 = vadd.f32 0.0, %v4593
    %4595 = vmatmul.f32.gmra.mxu0 %v4519
    %v4596 = vpop.f32.mrf.mxu0
    %v4597 = vadd.f32 0.0, %v4596
    %4598 = vmatmul.f32.gmra.mxu0 %v4520
    %v4599 = vpop.f32.mrf.mxu0
    %v4600 = vadd.f32 0.0, %v4599
    %4601 = vmatmul.f32.gmra.mxu0 %v4521
    %v4602 = vpop.f32.mrf.mxu0
    %v4603 = vadd.f32 0.0, %v4602
    %4604 = vmatmul.f32.gmra.mxu0 %v4522
    %v4605 = vpop.f32.mrf.mxu0
    %v4606 = vadd.f32 0.0, %v4605
    %4607 = vmatmul.f32.gmra.mxu0 %v4523
    %v4608 = vpop.f32.mrf.mxu0
    %v4609 = vadd.f32 0.0, %v4608
    %4610 = vmatmul.f32.gmra.mxu0 %v4524
    %v4611 = vpop.f32.mrf.mxu0
    %v4612 = vadd.f32 0.0, %v4611
    %4613 = vmatmul.f32.gmra.mxu0 %v4525
    %v4614 = vpop.f32.mrf.mxu0
    %v4615 = vadd.f32 0.0, %v4614
    %4616 = vmatmul.f32.gmra.mxu0 %v4526
    %v4617 = vpop.f32.mrf.mxu0
    %v4618 = vadd.f32 0.0, %v4617
    %4619 = vmatmul.f32.gmra.mxu0 %v4527
    %v4620 = vpop.f32.mrf.mxu0
    %v4621 = vadd.f32 0.0, %v4620
    %4622 = vmatmul.f32.gmra.mxu0 %v4528
    %v4623 = vpop.f32.mrf.mxu0
    %v4624 = vadd.f32 0.0, %v4623
    %4625 = vmatmul.f32.gmra.mxu0 %v4529
    %v4626 = vpop.f32.mrf.mxu0
    %v4627 = vadd.f32 0.0, %v4626
    %4628 = vmatmul.f32.gmra.mxu0 %v4530
    %v4629 = vpop.f32.mrf.mxu0
    %v4630 = vadd.f32 0.0, %v4629
    %4631 = vmatmul.f32.gmra.mxu0 %v4531
    %v4632 = vpop.f32.mrf.mxu0
    %v4633 = vadd.f32 0.0, %v4632
    %4634 = vmatmul.f32.gmra.mxu0 %v4532
    %v4635 = vpop.f32.mrf.mxu0
    %v4636 = vadd.f32 0.0, %v4635
    %4637 = vmatmul.f32.gmra.mxu0 %v4533
    %v4638 = vpop.f32.mrf.mxu0
    %v4639 = vadd.f32 0.0, %v4638
    %4640 = vmatmul.f32.gmra.mxu0 %v4534
    %v4641 = vpop.f32.mrf.mxu0
    %v4642 = vadd.f32 0.0, %v4641
    %4643 = vmatmul.f32.gmra.mxu0 %v4535
    %v4644 = vpop.f32.mrf.mxu0
    %v4645 = vadd.f32 0.0, %v4644
    %4646 = vmatmul.f32.gmra.mxu0 %v4536
    %v4647 = vpop.f32.mrf.mxu0
    %v4648 = vadd.f32 0.0, %v4647
    %4649 = vmatmul.f32.gmra.mxu0 %v4537
    %v4650 = vpop.f32.mrf.mxu0
    %v4651 = vadd.f32 0.0, %v4650
    %4652 = vmatmul.f32.gmra.mxu0 %v4538
    %v4653 = vpop.f32.mrf.mxu0
    %v4654 = vadd.f32 0.0, %v4653
    %4655 = vmatmul.f32.gmra.mxu0 %v4539
    %v4656 = vpop.f32.mrf.mxu0
    %v4657 = vadd.f32 0.0, %v4656
    %4658 = vmatmul.f32.gmra.mxu0 %v4540
    %v4659 = vpop.f32.mrf.mxu0
    %v4660 = vadd.f32 0.0, %v4659
    %4661 = vmatmul.f32.gmra.mxu0 %v4541
    %v4662 = vpop.f32.mrf.mxu0
    %v4663 = vadd.f32 0.0, %v4662
    %4664 = vmatmul.f32.gmra.mxu0 %v4542
    %v4665 = vpop.f32.mrf.mxu0
    %v4666 = vadd.f32 0.0, %v4665
    %4667 = vmatmul.f32.gmra.mxu0 %v4543
    %v4668 = vpop.f32.mrf.mxu0
    %v4669 = vadd.f32 0.0, %v4668
    %4670 = vmatmul.f32.gmra.mxu0 %v4544
    %v4671 = vpop.f32.mrf.mxu0
    %v4672 = vadd.f32 0.0, %v4671
    %4673 = vdwg.mxu0
    %v4674 = vadd.f32 %v4481, %v4579
    %v4675 = vadd.f32 %v4482, %v4582
    %v4676 = vadd.f32 %v4483, %v4585
    %v4677 = vadd.f32 %v4484, %v4588
    %v4678 = vadd.f32 %v4485, %v4591
    %v4679 = vadd.f32 %v4486, %v4594
    %v4680 = vadd.f32 %v4487, %v4597
    %v4681 = vadd.f32 %v4488, %v4600
    %v4682 = vadd.f32 %v4489, %v4603
    %v4683 = vadd.f32 %v4490, %v4606
    %v4684 = vadd.f32 %v4491, %v4609
    %v4685 = vadd.f32 %v4492, %v4612
    %v4686 = vadd.f32 %v4493, %v4615
    %v4687 = vadd.f32 %v4494, %v4618
    %v4688 = vadd.f32 %v4495, %v4621
    %v4689 = vadd.f32 %v4496, %v4624
    %v4690 = vadd.f32 %v4497, %v4627
    %v4691 = vadd.f32 %v4498, %v4630
    %v4692 = vadd.f32 %v4499, %v4633
    %v4693 = vadd.f32 %v4500, %v4636
    %v4694 = vadd.f32 %v4501, %v4639
    %v4695 = vadd.f32 %v4502, %v4642
    %v4696 = vadd.f32 %v4503, %v4645
    %v4697 = vadd.f32 %v4504, %v4648
    %v4698 = vadd.f32 %v4505, %v4651
    %v4699 = vadd.f32 %v4506, %v4654
    %v4700 = vadd.f32 %v4507, %v4657
    %v4701 = vadd.f32 %v4508, %v4660
    %v4702 = vadd.f32 %v4509, %v4663
    %v4703 = vadd.f32 %v4510, %v4666
    %v4704 = vadd.f32 %v4511, %v4669
    %v4705 = vadd.f32 %v4512, %v4672
    %v4706 = vld [vmem:[%s6] sm:$0x1]
    %v4708 = vperm.slane %v4706, 0
    %v4710 = vadd.f32 %v4674, %v4708
    %v4711 = vadd.f32 %v4675, %v4708
    %v4712 = vadd.f32 %v4676, %v4708
    %v4713 = vadd.f32 %v4677, %v4708
    %v4714 = vadd.f32 %v4678, %v4708
    %v4715 = vadd.f32 %v4679, %v4708
    %v4716 = vadd.f32 %v4680, %v4708
    %v4717 = vadd.f32 %v4681, %v4708
    %v4718 = vadd.f32 %v4682, %v4708
    %v4719 = vadd.f32 %v4683, %v4708
    %v4720 = vadd.f32 %v4684, %v4708
    %v4721 = vadd.f32 %v4685, %v4708
    %v4722 = vadd.f32 %v4686, %v4708
    %v4723 = vadd.f32 %v4687, %v4708
    %v4724 = vadd.f32 %v4688, %v4708
    %v4725 = vadd.f32 %v4689, %v4708
    %v4726 = vadd.f32 %v4690, %v4708
    %v4727 = vadd.f32 %v4691, %v4708
    %v4728 = vadd.f32 %v4692, %v4708
    %v4729 = vadd.f32 %v4693, %v4708
    %v4730 = vadd.f32 %v4694, %v4708
    %v4731 = vadd.f32 %v4695, %v4708
    %v4732 = vadd.f32 %v4696, %v4708
    %v4733 = vadd.f32 %v4697, %v4708
    %v4734 = vadd.f32 %v4698, %v4708
    %v4735 = vadd.f32 %v4699, %v4708
    %v4736 = vadd.f32 %v4700, %v4708
    %v4737 = vadd.f32 %v4701, %v4708
    %v4738 = vadd.f32 %v4702, %v4708
    %v4739 = vadd.f32 %v4703, %v4708
    %v4740 = vadd.f32 %v4704, %v4708
    %v4741 = vadd.f32 %v4705, %v4708
    %v4742 = vld [vmem:[%s7] sm:$0x1]
    %v4743 = vld [vmem:[%s8] sm:$0x1]
    %v4744 = vadd.f32 %v4710, %v4711
    %v4745 = vadd.f32 %v4744, %v4712
    %v4746 = vadd.f32 %v4745, %v4713
    %v4747 = vadd.f32 %v4746, %v4714
    %v4748 = vadd.f32 %v4747, %v4715
    %v4749 = vadd.f32 %v4748, %v4716
    %v4750 = vadd.f32 %v4749, %v4717
    %v4751 = vadd.f32 %v4750, %v4718
    %v4752 = vadd.f32 %v4751, %v4719
    %v4753 = vadd.f32 %v4752, %v4720
    %v4754 = vadd.f32 %v4753, %v4721
    %v4755 = vadd.f32 %v4754, %v4722
    %v4756 = vadd.f32 %v4755, %v4723
    %v4757 = vadd.f32 %v4756, %v4724
    %v4758 = vadd.f32 %v4757, %v4725
    %v4759 = vadd.f32 %v4758, %v4726
    %v4760 = vadd.f32 %v4759, %v4727
    %v4761 = vadd.f32 %v4760, %v4728
    %v4762 = vadd.f32 %v4761, %v4729
    %v4763 = vadd.f32 %v4762, %v4730
    %v4764 = vadd.f32 %v4763, %v4731
    %v4765 = vadd.f32 %v4764, %v4732
    %v4766 = vadd.f32 %v4765, %v4733
    %v4767 = vadd.f32 %v4766, %v4734
    %v4768 = vadd.f32 %v4767, %v4735
    %v4769 = vadd.f32 %v4768, %v4736
    %v4770 = vadd.f32 %v4769, %v4737
    %v4771 = vadd.f32 %v4770, %v4738
    %v4772 = vadd.f32 %v4771, %v4739
    %v4773 = vadd.f32 %v4772, %v4740
    %v4774 = vadd.f32 %v4773, %v4741
    %v4775 = vrot.slane %v4774, 4
    %v4776 = vadd.f32 %v4774, %v4775
    %v4777 = vrot.slane %v4776, 2
    %v4778 = vadd.f32 %v4776, %v4777
    %v4779 = vrot.slane %v4778, 1
    %v4780 = vadd.f32 %v4778, %v4779
    %v4781 = vmul.f32 %v4780, 0.00390625
    %v4782 = vsub.f32 %v4710, %v4781
    %v4783 = vsub.f32 %v4711, %v4781
    %v4784 = vsub.f32 %v4712, %v4781
    %v4785 = vsub.f32 %v4713, %v4781
    %v4786 = vsub.f32 %v4714, %v4781
    %v4787 = vsub.f32 %v4715, %v4781
    %v4788 = vsub.f32 %v4716, %v4781
    %v4789 = vsub.f32 %v4717, %v4781
    %v4790 = vsub.f32 %v4718, %v4781
    %v4791 = vsub.f32 %v4719, %v4781
    %v4792 = vsub.f32 %v4720, %v4781
    %v4793 = vsub.f32 %v4721, %v4781
    %v4794 = vsub.f32 %v4722, %v4781
    %v4795 = vsub.f32 %v4723, %v4781
    %v4796 = vsub.f32 %v4724, %v4781
    %v4797 = vsub.f32 %v4725, %v4781
    %v4798 = vsub.f32 %v4726, %v4781
    %v4799 = vsub.f32 %v4727, %v4781
    %v4800 = vsub.f32 %v4728, %v4781
    %v4801 = vsub.f32 %v4729, %v4781
    %v4802 = vsub.f32 %v4730, %v4781
    %v4803 = vsub.f32 %v4731, %v4781
    %v4804 = vsub.f32 %v4732, %v4781
    %v4805 = vsub.f32 %v4733, %v4781
    %v4806 = vsub.f32 %v4734, %v4781
    %v4807 = vsub.f32 %v4735, %v4781
    %v4808 = vsub.f32 %v4736, %v4781
    %v4809 = vsub.f32 %v4737, %v4781
    %v4810 = vsub.f32 %v4738, %v4781
    %v4811 = vsub.f32 %v4739, %v4781
    %v4812 = vsub.f32 %v4740, %v4781
    %v4813 = vsub.f32 %v4741, %v4781
    %v4814 = vmul.f32 %v4782, %v4782
    %v4815 = vmul.f32 %v4783, %v4783
    %v4816 = vmul.f32 %v4784, %v4784
    %v4817 = vmul.f32 %v4785, %v4785
    %v4818 = vmul.f32 %v4786, %v4786
    %v4819 = vmul.f32 %v4787, %v4787
    %v4820 = vmul.f32 %v4788, %v4788
    %v4821 = vmul.f32 %v4789, %v4789
    %v4822 = vmul.f32 %v4790, %v4790
    %v4823 = vmul.f32 %v4791, %v4791
    %v4824 = vmul.f32 %v4792, %v4792
    %v4825 = vmul.f32 %v4793, %v4793
    %v4826 = vmul.f32 %v4794, %v4794
    %v4827 = vmul.f32 %v4795, %v4795
    %v4828 = vmul.f32 %v4796, %v4796
    %v4829 = vmul.f32 %v4797, %v4797
    %v4830 = vmul.f32 %v4798, %v4798
    %v4831 = vmul.f32 %v4799, %v4799
    %v4832 = vmul.f32 %v4800, %v4800
    %v4833 = vmul.f32 %v4801, %v4801
    %v4834 = vmul.f32 %v4802, %v4802
    %v4835 = vmul.f32 %v4803, %v4803
    %v4836 = vmul.f32 %v4804, %v4804
    %v4837 = vmul.f32 %v4805, %v4805
    %v4838 = vmul.f32 %v4806, %v4806
    %v4839 = vmul.f32 %v4807, %v4807
    %v4840 = vmul.f32 %v4808, %v4808
    %v4841 = vmul.f32 %v4809, %v4809
    %v4842 = vmul.f32 %v4810, %v4810
    %v4843 = vmul.f32 %v4811, %v4811
    %v4844 = vmul.f32 %v4812, %v4812
    %v4845 = vmul.f32 %v4813, %v4813
    %v4846 = vadd.f32 %v4814, %v4815
    %v4847 = vadd.f32 %v4846, %v4816
    %v4848 = vadd.f32 %v4847, %v4817
    %v4849 = vadd.f32 %v4848, %v4818
    %v4850 = vadd.f32 %v4849, %v4819
    %v4851 = vadd.f32 %v4850, %v4820
    %v4852 = vadd.f32 %v4851, %v4821
    %v4853 = vadd.f32 %v4852, %v4822
    %v4854 = vadd.f32 %v4853, %v4823
    %v4855 = vadd.f32 %v4854, %v4824
    %v4856 = vadd.f32 %v4855, %v4825
    %v4857 = vadd.f32 %v4856, %v4826
    %v4858 = vadd.f32 %v4857, %v4827
    %v4859 = vadd.f32 %v4858, %v4828
    %v4860 = vadd.f32 %v4859, %v4829
    %v4861 = vadd.f32 %v4860, %v4830
    %v4862 = vadd.f32 %v4861, %v4831
    %v4863 = vadd.f32 %v4862, %v4832
    %v4864 = vadd.f32 %v4863, %v4833
    %v4865 = vadd.f32 %v4864, %v4834
    %v4866 = vadd.f32 %v4865, %v4835
    %v4867 = vadd.f32 %v4866, %v4836
    %v4868 = vadd.f32 %v4867, %v4837
    %v4869 = vadd.f32 %v4868, %v4838
    %v4870 = vadd.f32 %v4869, %v4839
    %v4871 = vadd.f32 %v4870, %v4840
    %v4872 = vadd.f32 %v4871, %v4841
    %v4873 = vadd.f32 %v4872, %v4842
    %v4874 = vadd.f32 %v4873, %v4843
    %v4875 = vadd.f32 %v4874, %v4844
    %v4876 = vadd.f32 %v4875, %v4845
    %v4877 = vrot.slane %v4876, 4
    %v4878 = vadd.f32 %v4876, %v4877
    %v4879 = vrot.slane %v4878, 2
    %v4880 = vadd.f32 %v4878, %v4879
    %v4881 = vrot.slane %v4880, 1
    %v4882 = vadd.f32 %v4880, %v4881
    %v4883 = vmul.f32 %v4882, 0.00390625
    %v4884 = vadd.f32 %v4883, 1e-05
    %v4885 = vrsqrt.pop %v4884
    %v4886 = vmul.f32 %v4885, %v4884
    %v4887 = vmul.f32 %v4886, %v4885
    %v4888 = vmul.f32 0.5, %v4887
    %v4889 = vsub.f32 1.5, %v4888
    %v4890 = vmul.f32 %v4885, %v4889
    %vm4891 = vweird.f32 %v4884
    %vm4892 = vweird.f32 %v4885
    %vm4893 = vmor %vm4891, %vm4892
    %v4894 = vsel %vm4893, %v4885, %v4890
    %v4895 = vmul.f32 %v4782, %v4894
    %v4896 = vmul.f32 %v4783, %v4894
    %v4897 = vmul.f32 %v4784, %v4894
    %v4898 = vmul.f32 %v4785, %v4894
    %v4899 = vmul.f32 %v4786, %v4894
    %v4900 = vmul.f32 %v4787, %v4894
    %v4901 = vmul.f32 %v4788, %v4894
    %v4902 = vmul.f32 %v4789, %v4894
    %v4903 = vmul.f32 %v4790, %v4894
    %v4904 = vmul.f32 %v4791, %v4894
    %v4905 = vmul.f32 %v4792, %v4894
    %v4906 = vmul.f32 %v4793, %v4894
    %v4907 = vmul.f32 %v4794, %v4894
    %v4908 = vmul.f32 %v4795, %v4894
    %v4909 = vmul.f32 %v4796, %v4894
    %v4910 = vmul.f32 %v4797, %v4894
    %v4911 = vmul.f32 %v4798, %v4894
    %v4912 = vmul.f32 %v4799, %v4894
    %v4913 = vmul.f32 %v4800, %v4894
    %v4914 = vmul.f32 %v4801, %v4894
    %v4915 = vmul.f32 %v4802, %v4894
    %v4916 = vmul.f32 %v4803, %v4894
    %v4917 = vmul.f32 %v4804, %v4894
    %v4918 = vmul.f32 %v4805, %v4894
    %v4919 = vmul.f32 %v4806, %v4894
    %v4920 = vmul.f32 %v4807, %v4894
    %v4921 = vmul.f32 %v4808, %v4894
    %v4922 = vmul.f32 %v4809, %v4894
    %v4923 = vmul.f32 %v4810, %v4894
    %v4924 = vmul.f32 %v4811, %v4894
    %v4925 = vmul.f32 %v4812, %v4894
    %v4926 = vmul.f32 %v4813, %v4894
    %v4928 = vperm.slane %v4742, 0
    %v4930 = vmul.f32 %v4895, %v4928
    %v4931 = vmul.f32 %v4896, %v4928
    %v4932 = vmul.f32 %v4897, %v4928
    %v4933 = vmul.f32 %v4898, %v4928
    %v4934 = vmul.f32 %v4899, %v4928
    %v4935 = vmul.f32 %v4900, %v4928
    %v4936 = vmul.f32 %v4901, %v4928
    %v4937 = vmul.f32 %v4902, %v4928
    %v4938 = vmul.f32 %v4903, %v4928
    %v4939 = vmul.f32 %v4904, %v4928
    %v4940 = vmul.f32 %v4905, %v4928
    %v4941 = vmul.f32 %v4906, %v4928
    %v4942 = vmul.f32 %v4907, %v4928
    %v4943 = vmul.f32 %v4908, %v4928
    %v4944 = vmul.f32 %v4909, %v4928
    %v4945 = vmul.f32 %v4910, %v4928
    %v4946 = vmul.f32 %v4911, %v4928
    %v4947 = vmul.f32 %v4912, %v4928
    %v4948 = vmul.f32 %v4913, %v4928
    %v4949 = vmul.f32 %v4914, %v4928
    %v4950 = vmul.f32 %v4915, %v4928
    %v4951 = vmul.f32 %v4916, %v4928
    %v4952 = vmul.f32 %v4917, %v4928
    %v4953 = vmul.f32 %v4918, %v4928
    %v4954 = vmul.f32 %v4919, %v4928
    %v4955 = vmul.f32 %v4920, %v4928
    %v4956 = vmul.f32 %v4921, %v4928
    %v4957 = vmul.f32 %v4922, %v4928
    %v4958 = vmul.f32 %v4923, %v4928
    %v4959 = vmul.f32 %v4924, %v4928
    %v4960 = vmul.f32 %v4925, %v4928
    %v4961 = vmul.f32 %v4926, %v4928
    %v4963 = vperm.slane %v4743, 0
    %v4965 = vadd.f32 %v4930, %v4963
    %v4966 = vadd.f32 %v4931, %v4963
    %v4967 = vadd.f32 %v4932, %v4963
    %v4968 = vadd.f32 %v4933, %v4963
    %v4969 = vadd.f32 %v4934, %v4963
    %v4970 = vadd.f32 %v4935, %v4963
    %v4971 = vadd.f32 %v4936, %v4963
    %v4972 = vadd.f32 %v4937, %v4963
    %v4973 = vadd.f32 %v4938, %v4963
    %v4974 = vadd.f32 %v4939, %v4963
    %v4975 = vadd.f32 %v4940, %v4963
    %v4976 = vadd.f32 %v4941, %v4963
    %v4977 = vadd.f32 %v4942, %v4963
    %v4978 = vadd.f32 %v4943, %v4963
    %v4979 = vadd.f32 %v4944, %v4963
    %v4980 = vadd.f32 %v4945, %v4963
    %v4981 = vadd.f32 %v4946, %v4963
    %v4982 = vadd.f32 %v4947, %v4963
    %v4983 = vadd.f32 %v4948, %v4963
    %v4984 = vadd.f32 %v4949, %v4963
    %v4985 = vadd.f32 %v4950, %v4963
    %v4986 = vadd.f32 %v4951, %v4963
    %v4987 = vadd.f32 %v4952, %v4963
    %v4988 = vadd.f32 %v4953, %v4963
    %v4989 = vadd.f32 %v4954, %v4963
    %v4990 = vadd.f32 %v4955, %v4963
    %v4991 = vadd.f32 %v4956, %v4963
    %v4992 = vadd.f32 %v4957, %v4963
    %v4993 = vadd.f32 %v4958, %v4963
    %v4994 = vadd.f32 %v4959, %v4963
    %v4995 = vadd.f32 %v4960, %v4963
    %v4996 = vadd.f32 %v4961, %v4963
    %v4997 = vld [vmem:[%s9] sm:$0xff]
    %v4998 = vld [vmem:[%s9 + $0x8] sm:$0xff]
    %v4999 = vld [vmem:[%s9 + $0x10] sm:$0xff]
    %v5000 = vld [vmem:[%s9 + $0x18] sm:$0xff]
    %v5001 = vld [vmem:[%s9 + $0x20] sm:$0xff]
    %v5002 = vld [vmem:[%s9 + $0x28] sm:$0xff]
    %v5003 = vld [vmem:[%s9 + $0x30] sm:$0xff]
    %v5004 = vld [vmem:[%s9 + $0x38] sm:$0xff]
    %v5005 = vld [vmem:[%s10] sm:$0x1]
    %v5007 = vperm.slane %v5005, 0
    %v5010 = vsel %vm108, %v76, 0
    %v5013 = vsel %vm108, %v77, 0
    %v5016 = vsel %vm108, %v78, 0
    %v5019 = vsel %vm108, %v79, 0
    %v5022 = vsel %vm108, %v80, 0
    %v5025 = vsel %vm108, %v81, 0
    %v5028 = vsel %vm108, %v82, 0
    %v5031 = vsel %vm108, %v83, 0
    %v5034 = vsel %vm108, %v84, 0
    %v5037 = vsel %vm108, %v85, 0
    %v5040 = vsel %vm108, %v86, 0
    %v5043 = vsel %vm108, %v87, 0
    %v5046 = vsel %vm108, %v88, 0
    %v5049 = vsel %vm108, %v89, 0
    %v5052 = vsel %vm108, %v90, 0
    %v5055 = vsel %vm108, %v91, 0
    %v5058 = vsel %vm108, %v92, 0
    %v5061 = vsel %vm108, %v93, 0
    %v5064 = vsel %vm108, %v94, 0
    %v5067 = vsel %vm108, %v95, 0
    %v5070 = vsel %vm108, %v96, 0
    %v5073 = vsel %vm108, %v97, 0
    %v5076 = vsel %vm108, %v98, 0
    %v5079 = vsel %vm108, %v99, 0
    %v5082 = vsel %vm108, %v100, 0
    %v5085 = vsel %vm108, %v101, 0
    %v5088 = vsel %vm108, %v102, 0
    %v5091 = vsel %vm108, %v103, 0
    %v5094 = vsel %vm108, %v104, 0
    %v5097 = vsel %vm108, %v105, 0
    %v5100 = vsel %vm108, %v106, 0
    %v5103 = vsel %vm108, %v107, 0
    %5105 = vmatpush.msra.mxu0 0.0
    %5106 = vmatpush.msra.mxu0 0.0
    %5107 = vmatpush.msra.mxu0 0.0
    %5108 = vmatpush.msra.mxu0 0.0
    %5109 = vmatpush.msra.mxu0 0.0
    %5110 = vmatpush.msra.mxu0 0.0
    %5111 = vmatpush.msra.mxu0 0.0
    %5112 = vmatpush.msra.mxu0 0.0
    %5113 = vmatpush.msra.mxu0 %v5004
    %5114 = vmatpush.msra.mxu0 %v5003
    %5115 = vmatpush.msra.mxu0 %v5002
    %5116 = vmatpush.msra.mxu0 %v5001
    %5117 = vmatpush.msra.mxu0 %v5000
    %5118 = vmatpush.msra.mxu0 %v4999
    %5119 = vmatpush.msra.mxu0 %v4998
    %5120 = vmatpush.msra.mxu0 %v4997
    %5121 = vmatmul.f32.gmra.mxu0 %v5010
    %v5122 = vpop.f32.mrf.mxu0
    %v5123 = vadd.f32 %v5007, %v5122
    %5124 = vmatmul.f32.gmra.mxu0 %v5013
    %v5125 = vpop.f32.mrf.mxu0
    %v5126 = vadd.f32 %v5007, %v5125
    %5127 = vmatmul.f32.gmra.mxu0 %v5016
    %v5128 = vpop.f32.mrf.mxu0
    %v5129 = vadd.f32 %v5007, %v5128
    %5130 = vmatmul.f32.gmra.mxu0 %v5019
    %v5131 = vpop.f32.mrf.mxu0
    %v5132 = vadd.f32 %v5007, %v5131
    %5133 = vmatmul.f32.gmra.mxu0 %v5022
    %v5134 = vpop.f32.mrf.mxu0
    %v5135 = vadd.f32 %v5007, %v5134
    %5136 = vmatmul.f32.gmra.mxu0 %v5025
    %v5137 = vpop.f32.mrf.mxu0
    %v5138 = vadd.f32 %v5007, %v5137
    %5139 = vmatmul.f32.gmra.mxu0 %v5028
    %v5140 = vpop.f32.mrf.mxu0
    %v5141 = vadd.f32 %v5007, %v5140
    %5142 = vmatmul.f32.gmra.mxu0 %v5031
    %v5143 = vpop.f32.mrf.mxu0
    %v5144 = vadd.f32 %v5007, %v5143
    %5145 = vmatmul.f32.gmra.mxu0 %v5034
    %v5146 = vpop.f32.mrf.mxu0
    %v5147 = vadd.f32 %v5007, %v5146
    %5148 = vmatmul.f32.gmra.mxu0 %v5037
    %v5149 = vpop.f32.mrf.mxu0
    %v5150 = vadd.f32 %v5007, %v5149
    %5151 = vmatmul.f32.gmra.mxu0 %v5040
    %v5152 = vpop.f32.mrf.mxu0
    %v5153 = vadd.f32 %v5007, %v5152
    %5154 = vmatmul.f32.gmra.mxu0 %v5043
    %v5155 = vpop.f32.mrf.mxu0
    %v5156 = vadd.f32 %v5007, %v5155
    %5157 = vmatmul.f32.gmra.mxu0 %v5046
    %v5158 = vpop.f32.mrf.mxu0
    %v5159 = vadd.f32 %v5007, %v5158
    %5160 = vmatmul.f32.gmra.mxu0 %v5049
    %v5161 = vpop.f32.mrf.mxu0
    %v5162 = vadd.f32 %v5007, %v5161
    %5163 = vmatmul.f32.gmra.mxu0 %v5052
    %v5164 = vpop.f32.mrf.mxu0
    %v5165 = vadd.f32 %v5007, %v5164
    %5166 = vmatmul.f32.gmra.mxu0 %v5055
    %v5167 = vpop.f32.mrf.mxu0
    %v5168 = vadd.f32 %v5007, %v5167
    %5169 = vmatmul.f32.gmra.mxu0 %v5058
    %v5170 = vpop.f32.mrf.mxu0
    %v5171 = vadd.f32 %v5007, %v5170
    %5172 = vmatmul.f32.gmra.mxu0 %v5061
    %v5173 = vpop.f32.mrf.mxu0
    %v5174 = vadd.f32 %v5007, %v5173
    %5175 = vmatmul.f32.gmra.mxu0 %v5064
    %v5176 = vpop.f32.mrf.mxu0
    %v5177 = vadd.f32 %v5007, %v5176
    %5178 = vmatmul.f32.gmra.mxu0 %v5067
    %v5179 = vpop.f32.mrf.mxu0
    %v5180 = vadd.f32 %v5007, %v5179
    %5181 = vmatmul.f32.gmra.mxu0 %v5070
    %v5182 = vpop.f32.mrf.mxu0
    %v5183 = vadd.f32 %v5007, %v5182
    %5184 = vmatmul.f32.gmra.mxu0 %v5073
    %v5185 = vpop.f32.mrf.mxu0
    %v5186 = vadd.f32 %v5007, %v5185
    %5187 = vmatmul.f32.gmra.mxu0 %v5076
    %v5188 = vpop.f32.mrf.mxu0
    %v5189 = vadd.f32 %v5007, %v5188
    %5190 = vmatmul.f32.gmra.mxu0 %v5079
    %v5191 = vpop.f32.mrf.mxu0
    %v5192 = vadd.f32 %v5007, %v5191
    %5193 = vmatmul.f32.gmra.mxu0 %v5082
    %v5194 = vpop.f32.mrf.mxu0
    %v5195 = vadd.f32 %v5007, %v5194
    %5196 = vmatmul.f32.gmra.mxu0 %v5085
    %v5197 = vpop.f32.mrf.mxu0
    %v5198 = vadd.f32 %v5007, %v5197
    %5199 = vmatmul.f32.gmra.mxu0 %v5088
    %v5200 = vpop.f32.mrf.mxu0
    %v5201 = vadd.f32 %v5007, %v5200
    %5202 = vmatmul.f32.gmra.mxu0 %v5091
    %v5203 = vpop.f32.mrf.mxu0
    %v5204 = vadd.f32 %v5007, %v5203
    %5205 = vmatmul.f32.gmra.mxu0 %v5094
    %v5206 = vpop.f32.mrf.mxu0
    %v5207 = vadd.f32 %v5007, %v5206
    %5208 = vmatmul.f32.gmra.mxu0 %v5097
    %v5209 = vpop.f32.mrf.mxu0
    %v5210 = vadd.f32 %v5007, %v5209
    %5211 = vmatmul.f32.gmra.mxu0 %v5100
    %v5212 = vpop.f32.mrf.mxu0
    %v5213 = vadd.f32 %v5007, %v5212
    %5214 = vmatmul.f32.gmra.mxu0 %v5103
    %v5215 = vpop.f32.mrf.mxu0
    %v5216 = vadd.f32 %v5007, %v5215
    %5217 = vdwg.mxu0
    %v5218 = vld [vmem:[%s11] sm:$0x1]
    %v5219 = vld [vmem:[%s12] sm:$0x1]
    %v5220 = vadd.f32 %v5123, %v5126
    %v5221 = vadd.f32 %v5220, %v5129
    %v5222 = vadd.f32 %v5221, %v5132
    %v5223 = vadd.f32 %v5222, %v5135
    %v5224 = vadd.f32 %v5223, %v5138
    %v5225 = vadd.f32 %v5224, %v5141
    %v5226 = vadd.f32 %v5225, %v5144
    %v5227 = vadd.f32 %v5226, %v5147
    %v5228 = vadd.f32 %v5227, %v5150
    %v5229 = vadd.f32 %v5228, %v5153
    %v5230 = vadd.f32 %v5229, %v5156
    %v5231 = vadd.f32 %v5230, %v5159
    %v5232 = vadd.f32 %v5231, %v5162
    %v5233 = vadd.f32 %v5232, %v5165
    %v5234 = vadd.f32 %v5233, %v5168
    %v5235 = vadd.f32 %v5234, %v5171
    %v5236 = vadd.f32 %v5235, %v5174
    %v5237 = vadd.f32 %v5236, %v5177
    %v5238 = vadd.f32 %v5237, %v5180
    %v5239 = vadd.f32 %v5238, %v5183
    %v5240 = vadd.f32 %v5239, %v5186
    %v5241 = vadd.f32 %v5240, %v5189
    %v5242 = vadd.f32 %v5241, %v5192
    %v5243 = vadd.f32 %v5242, %v5195
    %v5244 = vadd.f32 %v5243, %v5198
    %v5245 = vadd.f32 %v5244, %v5201
    %v5246 = vadd.f32 %v5245, %v5204
    %v5247 = vadd.f32 %v5246, %v5207
    %v5248 = vadd.f32 %v5247, %v5210
    %v5249 = vadd.f32 %v5248, %v5213
    %v5250 = vadd.f32 %v5249, %v5216
    %v5251 = vrot.slane %v5250, 4
    %v5252 = vadd.f32 %v5250, %v5251
    %v5253 = vrot.slane %v5252, 2
    %v5254 = vadd.f32 %v5252, %v5253
    %v5255 = vrot.slane %v5254, 1
    %v5256 = vadd.f32 %v5254, %v5255
    %v5257 = vmul.f32 %v5256, 0.00390625
    %v5258 = vsub.f32 %v5123, %v5257
    %v5259 = vsub.f32 %v5126, %v5257
    %v5260 = vsub.f32 %v5129, %v5257
    %v5261 = vsub.f32 %v5132, %v5257
    %v5262 = vsub.f32 %v5135, %v5257
    %v5263 = vsub.f32 %v5138, %v5257
    %v5264 = vsub.f32 %v5141, %v5257
    %v5265 = vsub.f32 %v5144, %v5257
    %v5266 = vsub.f32 %v5147, %v5257
    %v5267 = vsub.f32 %v5150, %v5257
    %v5268 = vsub.f32 %v5153, %v5257
    %v5269 = vsub.f32 %v5156, %v5257
    %v5270 = vsub.f32 %v5159, %v5257
    %v5271 = vsub.f32 %v5162, %v5257
    %v5272 = vsub.f32 %v5165, %v5257
    %v5273 = vsub.f32 %v5168, %v5257
    %v5274 = vsub.f32 %v5171, %v5257
    %v5275 = vsub.f32 %v5174, %v5257
    %v5276 = vsub.f32 %v5177, %v5257
    %v5277 = vsub.f32 %v5180, %v5257
    %v5278 = vsub.f32 %v5183, %v5257
    %v5279 = vsub.f32 %v5186, %v5257
    %v5280 = vsub.f32 %v5189, %v5257
    %v5281 = vsub.f32 %v5192, %v5257
    %v5282 = vsub.f32 %v5195, %v5257
    %v5283 = vsub.f32 %v5198, %v5257
    %v5284 = vsub.f32 %v5201, %v5257
    %v5285 = vsub.f32 %v5204, %v5257
    %v5286 = vsub.f32 %v5207, %v5257
    %v5287 = vsub.f32 %v5210, %v5257
    %v5288 = vsub.f32 %v5213, %v5257
    %v5289 = vsub.f32 %v5216, %v5257
    %v5290 = vmul.f32 %v5258, %v5258
    %v5291 = vmul.f32 %v5259, %v5259
    %v5292 = vmul.f32 %v5260, %v5260
    %v5293 = vmul.f32 %v5261, %v5261
    %v5294 = vmul.f32 %v5262, %v5262
    %v5295 = vmul.f32 %v5263, %v5263
    %v5296 = vmul.f32 %v5264, %v5264
    %v5297 = vmul.f32 %v5265, %v5265
    %v5298 = vmul.f32 %v5266, %v5266
    %v5299 = vmul.f32 %v5267, %v5267
    %v5300 = vmul.f32 %v5268, %v5268
    %v5301 = vmul.f32 %v5269, %v5269
    %v5302 = vmul.f32 %v5270, %v5270
    %v5303 = vmul.f32 %v5271, %v5271
    %v5304 = vmul.f32 %v5272, %v5272
    %v5305 = vmul.f32 %v5273, %v5273
    %v5306 = vmul.f32 %v5274, %v5274
    %v5307 = vmul.f32 %v5275, %v5275
    %v5308 = vmul.f32 %v5276, %v5276
    %v5309 = vmul.f32 %v5277, %v5277
    %v5310 = vmul.f32 %v5278, %v5278
    %v5311 = vmul.f32 %v5279, %v5279
    %v5312 = vmul.f32 %v5280, %v5280
    %v5313 = vmul.f32 %v5281, %v5281
    %v5314 = vmul.f32 %v5282, %v5282
    %v5315 = vmul.f32 %v5283, %v5283
    %v5316 = vmul.f32 %v5284, %v5284
    %v5317 = vmul.f32 %v5285, %v5285
    %v5318 = vmul.f32 %v5286, %v5286
    %v5319 = vmul.f32 %v5287, %v5287
    %v5320 = vmul.f32 %v5288, %v5288
    %v5321 = vmul.f32 %v5289, %v5289
    %v5322 = vadd.f32 %v5290, %v5291
    %v5323 = vadd.f32 %v5322, %v5292
    %v5324 = vadd.f32 %v5323, %v5293
    %v5325 = vadd.f32 %v5324, %v5294
    %v5326 = vadd.f32 %v5325, %v5295
    %v5327 = vadd.f32 %v5326, %v5296
    %v5328 = vadd.f32 %v5327, %v5297
    %v5329 = vadd.f32 %v5328, %v5298
    %v5330 = vadd.f32 %v5329, %v5299
    %v5331 = vadd.f32 %v5330, %v5300
    %v5332 = vadd.f32 %v5331, %v5301
    %v5333 = vadd.f32 %v5332, %v5302
    %v5334 = vadd.f32 %v5333, %v5303
    %v5335 = vadd.f32 %v5334, %v5304
    %v5336 = vadd.f32 %v5335, %v5305
    %v5337 = vadd.f32 %v5336, %v5306
    %v5338 = vadd.f32 %v5337, %v5307
    %v5339 = vadd.f32 %v5338, %v5308
    %v5340 = vadd.f32 %v5339, %v5309
    %v5341 = vadd.f32 %v5340, %v5310
    %v5342 = vadd.f32 %v5341, %v5311
    %v5343 = vadd.f32 %v5342, %v5312
    %v5344 = vadd.f32 %v5343, %v5313
    %v5345 = vadd.f32 %v5344, %v5314
    %v5346 = vadd.f32 %v5345, %v5315
    %v5347 = vadd.f32 %v5346, %v5316
    %v5348 = vadd.f32 %v5347, %v5317
    %v5349 = vadd.f32 %v5348, %v5318
    %v5350 = vadd.f32 %v5349, %v5319
    %v5351 = vadd.f32 %v5350, %v5320
    %v5352 = vadd.f32 %v5351, %v5321
    %v5353 = vrot.slane %v5352, 4
    %v5354 = vadd.f32 %v5352, %v5353
    %v5355 = vrot.slane %v5354, 2
    %v5356 = vadd.f32 %v5354, %v5355
    %v5357 = vrot.slane %v5356, 1
    %v5358 = vadd.f32 %v5356, %v5357
    %v5359 = vmul.f32 %v5358, 0.00390625
    %v5360 = vadd.f32 %v5359, 1e-05
    %v5361 = vrsqrt.pop %v5360
    %v5362 = vmul.f32 %v5361, %v5360
    %v5363 = vmul.f32 %v5362, %v5361
    %v5364 = vmul.f32 0.5, %v5363
    %v5365 = vsub.f32 1.5, %v5364
    %v5366 = vmul.f32 %v5361, %v5365
    %vm5367 = vweird.f32 %v5360
    %vm5368 = vweird.f32 %v5361
    %vm5369 = vmor %vm5367, %vm5368
    %v5370 = vsel %vm5369, %v5361, %v5366
    %v5371 = vmul.f32 %v5258, %v5370
    %v5372 = vmul.f32 %v5259, %v5370
    %v5373 = vmul.f32 %v5260, %v5370
    %v5374 = vmul.f32 %v5261, %v5370
    %v5375 = vmul.f32 %v5262, %v5370
    %v5376 = vmul.f32 %v5263, %v5370
    %v5377 = vmul.f32 %v5264, %v5370
    %v5378 = vmul.f32 %v5265, %v5370
    %v5379 = vmul.f32 %v5266, %v5370
    %v5380 = vmul.f32 %v5267, %v5370
    %v5381 = vmul.f32 %v5268, %v5370
    %v5382 = vmul.f32 %v5269, %v5370
    %v5383 = vmul.f32 %v5270, %v5370
    %v5384 = vmul.f32 %v5271, %v5370
    %v5385 = vmul.f32 %v5272, %v5370
    %v5386 = vmul.f32 %v5273, %v5370
    %v5387 = vmul.f32 %v5274, %v5370
    %v5388 = vmul.f32 %v5275, %v5370
    %v5389 = vmul.f32 %v5276, %v5370
    %v5390 = vmul.f32 %v5277, %v5370
    %v5391 = vmul.f32 %v5278, %v5370
    %v5392 = vmul.f32 %v5279, %v5370
    %v5393 = vmul.f32 %v5280, %v5370
    %v5394 = vmul.f32 %v5281, %v5370
    %v5395 = vmul.f32 %v5282, %v5370
    %v5396 = vmul.f32 %v5283, %v5370
    %v5397 = vmul.f32 %v5284, %v5370
    %v5398 = vmul.f32 %v5285, %v5370
    %v5399 = vmul.f32 %v5286, %v5370
    %v5400 = vmul.f32 %v5287, %v5370
    %v5401 = vmul.f32 %v5288, %v5370
    %v5402 = vmul.f32 %v5289, %v5370
    %v5404 = vperm.slane %v5218, 0
    %v5406 = vmul.f32 %v5371, %v5404
    %v5407 = vmul.f32 %v5372, %v5404
    %v5408 = vmul.f32 %v5373, %v5404
    %v5409 = vmul.f32 %v5374, %v5404
    %v5410 = vmul.f32 %v5375, %v5404
    %v5411 = vmul.f32 %v5376, %v5404
    %v5412 = vmul.f32 %v5377, %v5404
    %v5413 = vmul.f32 %v5378, %v5404
    %v5414 = vmul.f32 %v5379, %v5404
    %v5415 = vmul.f32 %v5380, %v5404
    %v5416 = vmul.f32 %v5381, %v5404
    %v5417 = vmul.f32 %v5382, %v5404
    %v5418 = vmul.f32 %v5383, %v5404
    %v5419 = vmul.f32 %v5384, %v5404
    %v5420 = vmul.f32 %v5385, %v5404
    %v5421 = vmul.f32 %v5386, %v5404
    %v5422 = vmul.f32 %v5387, %v5404
    %v5423 = vmul.f32 %v5388, %v5404
    %v5424 = vmul.f32 %v5389, %v5404
    %v5425 = vmul.f32 %v5390, %v5404
    %v5426 = vmul.f32 %v5391, %v5404
    %v5427 = vmul.f32 %v5392, %v5404
    %v5428 = vmul.f32 %v5393, %v5404
    %v5429 = vmul.f32 %v5394, %v5404
    %v5430 = vmul.f32 %v5395, %v5404
    %v5431 = vmul.f32 %v5396, %v5404
    %v5432 = vmul.f32 %v5397, %v5404
    %v5433 = vmul.f32 %v5398, %v5404
    %v5434 = vmul.f32 %v5399, %v5404
    %v5435 = vmul.f32 %v5400, %v5404
    %v5436 = vmul.f32 %v5401, %v5404
    %v5437 = vmul.f32 %v5402, %v5404
    %v5439 = vperm.slane %v5219, 0
    %v5441 = vadd.f32 %v5406, %v5439
    %v5442 = vadd.f32 %v5407, %v5439
    %v5443 = vadd.f32 %v5408, %v5439
    %v5444 = vadd.f32 %v5409, %v5439
    %v5445 = vadd.f32 %v5410, %v5439
    %v5446 = vadd.f32 %v5411, %v5439
    %v5447 = vadd.f32 %v5412, %v5439
    %v5448 = vadd.f32 %v5413, %v5439
    %v5449 = vadd.f32 %v5414, %v5439
    %v5450 = vadd.f32 %v5415, %v5439
    %v5451 = vadd.f32 %v5416, %v5439
    %v5452 = vadd.f32 %v5417, %v5439
    %v5453 = vadd.f32 %v5418, %v5439
    %v5454 = vadd.f32 %v5419, %v5439
    %v5455 = vadd.f32 %v5420, %v5439
    %v5456 = vadd.f32 %v5421, %v5439
    %v5457 = vadd.f32 %v5422, %v5439
    %v5458 = vadd.f32 %v5423, %v5439
    %v5459 = vadd.f32 %v5424, %v5439
    %v5460 = vadd.f32 %v5425, %v5439
    %v5461 = vadd.f32 %v5426, %v5439
    %v5462 = vadd.f32 %v5427, %v5439
    %v5463 = vadd.f32 %v5428, %v5439
    %v5464 = vadd.f32 %v5429, %v5439
    %v5465 = vadd.f32 %v5430, %v5439
    %v5466 = vadd.f32 %v5431, %v5439
    %v5467 = vadd.f32 %v5432, %v5439
    %v5468 = vadd.f32 %v5433, %v5439
    %v5469 = vadd.f32 %v5434, %v5439
    %v5470 = vadd.f32 %v5435, %v5439
    %v5471 = vadd.f32 %v5436, %v5439
    %v5472 = vadd.f32 %v5437, %v5439
    %v5473 = vadd.f32 %v4965, %v5441
    %v5474 = vadd.f32 %v4966, %v5442
    %v5475 = vadd.f32 %v4967, %v5443
    %v5476 = vadd.f32 %v4968, %v5444
    %v5477 = vadd.f32 %v4969, %v5445
    %v5478 = vadd.f32 %v4970, %v5446
    %v5479 = vadd.f32 %v4971, %v5447
    %v5480 = vadd.f32 %v4972, %v5448
    %v5481 = vadd.f32 %v4973, %v5449
    %v5482 = vadd.f32 %v4974, %v5450
    %v5483 = vadd.f32 %v4975, %v5451
    %v5484 = vadd.f32 %v4976, %v5452
    %v5485 = vadd.f32 %v4977, %v5453
    %v5486 = vadd.f32 %v4978, %v5454
    %v5487 = vadd.f32 %v4979, %v5455
    %v5488 = vadd.f32 %v4980, %v5456
    %v5489 = vadd.f32 %v4981, %v5457
    %v5490 = vadd.f32 %v4982, %v5458
    %v5491 = vadd.f32 %v4983, %v5459
    %v5492 = vadd.f32 %v4984, %v5460
    %v5493 = vadd.f32 %v4985, %v5461
    %v5494 = vadd.f32 %v4986, %v5462
    %v5495 = vadd.f32 %v4987, %v5463
    %v5496 = vadd.f32 %v4988, %v5464
    %v5497 = vadd.f32 %v4989, %v5465
    %v5498 = vadd.f32 %v4990, %v5466
    %v5499 = vadd.f32 %v4991, %v5467
    %v5500 = vadd.f32 %v4992, %v5468
    %v5501 = vadd.f32 %v4993, %v5469
    %v5502 = vadd.f32 %v4994, %v5470
    %v5503 = vadd.f32 %v4995, %v5471
    %v5504 = vadd.f32 %v4996, %v5472
    %v5505 = vmax.f32 %v5473, 0.0
    %v5506 = vmax.f32 %v5474, 0.0
    %v5507 = vmax.f32 %v5475, 0.0
    %v5508 = vmax.f32 %v5476, 0.0
    %v5509 = vmax.f32 %v5477, 0.0
    %v5510 = vmax.f32 %v5478, 0.0
    %v5511 = vmax.f32 %v5479, 0.0
    %v5512 = vmax.f32 %v5480, 0.0
    %v5513 = vmax.f32 %v5481, 0.0
    %v5514 = vmax.f32 %v5482, 0.0
    %v5515 = vmax.f32 %v5483, 0.0
    %v5516 = vmax.f32 %v5484, 0.0
    %v5517 = vmax.f32 %v5485, 0.0
    %v5518 = vmax.f32 %v5486, 0.0
    %v5519 = vmax.f32 %v5487, 0.0
    %v5520 = vmax.f32 %v5488, 0.0
    %v5521 = vmax.f32 %v5489, 0.0
    %v5522 = vmax.f32 %v5490, 0.0
    %v5523 = vmax.f32 %v5491, 0.0
    %v5524 = vmax.f32 %v5492, 0.0
    %v5525 = vmax.f32 %v5493, 0.0
    %v5526 = vmax.f32 %v5494, 0.0
    %v5527 = vmax.f32 %v5495, 0.0
    %v5528 = vmax.f32 %v5496, 0.0
    %v5529 = vmax.f32 %v5497, 0.0
    %v5530 = vmax.f32 %v5498, 0.0
    %v5531 = vmax.f32 %v5499, 0.0
    %v5532 = vmax.f32 %v5500, 0.0
    %v5533 = vmax.f32 %v5501, 0.0
    %v5534 = vmax.f32 %v5502, 0.0
    %v5535 = vmax.f32 %v5503, 0.0
    %v5536 = vmax.f32 %v5504, 0.0
    %5537 = vst [vmem:[%s13] sm:$0xff] %v5505
    %5538 = vst [vmem:[%s13 + $0x8] sm:$0xff] %v5506
    %5539 = vst [vmem:[%s13 + $0x10] sm:$0xff] %v5507
    %5540 = vst [vmem:[%s13 + $0x18] sm:$0xff] %v5508
    %5541 = vst [vmem:[%s13 + $0x20] sm:$0xff] %v5509
    %5542 = vst [vmem:[%s13 + $0x28] sm:$0xff] %v5510
    %5543 = vst [vmem:[%s13 + $0x30] sm:$0xff] %v5511
    %5544 = vst [vmem:[%s13 + $0x38] sm:$0xff] %v5512
    %5545 = vst [vmem:[%s13 + $0x40] sm:$0xff] %v5513
    %5546 = vst [vmem:[%s13 + $0x48] sm:$0xff] %v5514
    %5547 = vst [vmem:[%s13 + $0x50] sm:$0xff] %v5515
    %5548 = vst [vmem:[%s13 + $0x58] sm:$0xff] %v5516
    %5549 = vst [vmem:[%s13 + $0x60] sm:$0xff] %v5517
    %5550 = vst [vmem:[%s13 + $0x68] sm:$0xff] %v5518
    %5551 = vst [vmem:[%s13 + $0x70] sm:$0xff] %v5519
    %5552 = vst [vmem:[%s13 + $0x78] sm:$0xff] %v5520
    %5553 = vst [vmem:[%s13 + $0x80] sm:$0xff] %v5521
    %5554 = vst [vmem:[%s13 + $0x88] sm:$0xff] %v5522
    %5555 = vst [vmem:[%s13 + $0x90] sm:$0xff] %v5523
    %5556 = vst [vmem:[%s13 + $0x98] sm:$0xff] %v5524
    %5557 = vst [vmem:[%s13 + $0xa0] sm:$0xff] %v5525
    %5558 = vst [vmem:[%s13 + $0xa8] sm:$0xff] %v5526
    %5559 = vst [vmem:[%s13 + $0xb0] sm:$0xff] %v5527
    %5560 = vst [vmem:[%s13 + $0xb8] sm:$0xff] %v5528
    %5561 = vst [vmem:[%s13 + $0xc0] sm:$0xff] %v5529
    %5562 = vst [vmem:[%s13 + $0xc8] sm:$0xff] %v5530
    %5563 = vst [vmem:[%s13 + $0xd0] sm:$0xff] %v5531
    %5564 = vst [vmem:[%s13 + $0xd8] sm:$0xff] %v5532
    %5565 = vst [vmem:[%s13 + $0xe0] sm:$0xff] %v5533
    %5566 = vst [vmem:[%s13 + $0xe8] sm:$0xff] %v5534
    %5567 = vst [vmem:[%s13 + $0xf0] sm:$0xff] %v5535
    %5568 = vst [vmem:[%s13 + $0xf8] sm:$0xff] %v5536
    // Predicated region
    $region62: #{resblock_forward.1} parent=1 // pred_check
      _
    $region63: #{resblock_forward.1} parent=1 // pred_check_branch
      %5570 = sbr.rel (0) target = $region65
    $region64: #{resblock_forward.1} parent=1 // pred_region
      _
    $region65: #{resblock_forward.1} parent=1 // pred_fallthru
      _
    // Predicated region
    $region66: #{resblock_forward.1} parent=1 // pred_check
      _
    $region67: #{resblock_forward.1} parent=1 // pred_check_branch
      %5572 = sbr.rel (0) target = $region69
    $region68: #{resblock_forward.1} parent=1 // pred_region
      _
    $region69: #{resblock_forward.1} parent=1 // pred_fallthru
      _
    %5573 = vsyncpa [#allocation5], 1
    %5574 = vsyncpa [#allocation7], 1

</llo_original>
